<compile_context>
chip_gen: v7x
topology: tpu7x:2x2x1
jax: 0.10.0
libtpu: 0.0.40
codegen_flags: <defaults>
</compile_context>

<pallas_src>
import jax
import jax.numpy as jnp
from jax.experimental import pallas as pl
from jax.experimental.pallas import tpu as pltpu

BN_EPS = 1e-5
_CH = 256   # conv3 output-channel chunk (1024 = 4 * 256)

_CPARAMS = pltpu.CompilerParams(
    dimension_semantics=("parallel", "arbitrary"),   # batch parallel, points reduce
    vmem_limit_bytes=32 * 1024 * 1024,
)


# --------------------------------- kernels ---------------------------------- #

def _conv1_relu(x_t, w1t_ref, b1_ref):
    """relu(conv1 + BN1) in channel-major form; conv1 as 3 VPU FMAs (K=3 MXU
    matmul avoided).  x_t: (3, tn); w1t_ref: (64, 3) with BN1 scale folded in;
    b1_ref: (64, 1) BN1 shift.  Returns (64, tn) f32."""
    y1 = (w1t_ref[:, 0:1] * x_t[0:1, :]
          + w1t_ref[:, 1:2] * x_t[1:2, :]
          + w1t_ref[:, 2:3] * x_t[2:3, :])
    return jnp.maximum(y1 + b1_ref[...], 0.0)


def _stats_kernel(x_ref, w1t_ref, b1_ref, cs_ref, g_ref):
    """Pass A: h1 = relu(BN1(conv1(x))); accumulate per-batch colsum(h1) and
    Gram G1 = h1 @ h1^T.  BN2 statistics are finished on the host from these."""
    n = pl.program_id(1)

    @pl.when(n == 0)
    def _init():
        cs_ref[...] = jnp.zeros_like(cs_ref)
        g_ref[...] = jnp.zeros_like(g_ref)

    h1 = _conv1_relu(x_ref[0], w1t_ref, b1_ref)                    # (64, tn) f32
    h1b = h1.astype(jnp.bfloat16)
    cs_ref[0] += jnp.sum(h1, axis=1, keepdims=True)                # (64, 1)
    g_ref[0] += jax.lax.dot_general(                               # (64, 64) MXU
        h1b, h1b, (((1,), (1,)), ((), ())),
        preferred_element_type=jnp.float32)


def _final_kernel(x_ref, w1t_ref, b1_ref, w2t_ref, b2_ref, w3t_ref,
                  x128_ref, cs_ref, g_ref, mx_ref):
    """Pass B: recompute h1 (cheap), h2 = relu(BN2(conv2(h1))); write x128 in
    its final (B, 128, N) layout; accumulate colsum(h2), Gram(h2) (for BN3
    stats on host) and a per-batch running max of the sign-flipped conv3
    output, evaluated in 256-channel chunks (the (1024, tn) tensor is never
    materialized or written to HBM)."""
    n = pl.program_id(1)

    @pl.when(n == 0)
    def _init():
        cs_ref[...] = jnp.zeros_like(cs_ref)
        g_ref[...] = jnp.zeros_like(g_ref)
        mx_ref[...] = jnp.full_like(mx_ref, -jnp.inf)

    h1 = _conv1_relu(x_ref[0], w1t_ref, b1_ref)                    # (64, tn)
    y2 = jnp.dot(w2t_ref[...], h1.astype(jnp.bfloat16),            # (128, tn) MXU
                 preferred_element_type=jnp.float32)
    h2 = jnp.maximum(y2 + b2_ref[...], 0.0)                        # BN2 shift + ReLU
    x128_ref[0] = h2.astype(x128_ref.dtype)                        # final layout store
    h2b = h2.astype(jnp.bfloat16)

    cs_ref[0] += jnp.sum(h2, axis=1, keepdims=True)                # (128, 1)
    g_ref[0] += jax.lax.dot_general(                               # (128, 128) MXU
        h2b, h2b, (((1,), (1,)), ((), ())),
        preferred_element_type=jnp.float32)

    c3 = w3t_ref.shape[0]                                          # 1024
    for c in range(0, c3, _CH):
        y3c = jnp.dot(w3t_ref[c:c + _CH, :], h2b,                  # (256, tn) MXU
                      preferred_element_type=jnp.float32)
        cmax = jnp.max(y3c, axis=1, keepdims=True)                 # (256, 1)
        mx_ref[0, c:c + _CH, :] = jnp.maximum(mx_ref[0, c:c + _CH, :], cmax)


# ------------------------------- host helpers -------------------------------- #

def _pick_tile(n, target):
    """Point tile: full N if small, else the largest multiple of 128 dividing N
    (keeps every block lane-dense / legal under the (8,128) rule)."""
    if n <= target:
        return n
    best = None
    t = 128
    while t <= target:
        if n % t == 0:
            best = t
        t += 128
    if best is not None:
        return best
    # TODO(synk): pad N to a multiple of 128 and mask instead of a full-N block.
    return n


def _bn_fold(s, ss, count, gamma, beta):
    """Training-mode BN (biased var) folded into one per-channel scale & shift."""
    mean = s / count
    var = jnp.maximum(ss / count - mean * mean, 0.0)
    scale = gamma * jax.lax.rsqrt(var + BN_EPS)
    shift = beta - mean * scale
    return scale, shift


def _const_spec(shape):
    zeros = (0,) * len(shape)
    return pl.BlockSpec(shape, lambda b, n: zeros)


# ---------------------------------- forward ---------------------------------- #

def pointnet_feat_forward(x_ncw, params):
    """x_ncw: (B, 3, N) float32 -> (global_feat (B, 1024), x128 (B, 128, N))."""
    B, Cin, N = x_ncw.shape
    assert Cin == 3
    w1, w2, w3 = params["w1"], params["w2"], params["w3"]    # (3,64) (64,128) (128,1024)
    g1, be1 = params["bn1"]
    g2, be2 = params["bn2"]
    g3, be3 = params["bn3"]
    cnt = jnp.asarray(B * N, jnp.float32)

    # ---- BN1 statistics: pure XLA (y1 is linear in x -> 3-vector + 3x3 Gram) ----
    colsum_x = jnp.sum(x_ncw, axis=(0, 2))                           # (3,)
    gram_x = jnp.einsum("bcn,bdn->cd", x_ncw, x_ncw)                 # (3, 3)
    sum1 = colsum_x @ w1
    sumsq1 = jnp.sum((gram_x @ w1) * w1, axis=0)
    scale1, shift1 = _bn_fold(sum1, sumsq1, cnt, g1, be1)
    w1t_eff = (w1 * scale1[None, :]).T                               # (64, 3) f32
    b1col = shift1.reshape(64, 1)

    # ---- pass A: BN2 statistics via colsum(h1) + Gram(h1) ----------------------
    tn_a = _pick_tile(N, 2048)
    csum1_b, gram1_b = pl.pallas_call(
        _stats_kernel,
        out_shape=(jax.ShapeDtypeStruct((B, 64, 1), jnp.float32),
                   jax.ShapeDtypeStruct((B, 64, 64), jnp.float32)),
        grid=(B, N // tn_a),
        in_specs=[pl.BlockSpec((1, 3, tn_a), lambda b, n: (b, 0, n)),
                  _const_spec((64, 3)), _const_spec((64, 1))],
        out_specs=(pl.BlockSpec((1, 64, 1), lambda b, n: (b, 0, 0)),
                   pl.BlockSpec((1, 64, 64), lambda b, n: (b, 0, 0))),
        compiler_params=_CPARAMS,
    )(x_ncw, w1t_eff, b1col)

    cs1 = jnp.sum(csum1_b[:, :, 0], axis=0)                          # (64,)
    gram1 = jnp.sum(gram1_b, axis=0)                                 # (64, 64)
    sum2 = cs1 @ w2
    sumsq2 = jnp.sum((gram1 @ w2) * w2, axis=0)
    scale2, shift2 = _bn_fold(sum2, sumsq2, cnt, g2, be2)
    w2t_eff = (w2 * scale2[None, :]).T.astype(jnp.bfloat16)          # (128, 64)
    b2col = shift2.reshape(128, 1)

    # Sign-flip conv3 columns so a single running max suffices (sign(scale3)
    # == sign(gamma3) is known on the host).
    sign3 = jnp.where(g3 >= 0.0, 1.0, -1.0)
    w3t_signed = (w3 * sign3[None, :]).T.astype(jnp.bfloat16)        # (1024, 128)

    # ---- pass B: fused conv1..conv3, x128 write, BN3 Gram stats, running max ---
    tn_b = _pick_tile(N, 512)
    x128, csum2_b, gram2_b, max_b = pl.pallas_call(
        _final_kernel,
        out_shape=(jax.ShapeDtypeStruct((B, 128, N), jnp.float32),
                   jax.ShapeDtypeStruct((B, 128, 1), jnp.float32),
                   jax.ShapeDtypeStruct((B, 128, 128), jnp.float32),
                   jax.ShapeDtypeStruct((B, 1024, 1), jnp.float32)),
        grid=(B, N // tn_b),
        in_specs=[pl.BlockSpec((1, 3, tn_b), lambda b, n: (b, 0, n)),
                  _const_spec((64, 3)), _const_spec((64, 1)),
                  _const_spec((128, 64)), _const_spec((128, 1)),
                  _const_spec((1024, 128))],
        out_specs=(pl.BlockSpec((1, 128, tn_b), lambda b, n: (b, 0, n)),
                   pl.BlockSpec((1, 128, 1), lambda b, n: (b, 0, 0)),
                   pl.BlockSpec((1, 128, 128), lambda b, n: (b, 0, 0)),
                   pl.BlockSpec((1, 1024, 1), lambda b, n: (b, 0, 0))),
        compiler_params=_CPARAMS,
    )(x_ncw, w1t_eff, b1col, w2t_eff, b2col, w3t_signed)

    # BN3 + max epilogue on tiny host tensors:
    #   max_n(scale*y + shift) = |scale| * max_n(sign(gamma)*y) + shift
    cs2 = jnp.sum(csum2_b[:, :, 0], axis=0)                          # (128,)
    gram2 = jnp.sum(gram2_b, axis=0)                                 # (128, 128)
    sum3 = cs2 @ w3
    sumsq3 = jnp.sum((gram2 @ w3) * w3, axis=0)
    scale3, shift3 = _bn_fold(sum3, sumsq3, cnt, g3, be3)            # (1024,)
    gfeat = jnp.abs(scale3)[None, :] * max_b[:, :, 0] + shift3[None, :]
    return gfeat, x128


# --------------------------- parameters & reference -------------------------- #

def init_params(key):
    ks = jax.random.split(key, 9)

    def conv_w(k, cin, cout):
        # PyTorch Conv1d(kernel=1) init: U(-1/sqrt(cin), 1/sqrt(cin)), stored (cin, cout).
        bound = 1.0 / (cin ** 0.5)
        return jax.random.uniform(k, (cin, cout), jnp.float32, -bound, bound)

    # Conv biases omitted: exactly cancelled by training-mode BN mean subtraction.
    return {
        "w1": conv_w(ks[0], 3, 64),
        "w2": conv_w(ks[1], 64, 128),
        "w3": conv_w(ks[2], 128, 1024),
        "bn1": (jax.random.uniform(ks[3], (64,), jnp.float32, 0.5, 1.5),
                jax.random.uniform(ks[4], (64,), jnp.float32, -0.1, 0.1)),
        "bn2": (jax.random.uniform(ks[5], (128,), jnp.float32, 0.5, 1.5),
                jax.random.uniform(ks[6], (128,), jnp.float32, -0.1, 0.1)),
        # bn3 gamma spans both signs to exercise the signed-max epilogue.
        "bn3": (jax.random.uniform(ks[7], (1024,), jnp.float32, -1.5, 1.5),
                jax.random.uniform(ks[8], (1024,), jnp.float32, -0.1, 0.1)),
    }


def _reference_forward(x_ncw, params):
    """Pure-JAX f32 reference of the PyTorch forward (training-mode BN)."""
    B, Cin, N = x_ncw.shape
    x = jnp.transpose(x_ncw, (0, 2, 1)).reshape(B * N, Cin)

    def bn(y, gamma, beta, relu):
        mean = jnp.mean(y, axis=0, keepdims=True)
        var = jnp.mean((y - mean) ** 2, axis=0, keepdims=True)
        y = (y - mean) * jax.lax.rsqrt(var + BN_EPS) * gamma[None, :] + beta[None, :]
        return jnp.maximum(y, 0.0) if relu else y

    h1 = bn(x @ params["w1"], *params["bn1"], relu=True)
    h2 = bn(h1 @ params["w2"], *params["bn2"], relu=True)
    y3 = bn(h2 @ params["w3"], *params["bn3"], relu=False)
    gfeat = jnp.max(y3.reshape(B, N, 1024), axis=1)
    x128 = jnp.transpose(h2.reshape(B, N, 128), (0, 2, 1))
    return gfeat, x128


# ------------------------------------ main ------------------------------------ #

if __name__ == "__main__":
    key = jax.random.PRNGKey(0)
    kx, kp = jax.random.split(key)

    B, C_IN, N_POINTS = 2, 3, 16
    x = jax.random.normal(kx, (B, C_IN, N_POINTS), dtype=jnp.float32)
    params = init_params(kp)

    fwd = jax.jit(pointnet_feat_forward)
    gfeat, x128 = jax.block_until_ready(fwd(x, params))

    assert gfeat.shape == (B, 1024), gfeat.shape
    assert x128.shape == (B, 128, N_POINTS), x128.shape
    assert bool(jnp.all(jnp.isfinite(gfeat))) and bool(jnp.all(jnp.isfinite(x128)))

    # Correctness vs a pure-f32 reference (kernel uses bf16 MXU inputs for the
    # wide matmuls and the BN Gram statistics, so allow a loose tolerance).
    ref_g, ref_x = _reference_forward(x, params)
    err_g = float(jnp.max(jnp.abs(gfeat - ref_g)))
    err_x = float(jnp.max(jnp.abs(x128 - ref_x)))
    assert err_g < 2e-1 and err_x < 1e-1, (err_g, err_x)

    print("KERNEL_OK")
</pallas_src>

<mosaic_0001>
module attributes {stable_mosaic.version = 11 : i64} {
  func.func @_stats_kernel(%arg0: i32, %arg1: i32, %arg2: memref<1x3x16xf32, #tpu.memory_space<vmem>>, %arg3: memref<64x3xf32, #tpu.memory_space<vmem>>, %arg4: memref<64x1xf32, #tpu.memory_space<vmem>>, %arg5: memref<1x64x1xf32, #tpu.memory_space<vmem>>, %arg6: memref<1x64x64xf32, #tpu.memory_space<vmem>>) attributes {dimension_semantics = [#tpu.dimension_semantics<parallel>, #tpu.dimension_semantics<arbitrary>], iteration_bounds = array<i64: 2, 1>, scalar_prefetch = 0 : i64, scratch_operands = 0 : i64, tpu.core_type = #tpu.core_type<tc>, window_params = [{transform_indices = @transform_0, window_bounds = array<i64: 1, 3, 16>}, {pipeline_mode = #tpu.pipeline_mode<synchronous>, transform_indices = @transform_1, window_bounds = array<i64: 64, 3>}, {pipeline_mode = #tpu.pipeline_mode<synchronous>, transform_indices = @transform_2, window_bounds = array<i64: 64, 1>}, {transform_indices = @transform_3, window_bounds = array<i64: 1, 64, 1>}, {transform_indices = @transform_4, window_bounds = array<i64: 1, 64, 64>}]} {
    %c0_i32 = arith.constant 0 : i32
    %0 = arith.cmpi eq, %arg1, %c0_i32 : i32
    %1 = arith.extui %0 : i1 to i32
    %c0_i32_0 = arith.constant 0 : i32
    %2 = arith.cmpi ne, %1, %c0_i32_0 : i32
    scf.if %2 {
      %cst_23 = arith.constant 0.000000e+00 : f32
      %43 = vector.broadcast %cst_23 : f32 to vector<1x64x1xf32>
      %c0_24 = arith.constant 0 : index
      %c0_25 = arith.constant 0 : index
      %c0_26 = arith.constant 0 : index
      %44 = vector.load %arg5[%c0_24, %c0_25, %c0_26] : memref<1x64x1xf32, #tpu.memory_space<vmem>>, vector<1x64x1xf32>
      tpu.vector_store %arg5[%c0_24, %c0_25, %c0_26], %43 {strides = array<i32>} : memref<1x64x1xf32, #tpu.memory_space<vmem>>, vector<1x64x1xf32>,
      %cst_27 = arith.constant 0.000000e+00 : f32
      %45 = vector.broadcast %cst_27 : f32 to vector<1x64x64xf32>
      %c0_28 = arith.constant 0 : index
      %c0_29 = arith.constant 0 : index
      %c0_30 = arith.constant 0 : index
      %46 = vector.load %arg6[%c0_28, %c0_29, %c0_30] : memref<1x64x64xf32, #tpu.memory_space<vmem>>, vector<1x64x64xf32>
      tpu.vector_store %arg6[%c0_28, %c0_29, %c0_30], %45 {strides = array<i32>} : memref<1x64x64xf32, #tpu.memory_space<vmem>>, vector<1x64x64xf32>,
    } else {
    }
    %c0 = arith.constant 0 : index
    %c0_1 = arith.constant 0 : index
    %c0_2 = arith.constant 0 : index
    %3 = vector.load %arg2[%c0, %c0_1, %c0_2] : memref<1x3x16xf32, #tpu.memory_space<vmem>>, vector<1x3x16xf32>
    %4 = vector.shape_cast %3 : vector<1x3x16xf32> to vector<3x16xf32>
    %c0_3 = arith.constant 0 : index
    %c0_4 = arith.constant 0 : index
    %5 = vector.load %arg3[%c0_3, %c0_4] : memref<64x3xf32, #tpu.memory_space<vmem>>, vector<64x1xf32>
    %6 = vector.extract_strided_slice %4 {offsets = [0, 0], sizes = [1, 16], strides = [1, 1]} : vector<3x16xf32> to vector<1x16xf32>
    %7 = vector.broadcast %5 : vector<64x1xf32> to vector<64x16xf32>
    %8 = vector.broadcast %6 : vector<1x16xf32> to vector<64x16xf32>
    %9 = arith.mulf %7, %8 : vector<64x16xf32>
    %c0_5 = arith.constant 0 : index
    %c1 = arith.constant 1 : index
    %10 = vector.load %arg3[%c0_5, %c1] : memref<64x3xf32, #tpu.memory_space<vmem>>, vector<64x1xf32>
    %11 = vector.extract_strided_slice %4 {offsets = [1, 0], sizes = [1, 16], strides = [1, 1]} : vector<3x16xf32> to vector<1x16xf32>
    %12 = vector.broadcast %10 : vector<64x1xf32> to vector<64x16xf32>
    %13 = vector.broadcast %11 : vector<1x16xf32> to vector<64x16xf32>
    %14 = arith.mulf %12, %13 : vector<64x16xf32>
    %15 = arith.addf %9, %14 : vector<64x16xf32>
    %c0_6 = arith.constant 0 : index
    %c2 = arith.constant 2 : index
    %16 = vector.load %arg3[%c0_6, %c2] : memref<64x3xf32, #tpu.memory_space<vmem>>, vector<64x1xf32>
    %17 = vector.extract_strided_slice %4 {offsets = [2, 0], sizes = [1, 16], strides = [1, 1]} : vector<3x16xf32> to vector<1x16xf32>
    %18 = vector.broadcast %16 : vector<64x1xf32> to vector<64x16xf32>
    %19 = vector.broadcast %17 : vector<1x16xf32> to vector<64x16xf32>
    %20 = arith.mulf %18, %19 : vector<64x16xf32>
    %21 = arith.addf %15, %20 : vector<64x16xf32>
    %c0_7 = arith.constant 0 : index
    %c0_8 = arith.constant 0 : index
    %22 = vector.load %arg4[%c0_7, %c0_8] : memref<64x1xf32, #tpu.memory_space<vmem>>, vector<64x1xf32>
    %23 = vector.broadcast %22 : vector<64x1xf32> to vector<64x16xf32>
    %24 = arith.addf %21, %23 : vector<64x16xf32>
    %cst = arith.constant 0.000000e+00 : f32
    %25 = vector.broadcast %cst : f32 to vector<64x16xf32>
    %26 = arith.maximumf %24, %25 : vector<64x16xf32>
    %27 = arith.truncf %26 : vector<64x16xf32> to vector<64x16xbf16>
    %c0_9 = arith.constant 0 : index
    %c0_10 = arith.constant 0 : index
    %c0_11 = arith.constant 0 : index
    %28 = vector.load %arg5[%c0_9, %c0_10, %c0_11] : memref<1x64x1xf32, #tpu.memory_space<vmem>>, vector<1x64x1xf32>
    %29 = vector.shape_cast %28 : vector<1x64x1xf32> to vector<64x1xf32>
    %cst_12 = arith.constant dense<0.000000e+00> : vector<64xf32>
    %30 = vector.multi_reduction <add>, %26, %cst_12 [1] : vector<64x16xf32> to vector<64xf32>
    %31 = vector.shape_cast %30 : vector<64xf32> to vector<64x1xf32>
    %32 = arith.addf %29, %31 : vector<64x1xf32>
    %c0_13 = arith.constant 0 : index
    %c0_14 = arith.constant 0 : index
    %c0_15 = arith.constant 0 : index
    %33 = vector.load %arg5[%c0_13, %c0_14, %c0_15] : memref<1x64x1xf32, #tpu.memory_space<vmem>>, vector<1x64x1xf32>
    %34 = vector.shape_cast %33 : vector<1x64x1xf32> to vector<64x1xf32>
    %35 = vector.shape_cast %32 : vector<64x1xf32> to vector<1x64x1xf32>
    tpu.vector_store %arg5[%c0_13, %c0_14, %c0_15], %35 {strides = array<i32>} : memref<1x64x1xf32, #tpu.memory_space<vmem>>, vector<1x64x1xf32>,
    %c0_16 = arith.constant 0 : index
    %c0_17 = arith.constant 0 : index
    %c0_18 = arith.constant 0 : index
    %36 = vector.load %arg6[%c0_16, %c0_17, %c0_18] : memref<1x64x64xf32, #tpu.memory_space<vmem>>, vector<1x64x64xf32>
    %37 = vector.shape_cast %36 : vector<1x64x64xf32> to vector<64x64xf32>
    %cst_19 = arith.constant dense<0.000000e+00> : vector<64x64xf32>
    %38 = tpu.matmul %27, %27, %cst_19 {dimension_numbers = #tpu.dot_dimension_numbers<[1], [1], [0], [0], [0, 0, 1, 0], [], []>} : vector<64x16xbf16>, vector<64x16xbf16>, vector<64x64xf32> -> vector<64x64xf32>
    %39 = arith.addf %37, %38 : vector<64x64xf32>
    %c0_20 = arith.constant 0 : index
    %c0_21 = arith.constant 0 : index
    %c0_22 = arith.constant 0 : index
    %40 = vector.load %arg6[%c0_20, %c0_21, %c0_22] : memref<1x64x64xf32, #tpu.memory_space<vmem>>, vector<1x64x64xf32>
    %41 = vector.shape_cast %40 : vector<1x64x64xf32> to vector<64x64xf32>
    %42 = vector.shape_cast %39 : vector<64x64xf32> to vector<1x64x64xf32>
    tpu.vector_store %arg6[%c0_20, %c0_21, %c0_22], %42 {strides = array<i32>} : memref<1x64x64xf32, #tpu.memory_space<vmem>>, vector<1x64x64xf32>,
    return
  }
  func.func @transform_0(%arg0: i32, %arg1: i32) -> (i32, i32, i32) {
    %c0_i32 = arith.constant 0 : i32
    %c0_i32_0 = arith.constant 0 : i32
    return %arg0, %c0_i32, %arg1 : i32, i32, i32
  }
  func.func @transform_1(%arg0: i32, %arg1: i32) -> (i32, i32) {
    %c0_i32 = arith.constant 0 : i32
    %c0_i32_0 = arith.constant 0 : i32
    %c0_i32_1 = arith.constant 0 : i32
    return %c0_i32, %c0_i32_0 : i32, i32
  }
  func.func @transform_2(%arg0: i32, %arg1: i32) -> (i32, i32) {
    %c0_i32 = arith.constant 0 : i32
    %c0_i32_0 = arith.constant 0 : i32
    %c0_i32_1 = arith.constant 0 : i32
    return %c0_i32, %c0_i32_0 : i32, i32
  }
  func.func @transform_3(%arg0: i32, %arg1: i32) -> (i32, i32, i32) {
    %c0_i32 = arith.constant 0 : i32
    %c0_i32_0 = arith.constant 0 : i32
    %c0_i32_1 = arith.constant 0 : i32
    return %arg0, %c0_i32, %c0_i32_0 : i32, i32, i32
  }
  func.func @transform_4(%arg0: i32, %arg1: i32) -> (i32, i32, i32) {
    %c0_i32 = arith.constant 0 : i32
    %c0_i32_0 = arith.constant 0 : i32
    %c0_i32_1 = arith.constant 0 : i32
    return %arg0, %c0_i32, %c0_i32_0 : i32, i32, i32
  }
}

module attributes {stable_mosaic.version = 11 : i64} {
  func.func @_final_kernel(%arg0: i32, %arg1: i32, %arg2: memref<1x3x16xf32, #tpu.memory_space<vmem>>, %arg3: memref<64x3xf32, #tpu.memory_space<vmem>>, %arg4: memref<64x1xf32, #tpu.memory_space<vmem>>, %arg5: memref<128x64xbf16, #tpu.memory_space<vmem>>, %arg6: memref<128x1xf32, #tpu.memory_space<vmem>>, %arg7: memref<1024x128xbf16, #tpu.memory_space<vmem>>, %arg8: memref<1x128x16xf32, #tpu.memory_space<vmem>>, %arg9: memref<1x128x1xf32, #tpu.memory_space<vmem>>, %arg10: memref<1x128x128xf32, #tpu.memory_space<vmem>>, %arg11: memref<1x1024x1xf32, #tpu.memory_space<vmem>>) attributes {dimension_semantics = [#tpu.dimension_semantics<parallel>, #tpu.dimension_semantics<arbitrary>], iteration_bounds = array<i64: 2, 1>, scalar_prefetch = 0 : i64, scratch_operands = 0 : i64, tpu.core_type = #tpu.core_type<tc>, window_params = [{transform_indices = @transform_0, window_bounds = array<i64: 1, 3, 16>}, {pipeline_mode = #tpu.pipeline_mode<synchronous>, transform_indices = @transform_1, window_bounds = array<i64: 64, 3>}, {pipeline_mode = #tpu.pipeline_mode<synchronous>, transform_indices = @transform_2, window_bounds = array<i64: 64, 1>}, {pipeline_mode = #tpu.pipeline_mode<synchronous>, transform_indices = @transform_3, window_bounds = array<i64: 128, 64>}, {pipeline_mode = #tpu.pipeline_mode<synchronous>, transform_indices = @transform_4, window_bounds = array<i64: 128, 1>}, {pipeline_mode = #tpu.pipeline_mode<synchronous>, transform_indices = @transform_5, window_bounds = array<i64: 1024, 128>}, {transform_indices = @transform_6, window_bounds = array<i64: 1, 128, 16>}, {transform_indices = @transform_7, window_bounds = array<i64: 1, 128, 1>}, {transform_indices = @transform_8, window_bounds = array<i64: 1, 128, 128>}, {transform_indices = @transform_9, window_bounds = array<i64: 1, 1024, 1>}]} {
    %c0_i32 = arith.constant 0 : i32
    %0 = arith.cmpi eq, %arg1, %c0_i32 : i32
    %1 = arith.extui %0 : i1 to i32
    %c0_i32_0 = arith.constant 0 : i32
    %2 = arith.cmpi ne, %1, %c0_i32_0 : i32
    scf.if %2 {
      %cst_69 = arith.constant 0.000000e+00 : f32
      %94 = vector.broadcast %cst_69 : f32 to vector<1x128x1xf32>
      %c0_70 = arith.constant 0 : index
      %c0_71 = arith.constant 0 : index
      %c0_72 = arith.constant 0 : index
      %95 = vector.load %arg9[%c0_70, %c0_71, %c0_72] : memref<1x128x1xf32, #tpu.memory_space<vmem>>, vector<1x128x1xf32>
      tpu.vector_store %arg9[%c0_70, %c0_71, %c0_72], %94 {strides = array<i32>} : memref<1x128x1xf32, #tpu.memory_space<vmem>>, vector<1x128x1xf32>,
      %cst_73 = arith.constant 0.000000e+00 : f32
      %96 = vector.broadcast %cst_73 : f32 to vector<1x128x128xf32>
      %c0_74 = arith.constant 0 : index
      %c0_75 = arith.constant 0 : index
      %c0_76 = arith.constant 0 : index
      %97 = vector.load %arg10[%c0_74, %c0_75, %c0_76] : memref<1x128x128xf32, #tpu.memory_space<vmem>>, vector<1x128x128xf32>
      tpu.vector_store %arg10[%c0_74, %c0_75, %c0_76], %96 {strides = array<i32>} : memref<1x128x128xf32, #tpu.memory_space<vmem>>, vector<1x128x128xf32>,
      %cst_77 = arith.constant 0xFF800000 : f32
      %98 = vector.broadcast %cst_77 : f32 to vector<1x1024x1xf32>
      %c0_78 = arith.constant 0 : index
      %c0_79 = arith.constant 0 : index
      %c0_80 = arith.constant 0 : index
      %99 = vector.load %arg11[%c0_78, %c0_79, %c0_80] : memref<1x1024x1xf32, #tpu.memory_space<vmem>>, vector<1x1024x1xf32>
      tpu.vector_store %arg11[%c0_78, %c0_79, %c0_80], %98 {strides = array<i32>} : memref<1x1024x1xf32, #tpu.memory_space<vmem>>, vector<1x1024x1xf32>,
    } else {
    }
    %c0 = arith.constant 0 : index
    %c0_1 = arith.constant 0 : index
    %c0_2 = arith.constant 0 : index
    %3 = vector.load %arg2[%c0, %c0_1, %c0_2] : memref<1x3x16xf32, #tpu.memory_space<vmem>>, vector<1x3x16xf32>
    %4 = vector.shape_cast %3 : vector<1x3x16xf32> to vector<3x16xf32>
    %c0_3 = arith.constant 0 : index
    %c0_4 = arith.constant 0 : index
    %5 = vector.load %arg3[%c0_3, %c0_4] : memref<64x3xf32, #tpu.memory_space<vmem>>, vector<64x1xf32>
    %6 = vector.extract_strided_slice %4 {offsets = [0, 0], sizes = [1, 16], strides = [1, 1]} : vector<3x16xf32> to vector<1x16xf32>
    %7 = vector.broadcast %5 : vector<64x1xf32> to vector<64x16xf32>
    %8 = vector.broadcast %6 : vector<1x16xf32> to vector<64x16xf32>
    %9 = arith.mulf %7, %8 : vector<64x16xf32>
    %c0_5 = arith.constant 0 : index
    %c1 = arith.constant 1 : index
    %10 = vector.load %arg3[%c0_5, %c1] : memref<64x3xf32, #tpu.memory_space<vmem>>, vector<64x1xf32>
    %11 = vector.extract_strided_slice %4 {offsets = [1, 0], sizes = [1, 16], strides = [1, 1]} : vector<3x16xf32> to vector<1x16xf32>
    %12 = vector.broadcast %10 : vector<64x1xf32> to vector<64x16xf32>
    %13 = vector.broadcast %11 : vector<1x16xf32> to vector<64x16xf32>
    %14 = arith.mulf %12, %13 : vector<64x16xf32>
    %15 = arith.addf %9, %14 : vector<64x16xf32>
    %c0_6 = arith.constant 0 : index
    %c2 = arith.constant 2 : index
    %16 = vector.load %arg3[%c0_6, %c2] : memref<64x3xf32, #tpu.memory_space<vmem>>, vector<64x1xf32>
    %17 = vector.extract_strided_slice %4 {offsets = [2, 0], sizes = [1, 16], strides = [1, 1]} : vector<3x16xf32> to vector<1x16xf32>
    %18 = vector.broadcast %16 : vector<64x1xf32> to vector<64x16xf32>
    %19 = vector.broadcast %17 : vector<1x16xf32> to vector<64x16xf32>
    %20 = arith.mulf %18, %19 : vector<64x16xf32>
    %21 = arith.addf %15, %20 : vector<64x16xf32>
    %c0_7 = arith.constant 0 : index
    %c0_8 = arith.constant 0 : index
    %22 = vector.load %arg4[%c0_7, %c0_8] : memref<64x1xf32, #tpu.memory_space<vmem>>, vector<64x1xf32>
    %23 = vector.broadcast %22 : vector<64x1xf32> to vector<64x16xf32>
    %24 = arith.addf %21, %23 : vector<64x16xf32>
    %cst = arith.constant 0.000000e+00 : f32
    %25 = vector.broadcast %cst : f32 to vector<64x16xf32>
    %26 = arith.maximumf %24, %25 : vector<64x16xf32>
    %c0_9 = arith.constant 0 : index
    %c0_10 = arith.constant 0 : index
    %27 = vector.load %arg5[%c0_9, %c0_10] : memref<128x64xbf16, #tpu.memory_space<vmem>>, vector<128x64xbf16>
    %28 = arith.truncf %26 : vector<64x16xf32> to vector<64x16xbf16>
    %cst_11 = arith.constant dense<0.000000e+00> : vector<128x16xf32>
    %29 = tpu.matmul %27, %28, %cst_11 {dimension_numbers = #tpu.dot_dimension_numbers<[1], [0], [0], [1], [0, 0, 1, 1], [], []>} : vector<128x64xbf16>, vector<64x16xbf16>, vector<128x16xf32> -> vector<128x16xf32>
    %c0_12 = arith.constant 0 : index
    %c0_13 = arith.constant 0 : index
    %30 = vector.load %arg6[%c0_12, %c0_13] : memref<128x1xf32, #tpu.memory_space<vmem>>, vector<128x1xf32>
    %31 = vector.broadcast %30 : vector<128x1xf32> to vector<128x16xf32>
    %32 = arith.addf %29, %31 : vector<128x16xf32>
    %cst_14 = arith.constant 0.000000e+00 : f32
    %33 = vector.broadcast %cst_14 : f32 to vector<128x16xf32>
    %34 = arith.maximumf %32, %33 : vector<128x16xf32>
    %c0_15 = arith.constant 0 : index
    %c0_16 = arith.constant 0 : index
    %c0_17 = arith.constant 0 : index
    %35 = vector.load %arg8[%c0_15, %c0_16, %c0_17] : memref<1x128x16xf32, #tpu.memory_space<vmem>>, vector<1x128x16xf32>
    %36 = vector.shape_cast %35 : vector<1x128x16xf32> to vector<128x16xf32>
    %37 = vector.shape_cast %34 : vector<128x16xf32> to vector<1x128x16xf32>
    tpu.vector_store %arg8[%c0_15, %c0_16, %c0_17], %37 {strides = array<i32>} : memref<1x128x16xf32, #tpu.memory_space<vmem>>, vector<1x128x16xf32>,
    %38 = arith.truncf %34 : vector<128x16xf32> to vector<128x16xbf16>
    %c0_18 = arith.constant 0 : index
    %c0_19 = arith.constant 0 : index
    %c0_20 = arith.constant 0 : index
    %39 = vector.load %arg9[%c0_18, %c0_19, %c0_20] : memref<1x128x1xf32, #tpu.memory_space<vmem>>, vector<1x128x1xf32>
    %40 = vector.shape_cast %39 : vector<1x128x1xf32> to vector<128x1xf32>
    %cst_21 = arith.constant dense<0.000000e+00> : vector<128xf32>
    %41 = vector.multi_reduction <add>, %34, %cst_21 [1] : vector<128x16xf32> to vector<128xf32>
    %42 = vector.shape_cast %41 : vector<128xf32> to vector<128x1xf32>
    %43 = arith.addf %40, %42 : vector<128x1xf32>
    %c0_22 = arith.constant 0 : index
    %c0_23 = arith.constant 0 : index
    %c0_24 = arith.constant 0 : index
    %44 = vector.load %arg9[%c0_22, %c0_23, %c0_24] : memref<1x128x1xf32, #tpu.memory_space<vmem>>, vector<1x128x1xf32>
    %45 = vector.shape_cast %44 : vector<1x128x1xf32> to vector<128x1xf32>
    %46 = vector.shape_cast %43 : vector<128x1xf32> to vector<1x128x1xf32>
    tpu.vector_store %arg9[%c0_22, %c0_23, %c0_24], %46 {strides = array<i32>} : memref<1x128x1xf32, #tpu.memory_space<vmem>>, vector<1x128x1xf32>,
    %c0_25 = arith.constant 0 : index
    %c0_26 = arith.constant 0 : index
    %c0_27 = arith.constant 0 : index
    %47 = vector.load %arg10[%c0_25, %c0_26, %c0_27] : memref<1x128x128xf32, #tpu.memory_space<vmem>>, vector<1x128x128xf32>
    %48 = vector.shape_cast %47 : vector<1x128x128xf32> to vector<128x128xf32>
    %cst_28 = arith.constant dense<0.000000e+00> : vector<128x128xf32>
    %49 = tpu.matmul %38, %38, %cst_28 {dimension_numbers = #tpu.dot_dimension_numbers<[1], [1], [0], [0], [0, 0, 1, 0], [], []>} : vector<128x16xbf16>, vector<128x16xbf16>, vector<128x128xf32> -> vector<128x128xf32>
    %50 = arith.addf %48, %49 : vector<128x128xf32>
    %c0_29 = arith.constant 0 : index
    %c0_30 = arith.constant 0 : index
    %c0_31 = arith.constant 0 : index
    %51 = vector.load %arg10[%c0_29, %c0_30, %c0_31] : memref<1x128x128xf32, #tpu.memory_space<vmem>>, vector<1x128x128xf32>
    %52 = vector.shape_cast %51 : vector<1x128x128xf32> to vector<128x128xf32>
    %53 = vector.shape_cast %50 : vector<128x128xf32> to vector<1x128x128xf32>
    tpu.vector_store %arg10[%c0_29, %c0_30, %c0_31], %53 {strides = array<i32>} : memref<1x128x128xf32, #tpu.memory_space<vmem>>, vector<1x128x128xf32>,
    %c0_32 = arith.constant 0 : index
    %c0_33 = arith.constant 0 : index
    %54 = vector.load %arg7[%c0_32, %c0_33] : memref<1024x128xbf16, #tpu.memory_space<vmem>>, vector<256x128xbf16>
    %cst_34 = arith.constant dense<0.000000e+00> : vector<256x16xf32>
    %55 = tpu.matmul %54, %38, %cst_34 {dimension_numbers = #tpu.dot_dimension_numbers<[1], [0], [0], [1], [0, 0, 1, 1], [], []>} : vector<256x128xbf16>, vector<128x16xbf16>, vector<256x16xf32> -> vector<256x16xf32>
    %cst_35 = arith.constant dense<0xFF800000> : vector<256xf32>
    %56 = vector.multi_reduction <maximumf>, %55, %cst_35 [1] : vector<256x16xf32> to vector<256xf32>
    %57 = vector.shape_cast %56 : vector<256xf32> to vector<256x1xf32>
    %c0_36 = arith.constant 0 : index
    %c0_37 = arith.constant 0 : index
    %c0_38 = arith.constant 0 : index
    %58 = vector.load %arg11[%c0_36, %c0_37, %c0_38] : memref<1x1024x1xf32, #tpu.memory_space<vmem>>, vector<1x256x1xf32>
    %59 = vector.shape_cast %58 : vector<1x256x1xf32> to vector<256x1xf32>
    %60 = arith.maximumf %59, %57 : vector<256x1xf32>
    %c0_39 = arith.constant 0 : index
    %c0_40 = arith.constant 0 : index
    %c0_41 = arith.constant 0 : index
    %61 = vector.load %arg11[%c0_39, %c0_40, %c0_41] : memref<1x1024x1xf32, #tpu.memory_space<vmem>>, vector<1x256x1xf32>
    %62 = vector.shape_cast %61 : vector<1x256x1xf32> to vector<256x1xf32>
    %63 = vector.shape_cast %60 : vector<256x1xf32> to vector<1x256x1xf32>
    tpu.vector_store %arg11[%c0_39, %c0_40, %c0_41], %63 {strides = array<i32>} : memref<1x1024x1xf32, #tpu.memory_space<vmem>>, vector<1x256x1xf32>,
    %c256 = arith.constant 256 : index
    %c0_42 = arith.constant 0 : index
    %64 = vector.load %arg7[%c256, %c0_42] : memref<1024x128xbf16, #tpu.memory_space<vmem>>, vector<256x128xbf16>
    %cst_43 = arith.constant dense<0.000000e+00> : vector<256x16xf32>
    %65 = tpu.matmul %64, %38, %cst_43 {dimension_numbers = #tpu.dot_dimension_numbers<[1], [0], [0], [1], [0, 0, 1, 1], [], []>} : vector<256x128xbf16>, vector<128x16xbf16>, vector<256x16xf32> -> vector<256x16xf32>
    %cst_44 = arith.constant dense<0xFF800000> : vector<256xf32>
    %66 = vector.multi_reduction <maximumf>, %65, %cst_44 [1] : vector<256x16xf32> to vector<256xf32>
    %67 = vector.shape_cast %66 : vector<256xf32> to vector<256x1xf32>
    %c0_45 = arith.constant 0 : index
    %c256_46 = arith.constant 256 : index
    %c0_47 = arith.constant 0 : index
    %68 = vector.load %arg11[%c0_45, %c256_46, %c0_47] : memref<1x1024x1xf32, #tpu.memory_space<vmem>>, vector<1x256x1xf32>
    %69 = vector.shape_cast %68 : vector<1x256x1xf32> to vector<256x1xf32>
    %70 = arith.maximumf %69, %67 : vector<256x1xf32>
    %c0_48 = arith.constant 0 : index
    %c256_49 = arith.constant 256 : index
    %c0_50 = arith.constant 0 : index
    %71 = vector.load %arg11[%c0_48, %c256_49, %c0_50] : memref<1x1024x1xf32, #tpu.memory_space<vmem>>, vector<1x256x1xf32>
    %72 = vector.shape_cast %71 : vector<1x256x1xf32> to vector<256x1xf32>
    %73 = vector.shape_cast %70 : vector<256x1xf32> to vector<1x256x1xf32>
    tpu.vector_store %arg11[%c0_48, %c256_49, %c0_50], %73 {strides = array<i32>} : memref<1x1024x1xf32, #tpu.memory_space<vmem>>, vector<1x256x1xf32>,
    %c512 = arith.constant 512 : index
    %c0_51 = arith.constant 0 : index
    %74 = vector.load %arg7[%c512, %c0_51] : memref<1024x128xbf16, #tpu.memory_space<vmem>>, vector<256x128xbf16>
    %cst_52 = arith.constant dense<0.000000e+00> : vector<256x16xf32>
    %75 = tpu.matmul %74, %38, %cst_52 {dimension_numbers = #tpu.dot_dimension_numbers<[1], [0], [0], [1], [0, 0, 1, 1], [], []>} : vector<256x128xbf16>, vector<128x16xbf16>, vector<256x16xf32> -> vector<256x16xf32>
    %cst_53 = arith.constant dense<0xFF800000> : vector<256xf32>
    %76 = vector.multi_reduction <maximumf>, %75, %cst_53 [1] : vector<256x16xf32> to vector<256xf32>
    %77 = vector.shape_cast %76 : vector<256xf32> to vector<256x1xf32>
    %c0_54 = arith.constant 0 : index
    %c512_55 = arith.constant 512 : index
    %c0_56 = arith.constant 0 : index
    %78 = vector.load %arg11[%c0_54, %c512_55, %c0_56] : memref<1x1024x1xf32, #tpu.memory_space<vmem>>, vector<1x256x1xf32>
    %79 = vector.shape_cast %78 : vector<1x256x1xf32> to vector<256x1xf32>
    %80 = arith.maximumf %79, %77 : vector<256x1xf32>
    %c0_57 = arith.constant 0 : index
    %c512_58 = arith.constant 512 : index
    %c0_59 = arith.constant 0 : index
    %81 = vector.load %arg11[%c0_57, %c512_58, %c0_59] : memref<1x1024x1xf32, #tpu.memory_space<vmem>>, vector<1x256x1xf32>
    %82 = vector.shape_cast %81 : vector<1x256x1xf32> to vector<256x1xf32>
    %83 = vector.shape_cast %80 : vector<256x1xf32> to vector<1x256x1xf32>
    tpu.vector_store %arg11[%c0_57, %c512_58, %c0_59], %83 {strides = array<i32>} : memref<1x1024x1xf32, #tpu.memory_space<vmem>>, vector<1x256x1xf32>,
    %c768 = arith.constant 768 : index
    %c0_60 = arith.constant 0 : index
    %84 = vector.load %arg7[%c768, %c0_60] : memref<1024x128xbf16, #tpu.memory_space<vmem>>, vector<256x128xbf16>
    %cst_61 = arith.constant dense<0.000000e+00> : vector<256x16xf32>
    %85 = tpu.matmul %84, %38, %cst_61 {dimension_numbers = #tpu.dot_dimension_numbers<[1], [0], [0], [1], [0, 0, 1, 1], [], []>} : vector<256x128xbf16>, vector<128x16xbf16>, vector<256x16xf32> -> vector<256x16xf32>
    %cst_62 = arith.constant dense<0xFF800000> : vector<256xf32>
    %86 = vector.multi_reduction <maximumf>, %85, %cst_62 [1] : vector<256x16xf32> to vector<256xf32>
    %87 = vector.shape_cast %86 : vector<256xf32> to vector<256x1xf32>
    %c0_63 = arith.constant 0 : index
    %c768_64 = arith.constant 768 : index
    %c0_65 = arith.constant 0 : index
    %88 = vector.load %arg11[%c0_63, %c768_64, %c0_65] : memref<1x1024x1xf32, #tpu.memory_space<vmem>>, vector<1x256x1xf32>
    %89 = vector.shape_cast %88 : vector<1x256x1xf32> to vector<256x1xf32>
    %90 = arith.maximumf %89, %87 : vector<256x1xf32>
    %c0_66 = arith.constant 0 : index
    %c768_67 = arith.constant 768 : index
    %c0_68 = arith.constant 0 : index
    %91 = vector.load %arg11[%c0_66, %c768_67, %c0_68] : memref<1x1024x1xf32, #tpu.memory_space<vmem>>, vector<1x256x1xf32>
    %92 = vector.shape_cast %91 : vector<1x256x1xf32> to vector<256x1xf32>
    %93 = vector.shape_cast %90 : vector<256x1xf32> to vector<1x256x1xf32>
    tpu.vector_store %arg11[%c0_66, %c768_67, %c0_68], %93 {strides = array<i32>} : memref<1x1024x1xf32, #tpu.memory_space<vmem>>, vector<1x256x1xf32>,
    return
  }
  func.func @transform_0(%arg0: i32, %arg1: i32) -> (i32, i32, i32) {
    %c0_i32 = arith.constant 0 : i32
    %c0_i32_0 = arith.constant 0 : i32
    return %arg0, %c0_i32, %arg1 : i32, i32, i32
  }
  func.func @transform_1(%arg0: i32, %arg1: i32) -> (i32, i32) {
    %c0_i32 = arith.constant 0 : i32
    %c0_i32_0 = arith.constant 0 : i32
    %c0_i32_1 = arith.constant 0 : i32
    return %c0_i32, %c0_i32_0 : i32, i32
  }
  func.func @transform_2(%arg0: i32, %arg1: i32) -> (i32, i32) {
    %c0_i32 = arith.constant 0 : i32
    %c0_i32_0 = arith.constant 0 : i32
    %c0_i32_1 = arith.constant 0 : i32
    return %c0_i32, %c0_i32_0 : i32, i32
  }
  func.func @transform_3(%arg0: i32, %arg1: i32) -> (i32, i32) {
    %c0_i32 = arith.constant 0 : i32
    %c0_i32_0 = arith.constant 0 : i32
    %c0_i32_1 = arith.constant 0 : i32
    return %c0_i32, %c0_i32_0 : i32, i32
  }
  func.func @transform_4(%arg0: i32, %arg1: i32) -> (i32, i32) {
    %c0_i32 = arith.constant 0 : i32
    %c0_i32_0 = arith.constant 0 : i32
    %c0_i32_1 = arith.constant 0 : i32
    return %c0_i32, %c0_i32_0 : i32, i32
  }
  func.func @transform_5(%arg0: i32, %arg1: i32) -> (i32, i32) {
    %c0_i32 = arith.constant 0 : i32
    %c0_i32_0 = arith.constant 0 : i32
    %c0_i32_1 = arith.constant 0 : i32
    return %c0_i32, %c0_i32_0 : i32, i32
  }
  func.func @transform_6(%arg0: i32, %arg1: i32) -> (i32, i32, i32) {
    %c0_i32 = arith.constant 0 : i32
    %c0_i32_0 = arith.constant 0 : i32
    return %arg0, %c0_i32, %arg1 : i32, i32, i32
  }
  func.func @transform_7(%arg0: i32, %arg1: i32) -> (i32, i32, i32) {
    %c0_i32 = arith.constant 0 : i32
    %c0_i32_0 = arith.constant 0 : i32
    %c0_i32_1 = arith.constant 0 : i32
    return %arg0, %c0_i32, %c0_i32_0 : i32, i32, i32
  }
  func.func @transform_8(%arg0: i32, %arg1: i32) -> (i32, i32, i32) {
    %c0_i32 = arith.constant 0 : i32
    %c0_i32_0 = arith.constant 0 : i32
    %c0_i32_1 = arith.constant 0 : i32
    return %arg0, %c0_i32, %c0_i32_0 : i32, i32, i32
  }
  func.func @transform_9(%arg0: i32, %arg1: i32) -> (i32, i32, i32) {
    %c0_i32 = arith.constant 0 : i32
    %c0_i32_0 = arith.constant 0 : i32
    %c0_i32_1 = arith.constant 0 : i32
    return %arg0, %c0_i32, %c0_i32_0 : i32, i32, i32
  }
}

</mosaic_0001>

<llo_original>
// kernel: pointnet_feat_forward.2
$region0: #{pointnet_feat_forward.2}
  #allocation0 [shape = 'u32[]', space=smem, size = 0x4, offset = 0x4, fixed_abs, tag = 'smem constant byte address 0x4 - core index']
  #allocation1 [shape = 'u32[144,128]{1,0:T(1,128)}', space=vmem, size = 0x12000, scoped, tag = 'internal scratch']
  %s0 = inlined_call_operand.vmem [shape: f32[2,3,16], index: 0, kind: input, shape index: {}]
  %s1 = inlined_call_operand.vmem [shape: f32[64,3], index: 1, kind: input, shape index: {}]
  %s2 = inlined_call_operand.vmem [shape: f32[64,1], index: 2, kind: input, shape index: {}]
  %s3 = inlined_call_operand.vmem [shape: f32[2,64,1], index: 3, kind: output, shape index: {0}]
  %s4 = inlined_call_operand.vmem [shape: f32[2,64,64], index: 4, kind: output, shape index: {1}]
  %5 = xla_tuple %s3, %s4
  %s6 = sld [smem:[#allocation0]]
  $region57: #{pointnet_feat_forward.2} parent=0
    _
  %s8 = ssub.s32 1, %s6
  %s9 = scalar_select 0, %s8, %s6
  loop: start=0, step=1, limit=4
  $region2: #{pointnet_feat_forward.2} parent=0 // loop_pre_header
    _
  $region3: #{pointnet_feat_forward.2} parent=0 // loop_header
    %s11 = sphi 0, %s15
    %p12 = scmp.ge.s32.totalorder %s11, 4
    %s18 = sphi 0, %s30
    %s19 = sphi 0, %s26
    %s20 = sphi 0, %s18
    %s21 = sphi 0, %s19
    %s22 = sphi 0, %s20
    %s23 = sphi 0, %s21
    %s35 = sphi 0, %s37
    %s38 = sphi 0, %s35
    %s39 = sphi 0, %s38
    %s55 = sphi 0, %s39
    %s59 = sphi 0, %s59
    %s61 = sphi 0, %s59
    %s62 = sphi 0, %s61
    %s76 = sphi 0, %s62
    %s80 = sphi 0, %s80
    %s82 = sphi 0, %s80
    %s83 = sphi 0, %s82
    %s97 = sphi 0, %s83
    %s103 = sphi 0, %s105
    %s106 = sphi 0, %s103
    %s107 = sphi 0, %s106
    %s123 = sphi 0, %s107
    %s129 = sphi 0, %s131
    %s132 = sphi 0, %s129
    %s133 = sphi 0, %s132
    %s149 = sphi 0, %s133
  $region4: #{pointnet_feat_forward.2} parent=0 // loop_header_branch
    %14 = sbr.rel (%p12) target = $region8
  $region5: #{pointnet_feat_forward.2} parent=0 // loop_body
    %s16 = ssub.s32 %s11, 1
    %s17 = ssub.s32 %s11, 2
    %s24 = sadd.s32 1, %s19
    %p25 = scmp.ge.s32.totalorder %s24, 1
    %s26 = scalar_select %p25, 0, %s24
    %s27 = sadd.s32 1, %s18
    %s28 = scalar_select %p25, %s27, %s18
    %p29 = scmp.ge.s32.totalorder %s28, 2
    %s30 = scalar_select %p29, 0, %s28
    %s31 = ssub.s32 %s18, %s30
    %s32 = ssub.s32 %s19, %s26
    %s33 = sor.u32 %s31, %s32
    %p34 = scmp.eq.s32.totalorder %s33, 0
    %s36 = sadd.s32 %s35, 1
    %s37 = scalar_select %p34, %s35, %s36
    %p40 = pneg %p34
    %p41 = scmp.eq.s32.totalorder %s11, 1
    %p42 = por %p40, %p41
    %p43 = scmp.ne.s32.totalorder %s35, %s38
    %p44 = scmp.eq.s32.totalorder %s11, 0
    %p45 = por %p43, %p44
    %p46 = scmp.ne.s32.totalorder %s35, %s38
    %p47 = scmp.eq.s32.totalorder %s16, 1
    %p48 = por %p46, %p47
    %p49 = scmp.ne.s32.totalorder %s38, %s39
    %p50 = scmp.eq.s32.totalorder %s16, 0
    %p51 = por %p49, %p50
    %p52 = scmp.ne.s32.totalorder %s38, %s39
    %p53 = scmp.eq.s32.totalorder %s17, 1
    %p54 = por %p52, %p53
    %p56 = scmp.ne.s32.totalorder %s39, %s55
    %p57 = scmp.eq.s32.totalorder %s17, 0
    %p58 = por %p56, %p57
    %s60 = sadd.s32 %s59, 1
    %p63 = scmp.eq.s32.totalorder %s11, 1
    %p64 = scmp.ne.s32.totalorder %s59, %s61
    %p65 = scmp.eq.s32.totalorder %s11, 0
    %p66 = por %p64, %p65
    %p67 = scmp.ne.s32.totalorder %s59, %s61
    %p68 = scmp.eq.s32.totalorder %s16, 1
    %p69 = por %p67, %p68
    %p70 = scmp.ne.s32.totalorder %s61, %s62
    %p71 = scmp.eq.s32.totalorder %s16, 0
    %p72 = por %p70, %p71
    %p73 = scmp.ne.s32.totalorder %s61, %s62
    %p74 = scmp.eq.s32.totalorder %s17, 1
    %p75 = por %p73, %p74
    %p77 = scmp.ne.s32.totalorder %s62, %s76
    %p78 = scmp.eq.s32.totalorder %s17, 0
    %p79 = por %p77, %p78
    %s81 = sadd.s32 %s80, 1
    %p84 = scmp.eq.s32.totalorder %s11, 1
    %p85 = scmp.ne.s32.totalorder %s80, %s82
    %p86 = scmp.eq.s32.totalorder %s11, 0
    %p87 = por %p85, %p86
    %p88 = scmp.ne.s32.totalorder %s80, %s82
    %p89 = scmp.eq.s32.totalorder %s16, 1
    %p90 = por %p88, %p89
    %p91 = scmp.ne.s32.totalorder %s82, %s83
    %p92 = scmp.eq.s32.totalorder %s16, 0
    %p93 = por %p91, %p92
    %p94 = scmp.ne.s32.totalorder %s82, %s83
    %p95 = scmp.eq.s32.totalorder %s17, 1
    %p96 = por %p94, %p95
    %p98 = scmp.ne.s32.totalorder %s83, %s97
    %p99 = scmp.eq.s32.totalorder %s17, 0
    %p100 = por %p98, %p99
    %s101 = ssub.s32 %s18, %s30
    %p102 = scmp.eq.s32.totalorder %s101, 0
    %s104 = sadd.s32 %s103, 1
    %s105 = scalar_select %p102, %s103, %s104
    %p108 = pneg %p102
    %p109 = scmp.eq.s32.totalorder %s11, 1
    %p110 = por %p108, %p109
    %p111 = scmp.ne.s32.totalorder %s103, %s106
    %p112 = scmp.eq.s32.totalorder %s11, 0
    %p113 = por %p111, %p112
    %p114 = scmp.ne.s32.totalorder %s103, %s106
    %p115 = scmp.eq.s32.totalorder %s16, 1
    %p116 = por %p114, %p115
    %p117 = scmp.ne.s32.totalorder %s106, %s107
    %p118 = scmp.eq.s32.totalorder %s16, 0
    %p119 = por %p117, %p118
    %p120 = scmp.ne.s32.totalorder %s106, %s107
    %p121 = scmp.eq.s32.totalorder %s17, 1
    %p122 = por %p120, %p121
    %p124 = scmp.ne.s32.totalorder %s107, %s123
    %p125 = scmp.eq.s32.totalorder %s17, 0
    %p126 = por %p124, %p125
    %s127 = ssub.s32 %s18, %s30
    %p128 = scmp.eq.s32.totalorder %s127, 0
    %s130 = sadd.s32 %s129, 1
    %s131 = scalar_select %p128, %s129, %s130
    %p134 = pneg %p128
    %p135 = scmp.eq.s32.totalorder %s11, 1
    %p136 = por %p134, %p135
    %p137 = scmp.ne.s32.totalorder %s129, %s132
    %p138 = scmp.eq.s32.totalorder %s11, 0
    %p139 = por %p137, %p138
    %p140 = scmp.ne.s32.totalorder %s129, %s132
    %p141 = scmp.eq.s32.totalorder %s16, 1
    %p142 = por %p140, %p141
    %p143 = scmp.ne.s32.totalorder %s132, %s133
    %p144 = scmp.eq.s32.totalorder %s16, 0
    %p145 = por %p143, %p144
    %p146 = scmp.ne.s32.totalorder %s132, %s133
    %p147 = scmp.eq.s32.totalorder %s17, 1
    %p148 = por %p146, %p147
    %p150 = scmp.ne.s32.totalorder %s133, %s149
    %p151 = scmp.eq.s32.totalorder %s17, 0
    %p152 = por %p150, %p151
    %p153 = scmp.le.s32.totalorder 1, %s11
    %p154 = scmp.lt.s32.totalorder %s11, 3
    %p155 = pnand %p153, %p154
    %p156 = pneg %p155
    // Predicated region
    $region9: #{pointnet_feat_forward.2} parent=5 // pred_check
      _
    $region10: #{pointnet_feat_forward.2} parent=5 // pred_check_branch
      %158 = sbr.rel (%p155) target = $region12
    $region11: #{pointnet_feat_forward.2} parent=5 // pred_region
      %s159 = ssub.s32 %s11, 1
      // Predicated region
      $region13: #{pointnet_feat_forward.2} parent=11 // pred_check
        %p160 = pneg %p72
      $region14: #{pointnet_feat_forward.2} parent=11 // pred_check_branch
        %162 = sbr.rel (%p160) target = $region16
      $region15: #{pointnet_feat_forward.2} parent=11 // pred_region
        _
      $region16: #{pointnet_feat_forward.2} parent=11 // pred_fallthru
        _
      // Predicated region
      $region17: #{pointnet_feat_forward.2} parent=11 // pred_check
        %p163 = pneg %p93
      $region18: #{pointnet_feat_forward.2} parent=11 // pred_check_branch
        %165 = sbr.rel (%p163) target = $region20
      $region19: #{pointnet_feat_forward.2} parent=11 // pred_region
        _
      $region20: #{pointnet_feat_forward.2} parent=11 // pred_fallthru
        _
    $region12: #{pointnet_feat_forward.2} parent=5 // pred_fallthru
      _
    %p166 = scmp.lt.s32.totalorder %s11, 2
    // Predicated region
    $region21: #{pointnet_feat_forward.2} parent=5 // pred_check
      %p167 = pneg %p166
    $region22: #{pointnet_feat_forward.2} parent=5 // pred_check_branch
      %169 = sbr.rel (%p167) target = $region24
    $region23: #{pointnet_feat_forward.2} parent=5 // pred_region
      // Predicated region
      $region25: #{pointnet_feat_forward.2} parent=23 // pred_check
        %p170 = pneg %p45
      $region26: #{pointnet_feat_forward.2} parent=23 // pred_check_branch
        %172 = sbr.rel (%p170) target = $region28
      $region27: #{pointnet_feat_forward.2} parent=23 // pred_region
        %p173 = scmp.lt.s32.totalorder %s18, 1
        %s174 = scalar_select %p173, %s18, 1
        %p175 = scmp.lt.s32.totalorder %s19, 0
        %s176 = scalar_select %p175, %s19, 0
        %s177 = sadd.s32 %s176, %s174
        %s178 = smul.addr %s177, 4
        %s179 = scalar_lea.vmem %s0, %s178
      $region28: #{pointnet_feat_forward.2} parent=23 // pred_fallthru
        _
    $region24: #{pointnet_feat_forward.2} parent=5 // pred_fallthru
      _
    %p180 = scmp.le.s32.totalorder 1, %s11
    %p181 = scmp.lt.s32.totalorder %s11, 3
    %p182 = pnand %p180, %p181
    %p183 = pneg %p182
    // Predicated region
    $region29: #{pointnet_feat_forward.2} parent=5 // pred_check
      _
    $region30: #{pointnet_feat_forward.2} parent=5 // pred_check_branch
      %185 = sbr.rel (%p182) target = $region32
    $region31: #{pointnet_feat_forward.2} parent=5 // pred_region
      %s186 = ssub.s32 %s11, 1
      %p187 = scmp.lt.s32.totalorder %s20, 1
      %s188 = scalar_select %p187, %s20, 1
      %p189 = scmp.lt.s32.totalorder %s21, 0
      %s190 = scalar_select %p189, %s21, 0
      %s191 = sadd.s32 %s190, %s188
      %s192 = smul.addr %s191, 4
      %s193 = scalar_lea.vmem %s0, %s192
      %p194 = pneg %p51
      %p195 = pneg %p48
      %p196 = pneg %p72
      %p197 = pneg %p69
      %p198 = pneg %p93
      %p199 = pneg %p90
      %p200 = pneg %p119
      %p201 = pneg %p116
      %p202 = scmp.lt.s32.totalorder %s20, 1
      %s203 = scalar_select %p202, %s20, 1
      %s204 = smul.addr %s203, 8
      %s205 = smul.addr %s204, 8
      %s206 = scalar_lea.vmem %s3, %s205
      %p207 = pneg %p145
      %p208 = pneg %p142
      %p209 = scmp.lt.s32.totalorder %s20, 1
      %s210 = scalar_select %p209, %s20, 1
      %s211 = smul.addr %s210, 8
      %s212 = smul.addr %s211, 8
      %s213 = scalar_lea.vmem %s4, %s212
      %p214 = scmp.lt.s32.totalorder %s20, 1
      %s215 = scalar_select %p214, %s20, 1
      %p216 = scmp.lt.s32.totalorder %s21, 0
      %s217 = scalar_select %p216, %s21, 0
      %s218 = sadd.s32 %s217, %s215
      %s219 = smul.addr %s218, 4
      %s220 = scalar_lea.vmem %s0, %s219
      %p221 = scmp.lt.s32.totalorder %s20, 1
      %s222 = scalar_select %p221, %s20, 1
      %s223 = smul.addr %s222, 8
      %s224 = smul.addr %s223, 8
      %s225 = scalar_lea.vmem %s3, %s224
      %p226 = scmp.lt.s32.totalorder %s20, 1
      %s227 = scalar_select %p226, %s20, 1
      %s228 = smul.addr %s227, 8
      %s229 = smul.addr %s228, 8
      %s230 = scalar_lea.vmem %s4, %s229
      %p232 = scmp.eq.s32.totalorder %s21, 0
      // Predicated region
      $region33: #{pointnet_feat_forward.2} parent=31 // pred_check
        %p233 = pneg %p232
      $region34: #{pointnet_feat_forward.2} parent=31 // pred_check_branch
        %235 = sbr.rel (%p233) target = $region36
      $region35: #{pointnet_feat_forward.2} parent=31 // pred_region
        %vm236 = vcmask 7168
        %237 = vst.msk [vmem:[%s225] sm:$0xff] %vm236, 0.0
        %238 = vst.msk [vmem:[%s225 + $0x8] sm:$0xff] %vm236, 0.0
        %239 = vst.msk [vmem:[%s225 + $0x10] sm:$0xff] %vm236, 0.0
        %240 = vst.msk [vmem:[%s225 + $0x18] sm:$0xff] %vm236, 0.0
        %241 = vst.msk [vmem:[%s225 + $0x20] sm:$0xff] %vm236, 0.0
        %242 = vst.msk [vmem:[%s225 + $0x28] sm:$0xff] %vm236, 0.0
        %243 = vst.msk [vmem:[%s225 + $0x30] sm:$0xff] %vm236, 0.0
        %244 = vst.msk [vmem:[%s225 + $0x38] sm:$0xff] %vm236, 0.0
        %vm245 = vcmask 523264
        %246 = vst.msk [vmem:[%s230] sm:$0xff] %vm245, 0.0
        %247 = vst.msk [vmem:[%s230 + $0x8] sm:$0xff] %vm245, 0.0
        %248 = vst.msk [vmem:[%s230 + $0x10] sm:$0xff] %vm245, 0.0
        %249 = vst.msk [vmem:[%s230 + $0x18] sm:$0xff] %vm245, 0.0
        %250 = vst.msk [vmem:[%s230 + $0x20] sm:$0xff] %vm245, 0.0
        %251 = vst.msk [vmem:[%s230 + $0x28] sm:$0xff] %vm245, 0.0
        %252 = vst.msk [vmem:[%s230 + $0x30] sm:$0xff] %vm245, 0.0
        %253 = vst.msk [vmem:[%s230 + $0x38] sm:$0xff] %vm245, 0.0
      $region36: #{pointnet_feat_forward.2} parent=31 // pred_fallthru
        _
      %v254 = vld [vmem:[%s220] sm:$0x7]
      %v255 = vld [vmem:[%s1] sm:$0xff]
      %v256 = vld [vmem:[%s1 + $0x8] sm:$0xff]
      %v257 = vld [vmem:[%s1 + $0x10] sm:$0xff]
      %v258 = vld [vmem:[%s1 + $0x18] sm:$0xff]
      %v259 = vld [vmem:[%s1 + $0x20] sm:$0xff]
      %v260 = vld [vmem:[%s1 + $0x28] sm:$0xff]
      %v261 = vld [vmem:[%s1 + $0x30] sm:$0xff]
      %v262 = vld [vmem:[%s1 + $0x38] sm:$0xff]
      %264 = vset.pattern.permute.xlu0 0
      %265 = vperm.xlu0 %264, %v255
      %v266 = vpop.permute.xlu0 %265
      %269 = vset.pattern.permute.xlu0 0
      %270 = vperm.xlu0 %269, %v256
      %v271 = vpop.permute.xlu0 %270
      %274 = vset.pattern.permute.xlu0 0
      %275 = vperm.xlu0 %274, %v257
      %v276 = vpop.permute.xlu0 %275
      %279 = vset.pattern.permute.xlu0 0
      %280 = vperm.xlu0 %279, %v258
      %v281 = vpop.permute.xlu0 %280
      %284 = vset.pattern.permute.xlu0 0
      %285 = vperm.xlu0 %284, %v259
      %v286 = vpop.permute.xlu0 %285
      %289 = vset.pattern.permute.xlu0 0
      %290 = vperm.xlu0 %289, %v260
      %v291 = vpop.permute.xlu0 %290
      %294 = vset.pattern.permute.xlu0 0
      %295 = vperm.xlu0 %294, %v261
      %v296 = vpop.permute.xlu0 %295
      %299 = vset.pattern.permute.xlu0 0
      %300 = vperm.xlu0 %299, %v262
      %v301 = vpop.permute.xlu0 %300
      %v303 = vlaneseq
      %v304 = vshrl.u32 %v303, 7
      %v305 = vsub.s32 0, %v304
      %v306 = vrot.slane %v254, %v305
      %v307 = vmul.f32 %v266, %v306
      %v308 = vmul.f32 %v271, %v306
      %v309 = vmul.f32 %v276, %v306
      %v310 = vmul.f32 %v281, %v306
      %v311 = vmul.f32 %v286, %v306
      %v312 = vmul.f32 %v291, %v306
      %v313 = vmul.f32 %v296, %v306
      %v314 = vmul.f32 %v301, %v306
      %315 = vset.pattern.permute.xlu0 1
      %316 = vperm.xlu0 %315, %v255
      %v317 = vpop.permute.xlu0 %316
      %319 = vset.pattern.permute.xlu0 1
      %320 = vperm.xlu0 %319, %v256
      %v321 = vpop.permute.xlu0 %320
      %323 = vset.pattern.permute.xlu0 1
      %324 = vperm.xlu0 %323, %v257
      %v325 = vpop.permute.xlu0 %324
      %327 = vset.pattern.permute.xlu0 1
      %328 = vperm.xlu0 %327, %v258
      %v329 = vpop.permute.xlu0 %328
      %331 = vset.pattern.permute.xlu0 1
      %332 = vperm.xlu0 %331, %v259
      %v333 = vpop.permute.xlu0 %332
      %335 = vset.pattern.permute.xlu0 1
      %336 = vperm.xlu0 %335, %v260
      %v337 = vpop.permute.xlu0 %336
      %339 = vset.pattern.permute.xlu0 1
      %340 = vperm.xlu0 %339, %v261
      %v341 = vpop.permute.xlu0 %340
      %343 = vset.pattern.permute.xlu0 1
      %344 = vperm.xlu0 %343, %v262
      %v345 = vpop.permute.xlu0 %344
      %v347 = vlaneseq
      %v348 = vshrl.u32 %v347, 7
      %v349 = vsub.s32 1, %v348
      %v350 = vrot.slane %v254, %v349
      %v351 = vmul.f32 %v317, %v350
      %v352 = vmul.f32 %v321, %v350
      %v353 = vmul.f32 %v325, %v350
      %v354 = vmul.f32 %v329, %v350
      %v355 = vmul.f32 %v333, %v350
      %v356 = vmul.f32 %v337, %v350
      %v357 = vmul.f32 %v341, %v350
      %v358 = vmul.f32 %v345, %v350
      %v359 = vadd.f32 %v307, %v351
      %v360 = vadd.f32 %v308, %v352
      %v361 = vadd.f32 %v309, %v353
      %v362 = vadd.f32 %v310, %v354
      %v363 = vadd.f32 %v311, %v355
      %v364 = vadd.f32 %v312, %v356
      %v365 = vadd.f32 %v313, %v357
      %v366 = vadd.f32 %v314, %v358
      %367 = vset.pattern.permute.xlu0 2
      %368 = vperm.xlu0 %367, %v255
      %v369 = vpop.permute.xlu0 %368
      %371 = vset.pattern.permute.xlu0 2
      %372 = vperm.xlu0 %371, %v256
      %v373 = vpop.permute.xlu0 %372
      %375 = vset.pattern.permute.xlu0 2
      %376 = vperm.xlu0 %375, %v257
      %v377 = vpop.permute.xlu0 %376
      %379 = vset.pattern.permute.xlu0 2
      %380 = vperm.xlu0 %379, %v258
      %v381 = vpop.permute.xlu0 %380
      %383 = vset.pattern.permute.xlu0 2
      %384 = vperm.xlu0 %383, %v259
      %v385 = vpop.permute.xlu0 %384
      %387 = vset.pattern.permute.xlu0 2
      %388 = vperm.xlu0 %387, %v260
      %v389 = vpop.permute.xlu0 %388
      %391 = vset.pattern.permute.xlu0 2
      %392 = vperm.xlu0 %391, %v261
      %v393 = vpop.permute.xlu0 %392
      %395 = vset.pattern.permute.xlu0 2
      %396 = vperm.xlu0 %395, %v262
      %v397 = vpop.permute.xlu0 %396
      %v399 = vlaneseq
      %v400 = vshrl.u32 %v399, 7
      %v401 = vsub.s32 2, %v400
      %v402 = vrot.slane %v254, %v401
      %v403 = vmul.f32 %v369, %v402
      %v404 = vmul.f32 %v373, %v402
      %v405 = vmul.f32 %v377, %v402
      %v406 = vmul.f32 %v381, %v402
      %v407 = vmul.f32 %v385, %v402
      %v408 = vmul.f32 %v389, %v402
      %v409 = vmul.f32 %v393, %v402
      %v410 = vmul.f32 %v397, %v402
      %v411 = vadd.f32 %v359, %v403
      %v412 = vadd.f32 %v360, %v404
      %v413 = vadd.f32 %v361, %v405
      %v414 = vadd.f32 %v362, %v406
      %v415 = vadd.f32 %v363, %v407
      %v416 = vadd.f32 %v364, %v408
      %v417 = vadd.f32 %v365, %v409
      %v418 = vadd.f32 %v366, %v410
      %v419 = vld [vmem:[%s2] sm:$0xff]
      %v420 = vld [vmem:[%s2 + $0x8] sm:$0xff]
      %v421 = vld [vmem:[%s2 + $0x10] sm:$0xff]
      %v422 = vld [vmem:[%s2 + $0x18] sm:$0xff]
      %v423 = vld [vmem:[%s2 + $0x20] sm:$0xff]
      %v424 = vld [vmem:[%s2 + $0x28] sm:$0xff]
      %v425 = vld [vmem:[%s2 + $0x30] sm:$0xff]
      %v426 = vld [vmem:[%s2 + $0x38] sm:$0xff]
      %428 = vset.pattern.permute.xlu0 0
      %429 = vperm.xlu0 %428, %v419
      %v430 = vpop.permute.xlu0 %429
      %433 = vset.pattern.permute.xlu0 0
      %434 = vperm.xlu0 %433, %v420
      %v435 = vpop.permute.xlu0 %434
      %438 = vset.pattern.permute.xlu0 0
      %439 = vperm.xlu0 %438, %v421
      %v440 = vpop.permute.xlu0 %439
      %443 = vset.pattern.permute.xlu0 0
      %444 = vperm.xlu0 %443, %v422
      %v445 = vpop.permute.xlu0 %444
      %448 = vset.pattern.permute.xlu0 0
      %449 = vperm.xlu0 %448, %v423
      %v450 = vpop.permute.xlu0 %449
      %453 = vset.pattern.permute.xlu0 0
      %454 = vperm.xlu0 %453, %v424
      %v455 = vpop.permute.xlu0 %454
      %458 = vset.pattern.permute.xlu0 0
      %459 = vperm.xlu0 %458, %v425
      %v460 = vpop.permute.xlu0 %459
      %463 = vset.pattern.permute.xlu0 0
      %464 = vperm.xlu0 %463, %v426
      %v465 = vpop.permute.xlu0 %464
      %v467 = vadd.f32 %v411, %v430
      %v468 = vadd.f32 %v412, %v435
      %v469 = vadd.f32 %v413, %v440
      %v470 = vadd.f32 %v414, %v445
      %v471 = vadd.f32 %v415, %v450
      %v472 = vadd.f32 %v416, %v455
      %v473 = vadd.f32 %v417, %v460
      %v474 = vadd.f32 %v418, %v465
      %v475 = vmax.f32 %v467, 0.0
      %v476 = vmax.f32 %v468, 0.0
      %v477 = vmax.f32 %v469, 0.0
      %v478 = vmax.f32 %v470, 0.0
      %v479 = vmax.f32 %v471, 0.0
      %v480 = vmax.f32 %v472, 0.0
      %v481 = vmax.f32 %v473, 0.0
      %v482 = vmax.f32 %v474, 0.0
      %v483 = vpack.c.bf16 %v476, %v475
      %v484 = vpack.c.bf16 %v478, %v477
      %v485 = vpack.c.bf16 %v480, %v479
      %v486 = vpack.c.bf16 %v482, %v481
      %v487 = vld [vmem:[%s225] sm:$0xff]
      %v488 = vld [vmem:[%s225 + $0x8] sm:$0xff]
      %v489 = vld [vmem:[%s225 + $0x10] sm:$0xff]
      %v490 = vld [vmem:[%s225 + $0x18] sm:$0xff]
      %v491 = vld [vmem:[%s225 + $0x20] sm:$0xff]
      %v492 = vld [vmem:[%s225 + $0x28] sm:$0xff]
      %v493 = vld [vmem:[%s225 + $0x30] sm:$0xff]
      %v494 = vld [vmem:[%s225 + $0x38] sm:$0xff]
      %vm495 = vcmask 130048
      %v496 = vsel %vm495, %v475, 0.0
      %497 = vadd.xlane.f32.xlu0 %v496
      %v498 = vpop.xlane.xlu0 %497
      %v499 = vsel %vm495, %v476, 0.0
      %500 = vadd.xlane.f32.xlu0 %v499
      %v501 = vpop.xlane.xlu0 %500
      %v502 = vsel %vm495, %v477, 0.0
      %503 = vadd.xlane.f32.xlu0 %v502
      %v504 = vpop.xlane.xlu0 %503
      %v505 = vsel %vm495, %v478, 0.0
      %506 = vadd.xlane.f32.xlu0 %v505
      %v507 = vpop.xlane.xlu0 %506
      %v508 = vsel %vm495, %v479, 0.0
      %509 = vadd.xlane.f32.xlu0 %v508
      %v510 = vpop.xlane.xlu0 %509
      %v511 = vsel %vm495, %v480, 0.0
      %512 = vadd.xlane.f32.xlu0 %v511
      %v513 = vpop.xlane.xlu0 %512
      %v514 = vsel %vm495, %v481, 0.0
      %515 = vadd.xlane.f32.xlu0 %v514
      %v516 = vpop.xlane.xlu0 %515
      %v517 = vsel %vm495, %v482, 0.0
      %518 = vadd.xlane.f32.xlu0 %v517
      %v519 = vpop.xlane.xlu0 %518
      %v520 = vadd.f32 %v487, %v498
      %v521 = vadd.f32 %v488, %v501
      %v522 = vadd.f32 %v489, %v504
      %v523 = vadd.f32 %v490, %v507
      %v524 = vadd.f32 %v491, %v510
      %v525 = vadd.f32 %v492, %v513
      %v526 = vadd.f32 %v493, %v516
      %v527 = vadd.f32 %v494, %v519
      %vm528 = vcmask 7168
      %529 = vst.msk [vmem:[%s225] sm:$0xff] %vm528, %v520
      %530 = vst.msk [vmem:[%s225 + $0x8] sm:$0xff] %vm528, %v521
      %531 = vst.msk [vmem:[%s225 + $0x10] sm:$0xff] %vm528, %v522
      %532 = vst.msk [vmem:[%s225 + $0x18] sm:$0xff] %vm528, %v523
      %533 = vst.msk [vmem:[%s225 + $0x20] sm:$0xff] %vm528, %v524
      %534 = vst.msk [vmem:[%s225 + $0x28] sm:$0xff] %vm528, %v525
      %535 = vst.msk [vmem:[%s225 + $0x30] sm:$0xff] %vm528, %v526
      %536 = vst.msk [vmem:[%s225 + $0x38] sm:$0xff] %vm528, %v527
      %v537 = vld [vmem:[%s230] sm:$0xff]
      %v538 = vld [vmem:[%s230 + $0x8] sm:$0xff]
      %v539 = vld [vmem:[%s230 + $0x10] sm:$0xff]
      %v540 = vld [vmem:[%s230 + $0x18] sm:$0xff]
      %v541 = vld [vmem:[%s230 + $0x20] sm:$0xff]
      %v542 = vld [vmem:[%s230 + $0x28] sm:$0xff]
      %v543 = vld [vmem:[%s230 + $0x30] sm:$0xff]
      %v544 = vld [vmem:[%s230 + $0x38] sm:$0xff]
      %v546 = vsel %vm495, %v483, 0
      %v549 = vsel %vm495, %v484, 0
      %v552 = vsel %vm495, %v485, 0
      %v555 = vsel %vm495, %v486, 0
      %557 = vmatprep.subr.bf16.mxu0 0
      %558 = vmatpush1.bf16.xpose.msra.mxu0 %v546
      %559 = vmatprep.subr.bf16.mxu0 0
      %560 = vmatpush1.bf16.xpose.msra.mxu0 %v549
      %561 = vmatprep.subr.bf16.mxu0 0
      %562 = vmatpush1.bf16.xpose.msra.mxu0 %v552
      %563 = vmatprep.subr.bf16.mxu0 0
      %564 = vmatpush1.bf16.xpose.msra.mxu0 %v555
      %565 = vmatprep.subr.bf16.mxu0 0
      %566 = vmatpush1.bf16.xpose.msra.mxu0 0
      %567 = vmatprep.subr.bf16.mxu0 0
      %568 = vmatpush1.bf16.xpose.msra.mxu0 0
      %569 = vmatprep.subr.bf16.mxu0 0
      %570 = vmatpush1.bf16.xpose.msra.mxu0 0
      %571 = vmatprep.subr.bf16.mxu0 0
      %572 = vmatpush1.bf16.xpose.msra.mxu0 0
      %573 = vmatprep.subr.bf16.mxu0 0
      %574 = vmatpush1.bf16.xpose.msra.mxu0 0
      %575 = vmatprep.subr.bf16.mxu0 0
      %576 = vmatpush1.bf16.xpose.msra.mxu0 0
      %577 = vmatprep.subr.bf16.mxu0 0
      %578 = vmatpush1.bf16.xpose.msra.mxu0 0
      %579 = vmatprep.subr.bf16.mxu0 0
      %580 = vmatpush1.bf16.xpose.msra.mxu0 0
      %581 = vmatprep.subr.bf16.mxu0 0
      %582 = vmatpush1.bf16.xpose.msra.mxu0 0
      %583 = vmatprep.subr.bf16.mxu0 0
      %584 = vmatpush1.bf16.xpose.msra.mxu0 0
      %585 = vmatprep.subr.bf16.mxu0 0
      %586 = vmatpush1.bf16.xpose.msra.mxu0 0
      %587 = vmatprep.subr.bf16.mxu0 0
      %588 = vmatpush1.bf16.xpose.msra.mxu0 0
      %589 = vmatprep.mubr.bf16.mxu0 0
      %590 = vmatmul.mubr.bf16.gmra.mrb[0].mxu0 %v546
      %v591 = vpop.f32.mrb[0].mxu0
      %v592 = vadd.f32 0.0, %v591
      %v593 = vpop.f32.mrb[0].mxu0
      %v594 = vpop.f32.mrb[0].mxu0
      %v595 = vadd.f32 0.0, %v594
      %v596 = vpop.f32.mrb[0].mxu0
      %597 = vmatprep.mubr.bf16.mxu0 0
      %598 = vmatmul.mubr.bf16.gmra.mrb[0].mxu0 %v549
      %v599 = vpop.f32.mrb[0].mxu0
      %v600 = vadd.f32 0.0, %v599
      %v601 = vpop.f32.mrb[0].mxu0
      %v602 = vpop.f32.mrb[0].mxu0
      %v603 = vadd.f32 0.0, %v602
      %v604 = vpop.f32.mrb[0].mxu0
      %605 = vmatprep.mubr.bf16.mxu0 0
      %606 = vmatmul.mubr.bf16.gmra.mrb[0].mxu0 %v552
      %v607 = vpop.f32.mrb[0].mxu0
      %v608 = vadd.f32 0.0, %v607
      %v609 = vpop.f32.mrb[0].mxu0
      %v610 = vpop.f32.mrb[0].mxu0
      %v611 = vadd.f32 0.0, %v610
      %v612 = vpop.f32.mrb[0].mxu0
      %613 = vmatprep.mubr.bf16.mxu0 0
      %614 = vmatmul.mubr.bf16.gmra.mrb[0].mxu0 %v555
      %v615 = vpop.f32.mrb[0].mxu0
      %v616 = vadd.f32 0.0, %v615
      %v617 = vpop.f32.mrb[0].mxu0
      %v618 = vpop.f32.mrb[0].mxu0
      %v619 = vadd.f32 0.0, %v618
      %v620 = vpop.f32.mrb[0].mxu0
      %621 = vdwg.mxu0
      %v622 = vadd.f32 %v537, %v592
      %v623 = vadd.f32 %v538, %v595
      %v624 = vadd.f32 %v539, %v600
      %v625 = vadd.f32 %v540, %v603
      %v626 = vadd.f32 %v541, %v608
      %v627 = vadd.f32 %v542, %v611
      %v628 = vadd.f32 %v543, %v616
      %v629 = vadd.f32 %v544, %v619
      %vm630 = vcmask 523264
      %631 = vst.msk [vmem:[%s230] sm:$0xff] %vm630, %v622
      %632 = vst.msk [vmem:[%s230 + $0x8] sm:$0xff] %vm630, %v623
      %633 = vst.msk [vmem:[%s230 + $0x10] sm:$0xff] %vm630, %v624
      %634 = vst.msk [vmem:[%s230 + $0x18] sm:$0xff] %vm630, %v625
      %635 = vst.msk [vmem:[%s230 + $0x20] sm:$0xff] %vm630, %v626
      %636 = vst.msk [vmem:[%s230 + $0x28] sm:$0xff] %vm630, %v627
      %637 = vst.msk [vmem:[%s230 + $0x30] sm:$0xff] %vm630, %v628
      %638 = vst.msk [vmem:[%s230 + $0x38] sm:$0xff] %vm630, %v629
      %p639 = scmp.lt.s32.totalorder %s20, 1
      %s640 = scalar_select %p639, %s20, 1
      %s641 = smul.addr %s640, 8
      %s642 = smul.addr %s641, 8
      %s643 = scalar_lea.vmem %s3, %s642
      %p644 = scmp.lt.s32.totalorder %s20, 1
      %s645 = scalar_select %p644, %s20, 1
      %s646 = smul.addr %s645, 8
      %s647 = smul.addr %s646, 8
      %s648 = scalar_lea.vmem %s4, %s647
      // Predicated region
      $region37: #{pointnet_feat_forward.2} parent=31 // pred_check
        %p649 = pneg %p116
      $region38: #{pointnet_feat_forward.2} parent=31 // pred_check_branch
        %651 = sbr.rel (%p649) target = $region40
      $region39: #{pointnet_feat_forward.2} parent=31 // pred_region
        _
      $region40: #{pointnet_feat_forward.2} parent=31 // pred_fallthru
        _
      // Predicated region
      $region41: #{pointnet_feat_forward.2} parent=31 // pred_check
        %p652 = pneg %p142
      $region42: #{pointnet_feat_forward.2} parent=31 // pred_check_branch
        %654 = sbr.rel (%p652) target = $region44
      $region43: #{pointnet_feat_forward.2} parent=31 // pred_region
        _
      $region44: #{pointnet_feat_forward.2} parent=31 // pred_fallthru
        _
    $region32: #{pointnet_feat_forward.2} parent=5 // pred_fallthru
      _
    %p655 = scmp.le.s32.totalorder 2, %s11
    // Predicated region
    $region45: #{pointnet_feat_forward.2} parent=5 // pred_check
      %p656 = pneg %p655
    $region46: #{pointnet_feat_forward.2} parent=5 // pred_check_branch
      %658 = sbr.rel (%p656) target = $region48
    $region47: #{pointnet_feat_forward.2} parent=5 // pred_region
      %s659 = ssub.s32 %s11, 2
      // Predicated region
      $region49: #{pointnet_feat_forward.2} parent=47 // pred_check
        %p660 = pneg %p122
      $region50: #{pointnet_feat_forward.2} parent=47 // pred_check_branch
        %662 = sbr.rel (%p660) target = $region52
      $region51: #{pointnet_feat_forward.2} parent=47 // pred_region
        %p663 = scmp.lt.s32.totalorder %s22, 1
        %s664 = scalar_select %p663, %s22, 1
        %s665 = smul.addr %s664, 8
        %s666 = smul.addr %s665, 8
        %s667 = scalar_lea.vmem %s3, %s666
      $region52: #{pointnet_feat_forward.2} parent=47 // pred_fallthru
        _
      // Predicated region
      $region53: #{pointnet_feat_forward.2} parent=47 // pred_check
        %p668 = pneg %p148
      $region54: #{pointnet_feat_forward.2} parent=47 // pred_check_branch
        %670 = sbr.rel (%p668) target = $region56
      $region55: #{pointnet_feat_forward.2} parent=47 // pred_region
        %p671 = scmp.lt.s32.totalorder %s22, 1
        %s672 = scalar_select %p671, %s22, 1
        %s673 = smul.addr %s672, 8
        %s674 = smul.addr %s673, 8
        %s675 = scalar_lea.vmem %s4, %s674
      $region56: #{pointnet_feat_forward.2} parent=47 // pred_fallthru
        _
    $region48: #{pointnet_feat_forward.2} parent=5 // pred_fallthru
      _
  $region6: #{pointnet_feat_forward.2} parent=0 // loop_footer
    %s15 = sadd.s32 1, %s11
  $region7: #{pointnet_feat_forward.2} parent=0 // loop_footer_branch
    %10 = sbr.rel target = $region3
  $region8: #{pointnet_feat_forward.2} parent=0 // loop_exit
    _

// kernel: pointnet_feat_forward.3
$region0: #{pointnet_feat_forward.3}
  #allocation0 [shape = 'u32[]', space=smem, size = 0x4, offset = 0x4, fixed_abs, tag = 'smem constant byte address 0x4 - core index']
  #allocation1 [shape = 'u32[144,128]{1,0:T(1,128)}', space=vmem, size = 0x12000, scoped, tag = 'internal scratch']
  %s0 = inlined_call_operand.vmem [shape: f32[2,3,16], index: 0, kind: input, shape index: {}]
  %s1 = inlined_call_operand.vmem [shape: f32[64,3], index: 1, kind: input, shape index: {}]
  %s2 = inlined_call_operand.vmem [shape: f32[64,1], index: 2, kind: input, shape index: {}]
  %s3 = inlined_call_operand.vmem [shape: bf16[128,64], index: 3, kind: input, shape index: {}]
  %s4 = inlined_call_operand.vmem [shape: f32[128,1], index: 4, kind: input, shape index: {}]
  %s5 = inlined_call_operand.vmem [shape: bf16[1024,128], index: 5, kind: input, shape index: {}]
  %s6 = inlined_call_operand.vmem [shape: f32[2,128,16], index: 6, kind: output, shape index: {0}]
  %s7 = inlined_call_operand.vmem [shape: f32[2,128,1], index: 7, kind: output, shape index: {1}]
  %s8 = inlined_call_operand.vmem [shape: f32[2,128,128], index: 8, kind: output, shape index: {2}]
  %s9 = inlined_call_operand.vmem [shape: f32[2,1024,1], index: 9, kind: output, shape index: {3}]
  %10 = xla_tuple %s6, %s7, %s8, %s9
  %s11 = sld [smem:[#allocation0]]
  $region85: #{pointnet_feat_forward.3} parent=0
    _
  %s13 = ssub.s32 1, %s11
  %s14 = scalar_select 0, %s13, %s11
  loop: start=0, step=1, limit=4
  $region2: #{pointnet_feat_forward.3} parent=0 // loop_pre_header
    _
  $region3: #{pointnet_feat_forward.3} parent=0 // loop_header
    %s16 = sphi 0, %s20
    %p17 = scmp.ge.s32.totalorder %s16, 4
    %s23 = sphi 0, %s35
    %s24 = sphi 0, %s31
    %s25 = sphi 0, %s23
    %s26 = sphi 0, %s24
    %s27 = sphi 0, %s25
    %s28 = sphi 0, %s26
    %s40 = sphi 0, %s42
    %s43 = sphi 0, %s40
    %s44 = sphi 0, %s43
    %s60 = sphi 0, %s44
    %s64 = sphi 0, %s64
    %s66 = sphi 0, %s64
    %s67 = sphi 0, %s66
    %s81 = sphi 0, %s67
    %s85 = sphi 0, %s85
    %s87 = sphi 0, %s85
    %s88 = sphi 0, %s87
    %s102 = sphi 0, %s88
    %s106 = sphi 0, %s106
    %s108 = sphi 0, %s106
    %s109 = sphi 0, %s108
    %s123 = sphi 0, %s109
    %s127 = sphi 0, %s127
    %s129 = sphi 0, %s127
    %s130 = sphi 0, %s129
    %s144 = sphi 0, %s130
    %s148 = sphi 0, %s148
    %s150 = sphi 0, %s148
    %s151 = sphi 0, %s150
    %s165 = sphi 0, %s151
    %s173 = sphi 0, %s175
    %s176 = sphi 0, %s173
    %s177 = sphi 0, %s176
    %s193 = sphi 0, %s177
    %s199 = sphi 0, %s201
    %s202 = sphi 0, %s199
    %s203 = sphi 0, %s202
    %s219 = sphi 0, %s203
    %s225 = sphi 0, %s227
    %s228 = sphi 0, %s225
    %s229 = sphi 0, %s228
    %s245 = sphi 0, %s229
    %s251 = sphi 0, %s253
    %s254 = sphi 0, %s251
    %s255 = sphi 0, %s254
    %s271 = sphi 0, %s255
  $region4: #{pointnet_feat_forward.3} parent=0 // loop_header_branch
    %19 = sbr.rel (%p17) target = $region8
  $region5: #{pointnet_feat_forward.3} parent=0 // loop_body
    %s21 = ssub.s32 %s16, 1
    %s22 = ssub.s32 %s16, 2
    %s29 = sadd.s32 1, %s24
    %p30 = scmp.ge.s32.totalorder %s29, 1
    %s31 = scalar_select %p30, 0, %s29
    %s32 = sadd.s32 1, %s23
    %s33 = scalar_select %p30, %s32, %s23
    %p34 = scmp.ge.s32.totalorder %s33, 2
    %s35 = scalar_select %p34, 0, %s33
    %s36 = ssub.s32 %s23, %s35
    %s37 = ssub.s32 %s24, %s31
    %s38 = sor.u32 %s36, %s37
    %p39 = scmp.eq.s32.totalorder %s38, 0
    %s41 = sadd.s32 %s40, 1
    %s42 = scalar_select %p39, %s40, %s41
    %p45 = pneg %p39
    %p46 = scmp.eq.s32.totalorder %s16, 1
    %p47 = por %p45, %p46
    %p48 = scmp.ne.s32.totalorder %s40, %s43
    %p49 = scmp.eq.s32.totalorder %s16, 0
    %p50 = por %p48, %p49
    %p51 = scmp.ne.s32.totalorder %s40, %s43
    %p52 = scmp.eq.s32.totalorder %s21, 1
    %p53 = por %p51, %p52
    %p54 = scmp.ne.s32.totalorder %s43, %s44
    %p55 = scmp.eq.s32.totalorder %s21, 0
    %p56 = por %p54, %p55
    %p57 = scmp.ne.s32.totalorder %s43, %s44
    %p58 = scmp.eq.s32.totalorder %s22, 1
    %p59 = por %p57, %p58
    %p61 = scmp.ne.s32.totalorder %s44, %s60
    %p62 = scmp.eq.s32.totalorder %s22, 0
    %p63 = por %p61, %p62
    %s65 = sadd.s32 %s64, 1
    %p68 = scmp.eq.s32.totalorder %s16, 1
    %p69 = scmp.ne.s32.totalorder %s64, %s66
    %p70 = scmp.eq.s32.totalorder %s16, 0
    %p71 = por %p69, %p70
    %p72 = scmp.ne.s32.totalorder %s64, %s66
    %p73 = scmp.eq.s32.totalorder %s21, 1
    %p74 = por %p72, %p73
    %p75 = scmp.ne.s32.totalorder %s66, %s67
    %p76 = scmp.eq.s32.totalorder %s21, 0
    %p77 = por %p75, %p76
    %p78 = scmp.ne.s32.totalorder %s66, %s67
    %p79 = scmp.eq.s32.totalorder %s22, 1
    %p80 = por %p78, %p79
    %p82 = scmp.ne.s32.totalorder %s67, %s81
    %p83 = scmp.eq.s32.totalorder %s22, 0
    %p84 = por %p82, %p83
    %s86 = sadd.s32 %s85, 1
    %p89 = scmp.eq.s32.totalorder %s16, 1
    %p90 = scmp.ne.s32.totalorder %s85, %s87
    %p91 = scmp.eq.s32.totalorder %s16, 0
    %p92 = por %p90, %p91
    %p93 = scmp.ne.s32.totalorder %s85, %s87
    %p94 = scmp.eq.s32.totalorder %s21, 1
    %p95 = por %p93, %p94
    %p96 = scmp.ne.s32.totalorder %s87, %s88
    %p97 = scmp.eq.s32.totalorder %s21, 0
    %p98 = por %p96, %p97
    %p99 = scmp.ne.s32.totalorder %s87, %s88
    %p100 = scmp.eq.s32.totalorder %s22, 1
    %p101 = por %p99, %p100
    %p103 = scmp.ne.s32.totalorder %s88, %s102
    %p104 = scmp.eq.s32.totalorder %s22, 0
    %p105 = por %p103, %p104
    %s107 = sadd.s32 %s106, 1
    %p110 = scmp.eq.s32.totalorder %s16, 1
    %p111 = scmp.ne.s32.totalorder %s106, %s108
    %p112 = scmp.eq.s32.totalorder %s16, 0
    %p113 = por %p111, %p112
    %p114 = scmp.ne.s32.totalorder %s106, %s108
    %p115 = scmp.eq.s32.totalorder %s21, 1
    %p116 = por %p114, %p115
    %p117 = scmp.ne.s32.totalorder %s108, %s109
    %p118 = scmp.eq.s32.totalorder %s21, 0
    %p119 = por %p117, %p118
    %p120 = scmp.ne.s32.totalorder %s108, %s109
    %p121 = scmp.eq.s32.totalorder %s22, 1
    %p122 = por %p120, %p121
    %p124 = scmp.ne.s32.totalorder %s109, %s123
    %p125 = scmp.eq.s32.totalorder %s22, 0
    %p126 = por %p124, %p125
    %s128 = sadd.s32 %s127, 1
    %p131 = scmp.eq.s32.totalorder %s16, 1
    %p132 = scmp.ne.s32.totalorder %s127, %s129
    %p133 = scmp.eq.s32.totalorder %s16, 0
    %p134 = por %p132, %p133
    %p135 = scmp.ne.s32.totalorder %s127, %s129
    %p136 = scmp.eq.s32.totalorder %s21, 1
    %p137 = por %p135, %p136
    %p138 = scmp.ne.s32.totalorder %s129, %s130
    %p139 = scmp.eq.s32.totalorder %s21, 0
    %p140 = por %p138, %p139
    %p141 = scmp.ne.s32.totalorder %s129, %s130
    %p142 = scmp.eq.s32.totalorder %s22, 1
    %p143 = por %p141, %p142
    %p145 = scmp.ne.s32.totalorder %s130, %s144
    %p146 = scmp.eq.s32.totalorder %s22, 0
    %p147 = por %p145, %p146
    %s149 = sadd.s32 %s148, 1
    %p152 = scmp.eq.s32.totalorder %s16, 1
    %p153 = scmp.ne.s32.totalorder %s148, %s150
    %p154 = scmp.eq.s32.totalorder %s16, 0
    %p155 = por %p153, %p154
    %p156 = scmp.ne.s32.totalorder %s148, %s150
    %p157 = scmp.eq.s32.totalorder %s21, 1
    %p158 = por %p156, %p157
    %p159 = scmp.ne.s32.totalorder %s150, %s151
    %p160 = scmp.eq.s32.totalorder %s21, 0
    %p161 = por %p159, %p160
    %p162 = scmp.ne.s32.totalorder %s150, %s151
    %p163 = scmp.eq.s32.totalorder %s22, 1
    %p164 = por %p162, %p163
    %p166 = scmp.ne.s32.totalorder %s151, %s165
    %p167 = scmp.eq.s32.totalorder %s22, 0
    %p168 = por %p166, %p167
    %s169 = ssub.s32 %s23, %s35
    %s170 = ssub.s32 %s24, %s31
    %s171 = sor.u32 %s169, %s170
    %p172 = scmp.eq.s32.totalorder %s171, 0
    %s174 = sadd.s32 %s173, 1
    %s175 = scalar_select %p172, %s173, %s174
    %p178 = pneg %p172
    %p179 = scmp.eq.s32.totalorder %s16, 1
    %p180 = por %p178, %p179
    %p181 = scmp.ne.s32.totalorder %s173, %s176
    %p182 = scmp.eq.s32.totalorder %s16, 0
    %p183 = por %p181, %p182
    %p184 = scmp.ne.s32.totalorder %s173, %s176
    %p185 = scmp.eq.s32.totalorder %s21, 1
    %p186 = por %p184, %p185
    %p187 = scmp.ne.s32.totalorder %s176, %s177
    %p188 = scmp.eq.s32.totalorder %s21, 0
    %p189 = por %p187, %p188
    %p190 = scmp.ne.s32.totalorder %s176, %s177
    %p191 = scmp.eq.s32.totalorder %s22, 1
    %p192 = por %p190, %p191
    %p194 = scmp.ne.s32.totalorder %s177, %s193
    %p195 = scmp.eq.s32.totalorder %s22, 0
    %p196 = por %p194, %p195
    %s197 = ssub.s32 %s23, %s35
    %p198 = scmp.eq.s32.totalorder %s197, 0
    %s200 = sadd.s32 %s199, 1
    %s201 = scalar_select %p198, %s199, %s200
    %p204 = pneg %p198
    %p205 = scmp.eq.s32.totalorder %s16, 1
    %p206 = por %p204, %p205
    %p207 = scmp.ne.s32.totalorder %s199, %s202
    %p208 = scmp.eq.s32.totalorder %s16, 0
    %p209 = por %p207, %p208
    %p210 = scmp.ne.s32.totalorder %s199, %s202
    %p211 = scmp.eq.s32.totalorder %s21, 1
    %p212 = por %p210, %p211
    %p213 = scmp.ne.s32.totalorder %s202, %s203
    %p214 = scmp.eq.s32.totalorder %s21, 0
    %p215 = por %p213, %p214
    %p216 = scmp.ne.s32.totalorder %s202, %s203
    %p217 = scmp.eq.s32.totalorder %s22, 1
    %p218 = por %p216, %p217
    %p220 = scmp.ne.s32.totalorder %s203, %s219
    %p221 = scmp.eq.s32.totalorder %s22, 0
    %p222 = por %p220, %p221
    %s223 = ssub.s32 %s23, %s35
    %p224 = scmp.eq.s32.totalorder %s223, 0
    %s226 = sadd.s32 %s225, 1
    %s227 = scalar_select %p224, %s225, %s226
    %p230 = pneg %p224
    %p231 = scmp.eq.s32.totalorder %s16, 1
    %p232 = por %p230, %p231
    %p233 = scmp.ne.s32.totalorder %s225, %s228
    %p234 = scmp.eq.s32.totalorder %s16, 0
    %p235 = por %p233, %p234
    %p236 = scmp.ne.s32.totalorder %s225, %s228
    %p237 = scmp.eq.s32.totalorder %s21, 1
    %p238 = por %p236, %p237
    %p239 = scmp.ne.s32.totalorder %s228, %s229
    %p240 = scmp.eq.s32.totalorder %s21, 0
    %p241 = por %p239, %p240
    %p242 = scmp.ne.s32.totalorder %s228, %s229
    %p243 = scmp.eq.s32.totalorder %s22, 1
    %p244 = por %p242, %p243
    %p246 = scmp.ne.s32.totalorder %s229, %s245
    %p247 = scmp.eq.s32.totalorder %s22, 0
    %p248 = por %p246, %p247
    %s249 = ssub.s32 %s23, %s35
    %p250 = scmp.eq.s32.totalorder %s249, 0
    %s252 = sadd.s32 %s251, 1
    %s253 = scalar_select %p250, %s251, %s252
    %p256 = pneg %p250
    %p257 = scmp.eq.s32.totalorder %s16, 1
    %p258 = por %p256, %p257
    %p259 = scmp.ne.s32.totalorder %s251, %s254
    %p260 = scmp.eq.s32.totalorder %s16, 0
    %p261 = por %p259, %p260
    %p262 = scmp.ne.s32.totalorder %s251, %s254
    %p263 = scmp.eq.s32.totalorder %s21, 1
    %p264 = por %p262, %p263
    %p265 = scmp.ne.s32.totalorder %s254, %s255
    %p266 = scmp.eq.s32.totalorder %s21, 0
    %p267 = por %p265, %p266
    %p268 = scmp.ne.s32.totalorder %s254, %s255
    %p269 = scmp.eq.s32.totalorder %s22, 1
    %p270 = por %p268, %p269
    %p272 = scmp.ne.s32.totalorder %s255, %s271
    %p273 = scmp.eq.s32.totalorder %s22, 0
    %p274 = por %p272, %p273
    %p275 = scmp.le.s32.totalorder 1, %s16
    %p276 = scmp.lt.s32.totalorder %s16, 3
    %p277 = pnand %p275, %p276
    %p278 = pneg %p277
    // Predicated region
    $region9: #{pointnet_feat_forward.3} parent=5 // pred_check
      _
    $region10: #{pointnet_feat_forward.3} parent=5 // pred_check_branch
      %280 = sbr.rel (%p277) target = $region12
    $region11: #{pointnet_feat_forward.3} parent=5 // pred_region
      %s281 = ssub.s32 %s16, 1
      // Predicated region
      $region13: #{pointnet_feat_forward.3} parent=11 // pred_check
        %p282 = pneg %p77
      $region14: #{pointnet_feat_forward.3} parent=11 // pred_check_branch
        %284 = sbr.rel (%p282) target = $region16
      $region15: #{pointnet_feat_forward.3} parent=11 // pred_region
        _
      $region16: #{pointnet_feat_forward.3} parent=11 // pred_fallthru
        _
      // Predicated region
      $region17: #{pointnet_feat_forward.3} parent=11 // pred_check
        %p285 = pneg %p98
      $region18: #{pointnet_feat_forward.3} parent=11 // pred_check_branch
        %287 = sbr.rel (%p285) target = $region20
      $region19: #{pointnet_feat_forward.3} parent=11 // pred_region
        _
      $region20: #{pointnet_feat_forward.3} parent=11 // pred_fallthru
        _
      // Predicated region
      $region21: #{pointnet_feat_forward.3} parent=11 // pred_check
        %p288 = pneg %p119
      $region22: #{pointnet_feat_forward.3} parent=11 // pred_check_branch
        %290 = sbr.rel (%p288) target = $region24
      $region23: #{pointnet_feat_forward.3} parent=11 // pred_region
        _
      $region24: #{pointnet_feat_forward.3} parent=11 // pred_fallthru
        _
      // Predicated region
      $region25: #{pointnet_feat_forward.3} parent=11 // pred_check
        %p291 = pneg %p140
      $region26: #{pointnet_feat_forward.3} parent=11 // pred_check_branch
        %293 = sbr.rel (%p291) target = $region28
      $region27: #{pointnet_feat_forward.3} parent=11 // pred_region
        _
      $region28: #{pointnet_feat_forward.3} parent=11 // pred_fallthru
        _
      // Predicated region
      $region29: #{pointnet_feat_forward.3} parent=11 // pred_check
        %p294 = pneg %p161
      $region30: #{pointnet_feat_forward.3} parent=11 // pred_check_branch
        %296 = sbr.rel (%p294) target = $region32
      $region31: #{pointnet_feat_forward.3} parent=11 // pred_region
        _
      $region32: #{pointnet_feat_forward.3} parent=11 // pred_fallthru
        _
    $region12: #{pointnet_feat_forward.3} parent=5 // pred_fallthru
      _
    %p297 = scmp.lt.s32.totalorder %s16, 2
    // Predicated region
    $region33: #{pointnet_feat_forward.3} parent=5 // pred_check
      %p298 = pneg %p297
    $region34: #{pointnet_feat_forward.3} parent=5 // pred_check_branch
      %300 = sbr.rel (%p298) target = $region36
    $region35: #{pointnet_feat_forward.3} parent=5 // pred_region
      // Predicated region
      $region37: #{pointnet_feat_forward.3} parent=35 // pred_check
        %p301 = pneg %p50
      $region38: #{pointnet_feat_forward.3} parent=35 // pred_check_branch
        %303 = sbr.rel (%p301) target = $region40
      $region39: #{pointnet_feat_forward.3} parent=35 // pred_region
        %p304 = scmp.lt.s32.totalorder %s23, 1
        %s305 = scalar_select %p304, %s23, 1
        %p306 = scmp.lt.s32.totalorder %s24, 0
        %s307 = scalar_select %p306, %s24, 0
        %s308 = sadd.s32 %s307, %s305
        %s309 = smul.addr %s308, 4
        %s310 = scalar_lea.vmem %s0, %s309
      $region40: #{pointnet_feat_forward.3} parent=35 // pred_fallthru
        _
    $region36: #{pointnet_feat_forward.3} parent=5 // pred_fallthru
      _
    %p311 = scmp.le.s32.totalorder 1, %s16
    %p312 = scmp.lt.s32.totalorder %s16, 3
    %p313 = pnand %p311, %p312
    %p314 = pneg %p313
    // Predicated region
    $region41: #{pointnet_feat_forward.3} parent=5 // pred_check
      _
    $region42: #{pointnet_feat_forward.3} parent=5 // pred_check_branch
      %316 = sbr.rel (%p313) target = $region44
    $region43: #{pointnet_feat_forward.3} parent=5 // pred_region
      %s317 = ssub.s32 %s16, 1
      %p318 = scmp.lt.s32.totalorder %s25, 1
      %s319 = scalar_select %p318, %s25, 1
      %p320 = scmp.lt.s32.totalorder %s26, 0
      %s321 = scalar_select %p320, %s26, 0
      %s322 = sadd.s32 %s321, %s319
      %s323 = smul.addr %s322, 4
      %s324 = scalar_lea.vmem %s0, %s323
      %p325 = pneg %p56
      %p326 = pneg %p53
      %p327 = pneg %p77
      %p328 = pneg %p74
      %p329 = pneg %p98
      %p330 = pneg %p95
      %p331 = pneg %p119
      %p332 = pneg %p116
      %p333 = pneg %p140
      %p334 = pneg %p137
      %p335 = pneg %p161
      %p336 = pneg %p158
      %p337 = pneg %p189
      %p338 = pneg %p186
      %p339 = scmp.lt.s32.totalorder %s25, 1
      %s340 = scalar_select %p339, %s25, 1
      %p341 = scmp.lt.s32.totalorder %s26, 0
      %s342 = scalar_select %p341, %s26, 0
      %s343 = smul.addr %s340, 16
      %s344 = sadd.s32 %s342, %s343
      %s345 = smul.addr %s344, 8
      %s346 = scalar_lea.vmem %s6, %s345
      %p347 = pneg %p215
      %p348 = pneg %p212
      %p349 = scmp.lt.s32.totalorder %s25, 1
      %s350 = scalar_select %p349, %s25, 1
      %s351 = smul.addr %s350, 16
      %s352 = smul.addr %s351, 8
      %s353 = scalar_lea.vmem %s7, %s352
      %p354 = pneg %p241
      %p355 = pneg %p238
      %p356 = scmp.lt.s32.totalorder %s25, 1
      %s357 = scalar_select %p356, %s25, 1
      %s358 = smul.addr %s357, 16
      %s359 = smul.addr %s358, 8
      %s360 = scalar_lea.vmem %s8, %s359
      %p361 = pneg %p267
      %p362 = pneg %p264
      %p363 = scmp.lt.s32.totalorder %s25, 1
      %s364 = scalar_select %p363, %s25, 1
      %s365 = smul.addr %s364, 128
      %s366 = smul.addr %s365, 8
      %s367 = scalar_lea.vmem %s9, %s366
      %p368 = scmp.lt.s32.totalorder %s25, 1
      %s369 = scalar_select %p368, %s25, 1
      %p370 = scmp.lt.s32.totalorder %s26, 0
      %s371 = scalar_select %p370, %s26, 0
      %s372 = sadd.s32 %s371, %s369
      %s373 = smul.addr %s372, 4
      %s374 = scalar_lea.vmem %s0, %s373
      %p375 = scmp.lt.s32.totalorder %s25, 1
      %s376 = scalar_select %p375, %s25, 1
      %p377 = scmp.lt.s32.totalorder %s26, 0
      %s378 = scalar_select %p377, %s26, 0
      %s379 = smul.addr %s376, 16
      %s380 = sadd.s32 %s378, %s379
      %s381 = smul.addr %s380, 8
      %s382 = scalar_lea.vmem %s6, %s381
      %p383 = scmp.lt.s32.totalorder %s25, 1
      %s384 = scalar_select %p383, %s25, 1
      %s385 = smul.addr %s384, 16
      %s386 = smul.addr %s385, 8
      %s387 = scalar_lea.vmem %s7, %s386
      %p388 = scmp.lt.s32.totalorder %s25, 1
      %s389 = scalar_select %p388, %s25, 1
      %s390 = smul.addr %s389, 16
      %s391 = smul.addr %s390, 8
      %s392 = scalar_lea.vmem %s8, %s391
      %p393 = scmp.lt.s32.totalorder %s25, 1
      %s394 = scalar_select %p393, %s25, 1
      %s395 = smul.addr %s394, 128
      %s396 = smul.addr %s395, 8
      %s397 = scalar_lea.vmem %s9, %s396
      %p399 = scmp.eq.s32.totalorder %s26, 0
      // Predicated region
      $region45: #{pointnet_feat_forward.3} parent=43 // pred_check
        %p400 = pneg %p399
      $region46: #{pointnet_feat_forward.3} parent=43 // pred_check_branch
        %402 = sbr.rel (%p400) target = $region48
      $region47: #{pointnet_feat_forward.3} parent=43 // pred_region
        %vm403 = vcmask 7168
        %404 = vst.msk [vmem:[%s387] sm:$0xff] %vm403, 0.0
        %405 = vst.msk [vmem:[%s387 + $0x8] sm:$0xff] %vm403, 0.0
        %406 = vst.msk [vmem:[%s387 + $0x10] sm:$0xff] %vm403, 0.0
        %407 = vst.msk [vmem:[%s387 + $0x18] sm:$0xff] %vm403, 0.0
        %408 = vst.msk [vmem:[%s387 + $0x20] sm:$0xff] %vm403, 0.0
        %409 = vst.msk [vmem:[%s387 + $0x28] sm:$0xff] %vm403, 0.0
        %410 = vst.msk [vmem:[%s387 + $0x30] sm:$0xff] %vm403, 0.0
        %411 = vst.msk [vmem:[%s387 + $0x38] sm:$0xff] %vm403, 0.0
        %412 = vst.msk [vmem:[%s387 + $0x40] sm:$0xff] %vm403, 0.0
        %413 = vst.msk [vmem:[%s387 + $0x48] sm:$0xff] %vm403, 0.0
        %414 = vst.msk [vmem:[%s387 + $0x50] sm:$0xff] %vm403, 0.0
        %415 = vst.msk [vmem:[%s387 + $0x58] sm:$0xff] %vm403, 0.0
        %416 = vst.msk [vmem:[%s387 + $0x60] sm:$0xff] %vm403, 0.0
        %417 = vst.msk [vmem:[%s387 + $0x68] sm:$0xff] %vm403, 0.0
        %418 = vst.msk [vmem:[%s387 + $0x70] sm:$0xff] %vm403, 0.0
        %419 = vst.msk [vmem:[%s387 + $0x78] sm:$0xff] %vm403, 0.0
        %420 = vst [vmem:[%s392] sm:$0xff] 0.0
        %421 = vst [vmem:[%s392 + $0x8] sm:$0xff] 0.0
        %422 = vst [vmem:[%s392 + $0x10] sm:$0xff] 0.0
        %423 = vst [vmem:[%s392 + $0x18] sm:$0xff] 0.0
        %424 = vst [vmem:[%s392 + $0x20] sm:$0xff] 0.0
        %425 = vst [vmem:[%s392 + $0x28] sm:$0xff] 0.0
        %426 = vst [vmem:[%s392 + $0x30] sm:$0xff] 0.0
        %427 = vst [vmem:[%s392 + $0x38] sm:$0xff] 0.0
        %428 = vst [vmem:[%s392 + $0x40] sm:$0xff] 0.0
        %429 = vst [vmem:[%s392 + $0x48] sm:$0xff] 0.0
        %430 = vst [vmem:[%s392 + $0x50] sm:$0xff] 0.0
        %431 = vst [vmem:[%s392 + $0x58] sm:$0xff] 0.0
        %432 = vst [vmem:[%s392 + $0x60] sm:$0xff] 0.0
        %433 = vst [vmem:[%s392 + $0x68] sm:$0xff] 0.0
        %434 = vst [vmem:[%s392 + $0x70] sm:$0xff] 0.0
        %435 = vst [vmem:[%s392 + $0x78] sm:$0xff] 0.0
        %436 = vst.msk [vmem:[%s397] sm:$0xff] %vm403, -inf
        %437 = vst.msk [vmem:[%s397 + $0x8] sm:$0xff] %vm403, -inf
        %438 = vst.msk [vmem:[%s397 + $0x10] sm:$0xff] %vm403, -inf
        %439 = vst.msk [vmem:[%s397 + $0x18] sm:$0xff] %vm403, -inf
        %440 = vst.msk [vmem:[%s397 + $0x20] sm:$0xff] %vm403, -inf
        %441 = vst.msk [vmem:[%s397 + $0x28] sm:$0xff] %vm403, -inf
        %442 = vst.msk [vmem:[%s397 + $0x30] sm:$0xff] %vm403, -inf
        %443 = vst.msk [vmem:[%s397 + $0x38] sm:$0xff] %vm403, -inf
        %444 = vst.msk [vmem:[%s397 + $0x40] sm:$0xff] %vm403, -inf
        %445 = vst.msk [vmem:[%s397 + $0x48] sm:$0xff] %vm403, -inf
        %446 = vst.msk [vmem:[%s397 + $0x50] sm:$0xff] %vm403, -inf
        %447 = vst.msk [vmem:[%s397 + $0x58] sm:$0xff] %vm403, -inf
        %448 = vst.msk [vmem:[%s397 + $0x60] sm:$0xff] %vm403, -inf
        %449 = vst.msk [vmem:[%s397 + $0x68] sm:$0xff] %vm403, -inf
        %450 = vst.msk [vmem:[%s397 + $0x70] sm:$0xff] %vm403, -inf
        %451 = vst.msk [vmem:[%s397 + $0x78] sm:$0xff] %vm403, -inf
        %452 = vst.msk [vmem:[%s397 + $0x80] sm:$0xff] %vm403, -inf
        %453 = vst.msk [vmem:[%s397 + $0x88] sm:$0xff] %vm403, -inf
        %454 = vst.msk [vmem:[%s397 + $0x90] sm:$0xff] %vm403, -inf
        %455 = vst.msk [vmem:[%s397 + $0x98] sm:$0xff] %vm403, -inf
        %456 = vst.msk [vmem:[%s397 + $0xa0] sm:$0xff] %vm403, -inf
        %457 = vst.msk [vmem:[%s397 + $0xa8] sm:$0xff] %vm403, -inf
        %458 = vst.msk [vmem:[%s397 + $0xb0] sm:$0xff] %vm403, -inf
        %459 = vst.msk [vmem:[%s397 + $0xb8] sm:$0xff] %vm403, -inf
        %460 = vst.msk [vmem:[%s397 + $0xc0] sm:$0xff] %vm403, -inf
        %461 = vst.msk [vmem:[%s397 + $0xc8] sm:$0xff] %vm403, -inf
        %462 = vst.msk [vmem:[%s397 + $0xd0] sm:$0xff] %vm403, -inf
        %463 = vst.msk [vmem:[%s397 + $0xd8] sm:$0xff] %vm403, -inf
        %464 = vst.msk [vmem:[%s397 + $0xe0] sm:$0xff] %vm403, -inf
        %465 = vst.msk [vmem:[%s397 + $0xe8] sm:$0xff] %vm403, -inf
        %466 = vst.msk [vmem:[%s397 + $0xf0] sm:$0xff] %vm403, -inf
        %467 = vst.msk [vmem:[%s397 + $0xf8] sm:$0xff] %vm403, -inf
        %468 = vst.msk [vmem:[%s397 + $0x100] sm:$0xff] %vm403, -inf
        %469 = vst.msk [vmem:[%s397 + $0x108] sm:$0xff] %vm403, -inf
        %470 = vst.msk [vmem:[%s397 + $0x110] sm:$0xff] %vm403, -inf
        %471 = vst.msk [vmem:[%s397 + $0x118] sm:$0xff] %vm403, -inf
        %472 = vst.msk [vmem:[%s397 + $0x120] sm:$0xff] %vm403, -inf
        %473 = vst.msk [vmem:[%s397 + $0x128] sm:$0xff] %vm403, -inf
        %474 = vst.msk [vmem:[%s397 + $0x130] sm:$0xff] %vm403, -inf
        %475 = vst.msk [vmem:[%s397 + $0x138] sm:$0xff] %vm403, -inf
        %476 = vst.msk [vmem:[%s397 + $0x140] sm:$0xff] %vm403, -inf
        %477 = vst.msk [vmem:[%s397 + $0x148] sm:$0xff] %vm403, -inf
        %478 = vst.msk [vmem:[%s397 + $0x150] sm:$0xff] %vm403, -inf
        %479 = vst.msk [vmem:[%s397 + $0x158] sm:$0xff] %vm403, -inf
        %480 = vst.msk [vmem:[%s397 + $0x160] sm:$0xff] %vm403, -inf
        %481 = vst.msk [vmem:[%s397 + $0x168] sm:$0xff] %vm403, -inf
        %482 = vst.msk [vmem:[%s397 + $0x170] sm:$0xff] %vm403, -inf
        %483 = vst.msk [vmem:[%s397 + $0x178] sm:$0xff] %vm403, -inf
        %484 = vst.msk [vmem:[%s397 + $0x180] sm:$0xff] %vm403, -inf
        %485 = vst.msk [vmem:[%s397 + $0x188] sm:$0xff] %vm403, -inf
        %486 = vst.msk [vmem:[%s397 + $0x190] sm:$0xff] %vm403, -inf
        %487 = vst.msk [vmem:[%s397 + $0x198] sm:$0xff] %vm403, -inf
        %488 = vst.msk [vmem:[%s397 + $0x1a0] sm:$0xff] %vm403, -inf
        %489 = vst.msk [vmem:[%s397 + $0x1a8] sm:$0xff] %vm403, -inf
        %490 = vst.msk [vmem:[%s397 + $0x1b0] sm:$0xff] %vm403, -inf
        %491 = vst.msk [vmem:[%s397 + $0x1b8] sm:$0xff] %vm403, -inf
        %492 = vst.msk [vmem:[%s397 + $0x1c0] sm:$0xff] %vm403, -inf
        %493 = vst.msk [vmem:[%s397 + $0x1c8] sm:$0xff] %vm403, -inf
        %494 = vst.msk [vmem:[%s397 + $0x1d0] sm:$0xff] %vm403, -inf
        %495 = vst.msk [vmem:[%s397 + $0x1d8] sm:$0xff] %vm403, -inf
        %496 = vst.msk [vmem:[%s397 + $0x1e0] sm:$0xff] %vm403, -inf
        %497 = vst.msk [vmem:[%s397 + $0x1e8] sm:$0xff] %vm403, -inf
        %498 = vst.msk [vmem:[%s397 + $0x1f0] sm:$0xff] %vm403, -inf
        %499 = vst.msk [vmem:[%s397 + $0x1f8] sm:$0xff] %vm403, -inf
        %500 = vst.msk [vmem:[%s397 + $0x200] sm:$0xff] %vm403, -inf
        %501 = vst.msk [vmem:[%s397 + $0x208] sm:$0xff] %vm403, -inf
        %502 = vst.msk [vmem:[%s397 + $0x210] sm:$0xff] %vm403, -inf
        %503 = vst.msk [vmem:[%s397 + $0x218] sm:$0xff] %vm403, -inf
        %504 = vst.msk [vmem:[%s397 + $0x220] sm:$0xff] %vm403, -inf
        %505 = vst.msk [vmem:[%s397 + $0x228] sm:$0xff] %vm403, -inf
        %506 = vst.msk [vmem:[%s397 + $0x230] sm:$0xff] %vm403, -inf
        %507 = vst.msk [vmem:[%s397 + $0x238] sm:$0xff] %vm403, -inf
        %508 = vst.msk [vmem:[%s397 + $0x240] sm:$0xff] %vm403, -inf
        %509 = vst.msk [vmem:[%s397 + $0x248] sm:$0xff] %vm403, -inf
        %510 = vst.msk [vmem:[%s397 + $0x250] sm:$0xff] %vm403, -inf
        %511 = vst.msk [vmem:[%s397 + $0x258] sm:$0xff] %vm403, -inf
        %512 = vst.msk [vmem:[%s397 + $0x260] sm:$0xff] %vm403, -inf
        %513 = vst.msk [vmem:[%s397 + $0x268] sm:$0xff] %vm403, -inf
        %514 = vst.msk [vmem:[%s397 + $0x270] sm:$0xff] %vm403, -inf
        %515 = vst.msk [vmem:[%s397 + $0x278] sm:$0xff] %vm403, -inf
        %516 = vst.msk [vmem:[%s397 + $0x280] sm:$0xff] %vm403, -inf
        %517 = vst.msk [vmem:[%s397 + $0x288] sm:$0xff] %vm403, -inf
        %518 = vst.msk [vmem:[%s397 + $0x290] sm:$0xff] %vm403, -inf
        %519 = vst.msk [vmem:[%s397 + $0x298] sm:$0xff] %vm403, -inf
        %520 = vst.msk [vmem:[%s397 + $0x2a0] sm:$0xff] %vm403, -inf
        %521 = vst.msk [vmem:[%s397 + $0x2a8] sm:$0xff] %vm403, -inf
        %522 = vst.msk [vmem:[%s397 + $0x2b0] sm:$0xff] %vm403, -inf
        %523 = vst.msk [vmem:[%s397 + $0x2b8] sm:$0xff] %vm403, -inf
        %524 = vst.msk [vmem:[%s397 + $0x2c0] sm:$0xff] %vm403, -inf
        %525 = vst.msk [vmem:[%s397 + $0x2c8] sm:$0xff] %vm403, -inf
        %526 = vst.msk [vmem:[%s397 + $0x2d0] sm:$0xff] %vm403, -inf
        %527 = vst.msk [vmem:[%s397 + $0x2d8] sm:$0xff] %vm403, -inf
        %528 = vst.msk [vmem:[%s397 + $0x2e0] sm:$0xff] %vm403, -inf
        %529 = vst.msk [vmem:[%s397 + $0x2e8] sm:$0xff] %vm403, -inf
        %530 = vst.msk [vmem:[%s397 + $0x2f0] sm:$0xff] %vm403, -inf
        %531 = vst.msk [vmem:[%s397 + $0x2f8] sm:$0xff] %vm403, -inf
        %532 = vst.msk [vmem:[%s397 + $0x300] sm:$0xff] %vm403, -inf
        %533 = vst.msk [vmem:[%s397 + $0x308] sm:$0xff] %vm403, -inf
        %534 = vst.msk [vmem:[%s397 + $0x310] sm:$0xff] %vm403, -inf
        %535 = vst.msk [vmem:[%s397 + $0x318] sm:$0xff] %vm403, -inf
        %536 = vst.msk [vmem:[%s397 + $0x320] sm:$0xff] %vm403, -inf
        %537 = vst.msk [vmem:[%s397 + $0x328] sm:$0xff] %vm403, -inf
        %538 = vst.msk [vmem:[%s397 + $0x330] sm:$0xff] %vm403, -inf
        %539 = vst.msk [vmem:[%s397 + $0x338] sm:$0xff] %vm403, -inf
        %540 = vst.msk [vmem:[%s397 + $0x340] sm:$0xff] %vm403, -inf
        %541 = vst.msk [vmem:[%s397 + $0x348] sm:$0xff] %vm403, -inf
        %542 = vst.msk [vmem:[%s397 + $0x350] sm:$0xff] %vm403, -inf
        %543 = vst.msk [vmem:[%s397 + $0x358] sm:$0xff] %vm403, -inf
        %544 = vst.msk [vmem:[%s397 + $0x360] sm:$0xff] %vm403, -inf
        %545 = vst.msk [vmem:[%s397 + $0x368] sm:$0xff] %vm403, -inf
        %546 = vst.msk [vmem:[%s397 + $0x370] sm:$0xff] %vm403, -inf
        %547 = vst.msk [vmem:[%s397 + $0x378] sm:$0xff] %vm403, -inf
        %548 = vst.msk [vmem:[%s397 + $0x380] sm:$0xff] %vm403, -inf
        %549 = vst.msk [vmem:[%s397 + $0x388] sm:$0xff] %vm403, -inf
        %550 = vst.msk [vmem:[%s397 + $0x390] sm:$0xff] %vm403, -inf
        %551 = vst.msk [vmem:[%s397 + $0x398] sm:$0xff] %vm403, -inf
        %552 = vst.msk [vmem:[%s397 + $0x3a0] sm:$0xff] %vm403, -inf
        %553 = vst.msk [vmem:[%s397 + $0x3a8] sm:$0xff] %vm403, -inf
        %554 = vst.msk [vmem:[%s397 + $0x3b0] sm:$0xff] %vm403, -inf
        %555 = vst.msk [vmem:[%s397 + $0x3b8] sm:$0xff] %vm403, -inf
        %556 = vst.msk [vmem:[%s397 + $0x3c0] sm:$0xff] %vm403, -inf
        %557 = vst.msk [vmem:[%s397 + $0x3c8] sm:$0xff] %vm403, -inf
        %558 = vst.msk [vmem:[%s397 + $0x3d0] sm:$0xff] %vm403, -inf
        %559 = vst.msk [vmem:[%s397 + $0x3d8] sm:$0xff] %vm403, -inf
        %560 = vst.msk [vmem:[%s397 + $0x3e0] sm:$0xff] %vm403, -inf
        %561 = vst.msk [vmem:[%s397 + $0x3e8] sm:$0xff] %vm403, -inf
        %562 = vst.msk [vmem:[%s397 + $0x3f0] sm:$0xff] %vm403, -inf
        %563 = vst.msk [vmem:[%s397 + $0x3f8] sm:$0xff] %vm403, -inf
      $region48: #{pointnet_feat_forward.3} parent=43 // pred_fallthru
        _
      %v564 = vld [vmem:[%s374] sm:$0x7]
      %v565 = vld [vmem:[%s1] sm:$0xff]
      %v566 = vld [vmem:[%s1 + $0x8] sm:$0xff]
      %v567 = vld [vmem:[%s1 + $0x10] sm:$0xff]
      %v568 = vld [vmem:[%s1 + $0x18] sm:$0xff]
      %v569 = vld [vmem:[%s1 + $0x20] sm:$0xff]
      %v570 = vld [vmem:[%s1 + $0x28] sm:$0xff]
      %v571 = vld [vmem:[%s1 + $0x30] sm:$0xff]
      %v572 = vld [vmem:[%s1 + $0x38] sm:$0xff]
      %574 = vset.pattern.permute.xlu0 0
      %575 = vperm.xlu0 %574, %v565
      %v576 = vpop.permute.xlu0 %575
      %579 = vset.pattern.permute.xlu0 0
      %580 = vperm.xlu0 %579, %v566
      %v581 = vpop.permute.xlu0 %580
      %584 = vset.pattern.permute.xlu0 0
      %585 = vperm.xlu0 %584, %v567
      %v586 = vpop.permute.xlu0 %585
      %589 = vset.pattern.permute.xlu0 0
      %590 = vperm.xlu0 %589, %v568
      %v591 = vpop.permute.xlu0 %590
      %594 = vset.pattern.permute.xlu0 0
      %595 = vperm.xlu0 %594, %v569
      %v596 = vpop.permute.xlu0 %595
      %599 = vset.pattern.permute.xlu0 0
      %600 = vperm.xlu0 %599, %v570
      %v601 = vpop.permute.xlu0 %600
      %604 = vset.pattern.permute.xlu0 0
      %605 = vperm.xlu0 %604, %v571
      %v606 = vpop.permute.xlu0 %605
      %609 = vset.pattern.permute.xlu0 0
      %610 = vperm.xlu0 %609, %v572
      %v611 = vpop.permute.xlu0 %610
      %v613 = vlaneseq
      %v614 = vshrl.u32 %v613, 7
      %v615 = vsub.s32 0, %v614
      %v616 = vrot.slane %v564, %v615
      %v617 = vmul.f32 %v576, %v616
      %v618 = vmul.f32 %v581, %v616
      %v619 = vmul.f32 %v586, %v616
      %v620 = vmul.f32 %v591, %v616
      %v621 = vmul.f32 %v596, %v616
      %v622 = vmul.f32 %v601, %v616
      %v623 = vmul.f32 %v606, %v616
      %v624 = vmul.f32 %v611, %v616
      %625 = vset.pattern.permute.xlu0 1
      %626 = vperm.xlu0 %625, %v565
      %v627 = vpop.permute.xlu0 %626
      %629 = vset.pattern.permute.xlu0 1
      %630 = vperm.xlu0 %629, %v566
      %v631 = vpop.permute.xlu0 %630
      %633 = vset.pattern.permute.xlu0 1
      %634 = vperm.xlu0 %633, %v567
      %v635 = vpop.permute.xlu0 %634
      %637 = vset.pattern.permute.xlu0 1
      %638 = vperm.xlu0 %637, %v568
      %v639 = vpop.permute.xlu0 %638
      %641 = vset.pattern.permute.xlu0 1
      %642 = vperm.xlu0 %641, %v569
      %v643 = vpop.permute.xlu0 %642
      %645 = vset.pattern.permute.xlu0 1
      %646 = vperm.xlu0 %645, %v570
      %v647 = vpop.permute.xlu0 %646
      %649 = vset.pattern.permute.xlu0 1
      %650 = vperm.xlu0 %649, %v571
      %v651 = vpop.permute.xlu0 %650
      %653 = vset.pattern.permute.xlu0 1
      %654 = vperm.xlu0 %653, %v572
      %v655 = vpop.permute.xlu0 %654
      %v657 = vlaneseq
      %v658 = vshrl.u32 %v657, 7
      %v659 = vsub.s32 1, %v658
      %v660 = vrot.slane %v564, %v659
      %v661 = vmul.f32 %v627, %v660
      %v662 = vmul.f32 %v631, %v660
      %v663 = vmul.f32 %v635, %v660
      %v664 = vmul.f32 %v639, %v660
      %v665 = vmul.f32 %v643, %v660
      %v666 = vmul.f32 %v647, %v660
      %v667 = vmul.f32 %v651, %v660
      %v668 = vmul.f32 %v655, %v660
      %v669 = vadd.f32 %v617, %v661
      %v670 = vadd.f32 %v618, %v662
      %v671 = vadd.f32 %v619, %v663
      %v672 = vadd.f32 %v620, %v664
      %v673 = vadd.f32 %v621, %v665
      %v674 = vadd.f32 %v622, %v666
      %v675 = vadd.f32 %v623, %v667
      %v676 = vadd.f32 %v624, %v668
      %677 = vset.pattern.permute.xlu0 2
      %678 = vperm.xlu0 %677, %v565
      %v679 = vpop.permute.xlu0 %678
      %681 = vset.pattern.permute.xlu0 2
      %682 = vperm.xlu0 %681, %v566
      %v683 = vpop.permute.xlu0 %682
      %685 = vset.pattern.permute.xlu0 2
      %686 = vperm.xlu0 %685, %v567
      %v687 = vpop.permute.xlu0 %686
      %689 = vset.pattern.permute.xlu0 2
      %690 = vperm.xlu0 %689, %v568
      %v691 = vpop.permute.xlu0 %690
      %693 = vset.pattern.permute.xlu0 2
      %694 = vperm.xlu0 %693, %v569
      %v695 = vpop.permute.xlu0 %694
      %697 = vset.pattern.permute.xlu0 2
      %698 = vperm.xlu0 %697, %v570
      %v699 = vpop.permute.xlu0 %698
      %701 = vset.pattern.permute.xlu0 2
      %702 = vperm.xlu0 %701, %v571
      %v703 = vpop.permute.xlu0 %702
      %705 = vset.pattern.permute.xlu0 2
      %706 = vperm.xlu0 %705, %v572
      %v707 = vpop.permute.xlu0 %706
      %v709 = vlaneseq
      %v710 = vshrl.u32 %v709, 7
      %v711 = vsub.s32 2, %v710
      %v712 = vrot.slane %v564, %v711
      %v713 = vmul.f32 %v679, %v712
      %v714 = vmul.f32 %v683, %v712
      %v715 = vmul.f32 %v687, %v712
      %v716 = vmul.f32 %v691, %v712
      %v717 = vmul.f32 %v695, %v712
      %v718 = vmul.f32 %v699, %v712
      %v719 = vmul.f32 %v703, %v712
      %v720 = vmul.f32 %v707, %v712
      %v721 = vadd.f32 %v669, %v713
      %v722 = vadd.f32 %v670, %v714
      %v723 = vadd.f32 %v671, %v715
      %v724 = vadd.f32 %v672, %v716
      %v725 = vadd.f32 %v673, %v717
      %v726 = vadd.f32 %v674, %v718
      %v727 = vadd.f32 %v675, %v719
      %v728 = vadd.f32 %v676, %v720
      %v729 = vld [vmem:[%s2] sm:$0xff]
      %v730 = vld [vmem:[%s2 + $0x8] sm:$0xff]
      %v731 = vld [vmem:[%s2 + $0x10] sm:$0xff]
      %v732 = vld [vmem:[%s2 + $0x18] sm:$0xff]
      %v733 = vld [vmem:[%s2 + $0x20] sm:$0xff]
      %v734 = vld [vmem:[%s2 + $0x28] sm:$0xff]
      %v735 = vld [vmem:[%s2 + $0x30] sm:$0xff]
      %v736 = vld [vmem:[%s2 + $0x38] sm:$0xff]
      %738 = vset.pattern.permute.xlu0 0
      %739 = vperm.xlu0 %738, %v729
      %v740 = vpop.permute.xlu0 %739
      %743 = vset.pattern.permute.xlu0 0
      %744 = vperm.xlu0 %743, %v730
      %v745 = vpop.permute.xlu0 %744
      %748 = vset.pattern.permute.xlu0 0
      %749 = vperm.xlu0 %748, %v731
      %v750 = vpop.permute.xlu0 %749
      %753 = vset.pattern.permute.xlu0 0
      %754 = vperm.xlu0 %753, %v732
      %v755 = vpop.permute.xlu0 %754
      %758 = vset.pattern.permute.xlu0 0
      %759 = vperm.xlu0 %758, %v733
      %v760 = vpop.permute.xlu0 %759
      %763 = vset.pattern.permute.xlu0 0
      %764 = vperm.xlu0 %763, %v734
      %v765 = vpop.permute.xlu0 %764
      %768 = vset.pattern.permute.xlu0 0
      %769 = vperm.xlu0 %768, %v735
      %v770 = vpop.permute.xlu0 %769
      %773 = vset.pattern.permute.xlu0 0
      %774 = vperm.xlu0 %773, %v736
      %v775 = vpop.permute.xlu0 %774
      %v777 = vadd.f32 %v721, %v740
      %v778 = vadd.f32 %v722, %v745
      %v779 = vadd.f32 %v723, %v750
      %v780 = vadd.f32 %v724, %v755
      %v781 = vadd.f32 %v725, %v760
      %v782 = vadd.f32 %v726, %v765
      %v783 = vadd.f32 %v727, %v770
      %v784 = vadd.f32 %v728, %v775
      %v785 = vmax.f32 %v777, 0.0
      %v786 = vmax.f32 %v778, 0.0
      %v787 = vmax.f32 %v779, 0.0
      %v788 = vmax.f32 %v780, 0.0
      %v789 = vmax.f32 %v781, 0.0
      %v790 = vmax.f32 %v782, 0.0
      %v791 = vmax.f32 %v783, 0.0
      %v792 = vmax.f32 %v784, 0.0
      %v793 = vld [vmem:[%s3] sm:$0xf]
      %v794 = vld [vmem:[%s3 + $0x4] sm:$0xf]
      %v795 = vld [vmem:[%s3 + $0x8] sm:$0xf]
      %v796 = vld [vmem:[%s3 + $0xc] sm:$0xf]
      %v797 = vld [vmem:[%s3 + $0x10] sm:$0xf]
      %v798 = vld [vmem:[%s3 + $0x14] sm:$0xf]
      %v799 = vld [vmem:[%s3 + $0x18] sm:$0xf]
      %v800 = vld [vmem:[%s3 + $0x1c] sm:$0xf]
      %v801 = vld [vmem:[%s3 + $0x20] sm:$0xf]
      %v802 = vld [vmem:[%s3 + $0x24] sm:$0xf]
      %v803 = vld [vmem:[%s3 + $0x28] sm:$0xf]
      %v804 = vld [vmem:[%s3 + $0x2c] sm:$0xf]
      %v805 = vld [vmem:[%s3 + $0x30] sm:$0xf]
      %v806 = vld [vmem:[%s3 + $0x34] sm:$0xf]
      %v807 = vld [vmem:[%s3 + $0x38] sm:$0xf]
      %v808 = vld [vmem:[%s3 + $0x3c] sm:$0xf]
      %v809 = vpack.c.bf16 %v786, %v785
      %v810 = vpack.c.bf16 %v788, %v787
      %v811 = vpack.c.bf16 %v790, %v789
      %v812 = vpack.c.bf16 %v792, %v791
      %v813 = vld [vmem:[%s4] sm:$0xff]
      %v814 = vld [vmem:[%s4 + $0x8] sm:$0xff]
      %v815 = vld [vmem:[%s4 + $0x10] sm:$0xff]
      %v816 = vld [vmem:[%s4 + $0x18] sm:$0xff]
      %v817 = vld [vmem:[%s4 + $0x20] sm:$0xff]
      %v818 = vld [vmem:[%s4 + $0x28] sm:$0xff]
      %v819 = vld [vmem:[%s4 + $0x30] sm:$0xff]
      %v820 = vld [vmem:[%s4 + $0x38] sm:$0xff]
      %v821 = vld [vmem:[%s4 + $0x40] sm:$0xff]
      %v822 = vld [vmem:[%s4 + $0x48] sm:$0xff]
      %v823 = vld [vmem:[%s4 + $0x50] sm:$0xff]
      %v824 = vld [vmem:[%s4 + $0x58] sm:$0xff]
      %v825 = vld [vmem:[%s4 + $0x60] sm:$0xff]
      %v826 = vld [vmem:[%s4 + $0x68] sm:$0xff]
      %v827 = vld [vmem:[%s4 + $0x70] sm:$0xff]
      %v828 = vld [vmem:[%s4 + $0x78] sm:$0xff]
      %830 = vset.pattern.permute.xlu0 0
      %831 = vperm.xlu0 %830, %v813
      %v832 = vpop.permute.xlu0 %831
      %835 = vset.pattern.permute.xlu0 0
      %836 = vperm.xlu0 %835, %v814
      %v837 = vpop.permute.xlu0 %836
      %840 = vset.pattern.permute.xlu0 0
      %841 = vperm.xlu0 %840, %v815
      %v842 = vpop.permute.xlu0 %841
      %845 = vset.pattern.permute.xlu0 0
      %846 = vperm.xlu0 %845, %v816
      %v847 = vpop.permute.xlu0 %846
      %850 = vset.pattern.permute.xlu0 0
      %851 = vperm.xlu0 %850, %v817
      %v852 = vpop.permute.xlu0 %851
      %855 = vset.pattern.permute.xlu0 0
      %856 = vperm.xlu0 %855, %v818
      %v857 = vpop.permute.xlu0 %856
      %860 = vset.pattern.permute.xlu0 0
      %861 = vperm.xlu0 %860, %v819
      %v862 = vpop.permute.xlu0 %861
      %865 = vset.pattern.permute.xlu0 0
      %866 = vperm.xlu0 %865, %v820
      %v867 = vpop.permute.xlu0 %866
      %870 = vset.pattern.permute.xlu0 0
      %871 = vperm.xlu0 %870, %v821
      %v872 = vpop.permute.xlu0 %871
      %875 = vset.pattern.permute.xlu0 0
      %876 = vperm.xlu0 %875, %v822
      %v877 = vpop.permute.xlu0 %876
      %880 = vset.pattern.permute.xlu0 0
      %881 = vperm.xlu0 %880, %v823
      %v882 = vpop.permute.xlu0 %881
      %885 = vset.pattern.permute.xlu0 0
      %886 = vperm.xlu0 %885, %v824
      %v887 = vpop.permute.xlu0 %886
      %890 = vset.pattern.permute.xlu0 0
      %891 = vperm.xlu0 %890, %v825
      %v892 = vpop.permute.xlu0 %891
      %895 = vset.pattern.permute.xlu0 0
      %896 = vperm.xlu0 %895, %v826
      %v897 = vpop.permute.xlu0 %896
      %900 = vset.pattern.permute.xlu0 0
      %901 = vperm.xlu0 %900, %v827
      %v902 = vpop.permute.xlu0 %901
      %905 = vset.pattern.permute.xlu0 0
      %906 = vperm.xlu0 %905, %v828
      %v907 = vpop.permute.xlu0 %906
      %v925 = vunpack.c.l.b16 %v793
      %v926 = vunpack.c.l.b16 %v794
      %v927 = vunpack.c.l.b16 %v795
      %v928 = vunpack.c.l.b16 %v796
      %v929 = vunpack.c.l.b16 %v797
      %v930 = vunpack.c.l.b16 %v798
      %v931 = vunpack.c.l.b16 %v799
      %v932 = vunpack.c.l.b16 %v800
      %v933 = vunpack.c.l.b16 %v801
      %v934 = vunpack.c.l.b16 %v802
      %v935 = vunpack.c.l.b16 %v803
      %v936 = vunpack.c.l.b16 %v804
      %v937 = vunpack.c.l.b16 %v805
      %v938 = vunpack.c.l.b16 %v806
      %v939 = vunpack.c.l.b16 %v807
      %v940 = vunpack.c.l.b16 %v808
      %v941 = vpack.c.b16 %v926, %v925
      %v942 = vpack.c.b16 %v928, %v927
      %v943 = vpack.c.b16 %v930, %v929
      %v944 = vpack.c.b16 %v932, %v931
      %v945 = vpack.c.b16 %v934, %v933
      %v946 = vpack.c.b16 %v936, %v935
      %v947 = vpack.c.b16 %v938, %v937
      %v948 = vpack.c.b16 %v940, %v939
      %vm949 = vcmask 523264
      %v951 = vsel %vm949, %v941, 0
      %v954 = vsel %vm949, %v942, 0
      %v957 = vsel %vm949, %v943, 0
      %v960 = vsel %vm949, %v944, 0
      %v963 = vsel %vm949, %v945, 0
      %v966 = vsel %vm949, %v946, 0
      %v969 = vsel %vm949, %v947, 0
      %v972 = vsel %vm949, %v948, 0
      %974 = vmatprep.subr.bf16.mxu0 0
      %975 = vmatpush1.bf16.msra.mxu0 %v809
      %976 = vmatprep.subr.bf16.mxu0 0
      %977 = vmatpush1.bf16.msra.mxu0 %v810
      %978 = vmatprep.subr.bf16.mxu0 0
      %979 = vmatpush1.bf16.msra.mxu0 %v811
      %980 = vmatprep.subr.bf16.mxu0 0
      %981 = vmatpush1.bf16.msra.mxu0 %v812
      %982 = vmatprep.subr.bf16.mxu0 0
      %983 = vmatpush1.bf16.msra.mxu0 0
      %984 = vmatprep.subr.bf16.mxu0 0
      %985 = vmatpush1.bf16.msra.mxu0 0
      %986 = vmatprep.subr.bf16.mxu0 0
      %987 = vmatpush1.bf16.msra.mxu0 0
      %988 = vmatprep.subr.bf16.mxu0 0
      %989 = vmatpush1.bf16.msra.mxu0 0
      %990 = vmatprep.subr.bf16.mxu0 0
      %991 = vmatpush1.bf16.msra.mxu0 0
      %992 = vmatprep.subr.bf16.mxu0 0
      %993 = vmatpush1.bf16.msra.mxu0 0
      %994 = vmatprep.subr.bf16.mxu0 0
      %995 = vmatpush1.bf16.msra.mxu0 0
      %996 = vmatprep.subr.bf16.mxu0 0
      %997 = vmatpush1.bf16.msra.mxu0 0
      %998 = vmatprep.subr.bf16.mxu0 0
      %999 = vmatpush1.bf16.msra.mxu0 0
      %1000 = vmatprep.subr.bf16.mxu0 0
      %1001 = vmatpush1.bf16.msra.mxu0 0
      %1002 = vmatprep.subr.bf16.mxu0 0
      %1003 = vmatpush1.bf16.msra.mxu0 0
      %1004 = vmatprep.subr.bf16.mxu0 0
      %1005 = vmatpush1.bf16.msra.mxu0 0
      %1006 = vmatprep.mubr.bf16.mxu0 0
      %1007 = vmatmul.mubr.bf16.gmra.mrb[0].mxu0 %v951
      %v1008 = vpop.f32.mrb[0].mxu0
      %v1009 = vadd.f32 %v832, %v1008
      %v1010 = vpop.f32.mrb[0].mxu0
      %v1011 = vpop.f32.mrb[0].mxu0
      %v1012 = vadd.f32 %v837, %v1011
      %v1013 = vpop.f32.mrb[0].mxu0
      %1014 = vmatprep.mubr.bf16.mxu0 0
      %1015 = vmatmul.mubr.bf16.gmra.mrb[0].mxu0 %v954
      %v1016 = vpop.f32.mrb[0].mxu0
      %v1017 = vadd.f32 %v842, %v1016
      %v1018 = vpop.f32.mrb[0].mxu0
      %v1019 = vpop.f32.mrb[0].mxu0
      %v1020 = vadd.f32 %v847, %v1019
      %v1021 = vpop.f32.mrb[0].mxu0
      %1022 = vmatprep.mubr.bf16.mxu0 0
      %1023 = vmatmul.mubr.bf16.gmra.mrb[0].mxu0 %v957
      %v1024 = vpop.f32.mrb[0].mxu0
      %v1025 = vadd.f32 %v852, %v1024
      %v1026 = vpop.f32.mrb[0].mxu0
      %v1027 = vpop.f32.mrb[0].mxu0
      %v1028 = vadd.f32 %v857, %v1027
      %v1029 = vpop.f32.mrb[0].mxu0
      %1030 = vmatprep.mubr.bf16.mxu0 0
      %1031 = vmatmul.mubr.bf16.gmra.mrb[0].mxu0 %v960
      %v1032 = vpop.f32.mrb[0].mxu0
      %v1033 = vadd.f32 %v862, %v1032
      %v1034 = vpop.f32.mrb[0].mxu0
      %v1035 = vpop.f32.mrb[0].mxu0
      %v1036 = vadd.f32 %v867, %v1035
      %v1037 = vpop.f32.mrb[0].mxu0
      %1038 = vmatprep.mubr.bf16.mxu0 0
      %1039 = vmatmul.mubr.bf16.gmra.mrb[0].mxu0 %v963
      %v1040 = vpop.f32.mrb[0].mxu0
      %v1041 = vadd.f32 %v872, %v1040
      %v1042 = vpop.f32.mrb[0].mxu0
      %v1043 = vpop.f32.mrb[0].mxu0
      %v1044 = vadd.f32 %v877, %v1043
      %v1045 = vpop.f32.mrb[0].mxu0
      %1046 = vmatprep.mubr.bf16.mxu0 0
      %1047 = vmatmul.mubr.bf16.gmra.mrb[0].mxu0 %v966
      %v1048 = vpop.f32.mrb[0].mxu0
      %v1049 = vadd.f32 %v882, %v1048
      %v1050 = vpop.f32.mrb[0].mxu0
      %v1051 = vpop.f32.mrb[0].mxu0
      %v1052 = vadd.f32 %v887, %v1051
      %v1053 = vpop.f32.mrb[0].mxu0
      %1054 = vmatprep.mubr.bf16.mxu0 0
      %1055 = vmatmul.mubr.bf16.gmra.mrb[0].mxu0 %v969
      %v1056 = vpop.f32.mrb[0].mxu0
      %v1057 = vadd.f32 %v892, %v1056
      %v1058 = vpop.f32.mrb[0].mxu0
      %v1059 = vpop.f32.mrb[0].mxu0
      %v1060 = vadd.f32 %v897, %v1059
      %v1061 = vpop.f32.mrb[0].mxu0
      %1062 = vmatprep.mubr.bf16.mxu0 0
      %1063 = vmatmul.mubr.bf16.gmra.mrb[0].mxu0 %v972
      %v1064 = vpop.f32.mrb[0].mxu0
      %v1065 = vadd.f32 %v902, %v1064
      %v1066 = vpop.f32.mrb[0].mxu0
      %v1067 = vpop.f32.mrb[0].mxu0
      %v1068 = vadd.f32 %v907, %v1067
      %v1069 = vpop.f32.mrb[0].mxu0
      %1070 = vdwg.mxu0
      %v1071 = vmax.f32 %v1009, 0.0
      %v1072 = vmax.f32 %v1012, 0.0
      %v1073 = vmax.f32 %v1017, 0.0
      %v1074 = vmax.f32 %v1020, 0.0
      %v1075 = vmax.f32 %v1025, 0.0
      %v1076 = vmax.f32 %v1028, 0.0
      %v1077 = vmax.f32 %v1033, 0.0
      %v1078 = vmax.f32 %v1036, 0.0
      %v1079 = vmax.f32 %v1041, 0.0
      %v1080 = vmax.f32 %v1044, 0.0
      %v1081 = vmax.f32 %v1049, 0.0
      %v1082 = vmax.f32 %v1052, 0.0
      %v1083 = vmax.f32 %v1057, 0.0
      %v1084 = vmax.f32 %v1060, 0.0
      %v1085 = vmax.f32 %v1065, 0.0
      %v1086 = vmax.f32 %v1068, 0.0
      %vm1087 = vcmask 130048
      %1088 = vst.msk [vmem:[%s382] sm:$0xff] %vm1087, %v1071
      %1089 = vst.msk [vmem:[%s382 + $0x8] sm:$0xff] %vm1087, %v1072
      %1090 = vst.msk [vmem:[%s382 + $0x10] sm:$0xff] %vm1087, %v1073
      %1091 = vst.msk [vmem:[%s382 + $0x18] sm:$0xff] %vm1087, %v1074
      %1092 = vst.msk [vmem:[%s382 + $0x20] sm:$0xff] %vm1087, %v1075
      %1093 = vst.msk [vmem:[%s382 + $0x28] sm:$0xff] %vm1087, %v1076
      %1094 = vst.msk [vmem:[%s382 + $0x30] sm:$0xff] %vm1087, %v1077
      %1095 = vst.msk [vmem:[%s382 + $0x38] sm:$0xff] %vm1087, %v1078
      %1096 = vst.msk [vmem:[%s382 + $0x40] sm:$0xff] %vm1087, %v1079
      %1097 = vst.msk [vmem:[%s382 + $0x48] sm:$0xff] %vm1087, %v1080
      %1098 = vst.msk [vmem:[%s382 + $0x50] sm:$0xff] %vm1087, %v1081
      %1099 = vst.msk [vmem:[%s382 + $0x58] sm:$0xff] %vm1087, %v1082
      %1100 = vst.msk [vmem:[%s382 + $0x60] sm:$0xff] %vm1087, %v1083
      %1101 = vst.msk [vmem:[%s382 + $0x68] sm:$0xff] %vm1087, %v1084
      %1102 = vst.msk [vmem:[%s382 + $0x70] sm:$0xff] %vm1087, %v1085
      %1103 = vst.msk [vmem:[%s382 + $0x78] sm:$0xff] %vm1087, %v1086
      %v1104 = vpack.c.bf16 %v1072, %v1071
      %v1105 = vpack.c.bf16 %v1074, %v1073
      %v1106 = vpack.c.bf16 %v1076, %v1075
      %v1107 = vpack.c.bf16 %v1078, %v1077
      %v1108 = vpack.c.bf16 %v1080, %v1079
      %v1109 = vpack.c.bf16 %v1082, %v1081
      %v1110 = vpack.c.bf16 %v1084, %v1083
      %v1111 = vpack.c.bf16 %v1086, %v1085
      %v1112 = vld [vmem:[%s387] sm:$0xff]
      %v1113 = vld [vmem:[%s387 + $0x8] sm:$0xff]
      %v1114 = vld [vmem:[%s387 + $0x10] sm:$0xff]
      %v1115 = vld [vmem:[%s387 + $0x18] sm:$0xff]
      %v1116 = vld [vmem:[%s387 + $0x20] sm:$0xff]
      %v1117 = vld [vmem:[%s387 + $0x28] sm:$0xff]
      %v1118 = vld [vmem:[%s387 + $0x30] sm:$0xff]
      %v1119 = vld [vmem:[%s387 + $0x38] sm:$0xff]
      %v1120 = vld [vmem:[%s387 + $0x40] sm:$0xff]
      %v1121 = vld [vmem:[%s387 + $0x48] sm:$0xff]
      %v1122 = vld [vmem:[%s387 + $0x50] sm:$0xff]
      %v1123 = vld [vmem:[%s387 + $0x58] sm:$0xff]
      %v1124 = vld [vmem:[%s387 + $0x60] sm:$0xff]
      %v1125 = vld [vmem:[%s387 + $0x68] sm:$0xff]
      %v1126 = vld [vmem:[%s387 + $0x70] sm:$0xff]
      %v1127 = vld [vmem:[%s387 + $0x78] sm:$0xff]
      %v1128 = vsel %vm1087, %v1071, 0.0
      %1129 = vadd.xlane.f32.xlu0 %v1128
      %v1130 = vpop.xlane.xlu0 %1129
      %v1131 = vsel %vm1087, %v1072, 0.0
      %1132 = vadd.xlane.f32.xlu0 %v1131
      %v1133 = vpop.xlane.xlu0 %1132
      %v1134 = vsel %vm1087, %v1073, 0.0
      %1135 = vadd.xlane.f32.xlu0 %v1134
      %v1136 = vpop.xlane.xlu0 %1135
      %v1137 = vsel %vm1087, %v1074, 0.0
      %1138 = vadd.xlane.f32.xlu0 %v1137
      %v1139 = vpop.xlane.xlu0 %1138
      %v1140 = vsel %vm1087, %v1075, 0.0
      %1141 = vadd.xlane.f32.xlu0 %v1140
      %v1142 = vpop.xlane.xlu0 %1141
      %v1143 = vsel %vm1087, %v1076, 0.0
      %1144 = vadd.xlane.f32.xlu0 %v1143
      %v1145 = vpop.xlane.xlu0 %1144
      %v1146 = vsel %vm1087, %v1077, 0.0
      %1147 = vadd.xlane.f32.xlu0 %v1146
      %v1148 = vpop.xlane.xlu0 %1147
      %v1149 = vsel %vm1087, %v1078, 0.0
      %1150 = vadd.xlane.f32.xlu0 %v1149
      %v1151 = vpop.xlane.xlu0 %1150
      %v1152 = vsel %vm1087, %v1079, 0.0
      %1153 = vadd.xlane.f32.xlu0 %v1152
      %v1154 = vpop.xlane.xlu0 %1153
      %v1155 = vsel %vm1087, %v1080, 0.0
      %1156 = vadd.xlane.f32.xlu0 %v1155
      %v1157 = vpop.xlane.xlu0 %1156
      %v1158 = vsel %vm1087, %v1081, 0.0
      %1159 = vadd.xlane.f32.xlu0 %v1158
      %v1160 = vpop.xlane.xlu0 %1159
      %v1161 = vsel %vm1087, %v1082, 0.0
      %1162 = vadd.xlane.f32.xlu0 %v1161
      %v1163 = vpop.xlane.xlu0 %1162
      %v1164 = vsel %vm1087, %v1083, 0.0
      %1165 = vadd.xlane.f32.xlu0 %v1164
      %v1166 = vpop.xlane.xlu0 %1165
      %v1167 = vsel %vm1087, %v1084, 0.0
      %1168 = vadd.xlane.f32.xlu0 %v1167
      %v1169 = vpop.xlane.xlu0 %1168
      %v1170 = vsel %vm1087, %v1085, 0.0
      %1171 = vadd.xlane.f32.xlu0 %v1170
      %v1172 = vpop.xlane.xlu0 %1171
      %v1173 = vsel %vm1087, %v1086, 0.0
      %1174 = vadd.xlane.f32.xlu0 %v1173
      %v1175 = vpop.xlane.xlu0 %1174
      %v1176 = vadd.f32 %v1112, %v1130
      %v1177 = vadd.f32 %v1113, %v1133
      %v1178 = vadd.f32 %v1114, %v1136
      %v1179 = vadd.f32 %v1115, %v1139
      %v1180 = vadd.f32 %v1116, %v1142
      %v1181 = vadd.f32 %v1117, %v1145
      %v1182 = vadd.f32 %v1118, %v1148
      %v1183 = vadd.f32 %v1119, %v1151
      %v1184 = vadd.f32 %v1120, %v1154
      %v1185 = vadd.f32 %v1121, %v1157
      %v1186 = vadd.f32 %v1122, %v1160
      %v1187 = vadd.f32 %v1123, %v1163
      %v1188 = vadd.f32 %v1124, %v1166
      %v1189 = vadd.f32 %v1125, %v1169
      %v1190 = vadd.f32 %v1126, %v1172
      %v1191 = vadd.f32 %v1127, %v1175
      %vm1192 = vcmask 7168
      %1193 = vst.msk [vmem:[%s387] sm:$0xff] %vm1192, %v1176
      %1194 = vst.msk [vmem:[%s387 + $0x8] sm:$0xff] %vm1192, %v1177
      %1195 = vst.msk [vmem:[%s387 + $0x10] sm:$0xff] %vm1192, %v1178
      %1196 = vst.msk [vmem:[%s387 + $0x18] sm:$0xff] %vm1192, %v1179
      %1197 = vst.msk [vmem:[%s387 + $0x20] sm:$0xff] %vm1192, %v1180
      %1198 = vst.msk [vmem:[%s387 + $0x28] sm:$0xff] %vm1192, %v1181
      %1199 = vst.msk [vmem:[%s387 + $0x30] sm:$0xff] %vm1192, %v1182
      %1200 = vst.msk [vmem:[%s387 + $0x38] sm:$0xff] %vm1192, %v1183
      %1201 = vst.msk [vmem:[%s387 + $0x40] sm:$0xff] %vm1192, %v1184
      %1202 = vst.msk [vmem:[%s387 + $0x48] sm:$0xff] %vm1192, %v1185
      %1203 = vst.msk [vmem:[%s387 + $0x50] sm:$0xff] %vm1192, %v1186
      %1204 = vst.msk [vmem:[%s387 + $0x58] sm:$0xff] %vm1192, %v1187
      %1205 = vst.msk [vmem:[%s387 + $0x60] sm:$0xff] %vm1192, %v1188
      %1206 = vst.msk [vmem:[%s387 + $0x68] sm:$0xff] %vm1192, %v1189
      %1207 = vst.msk [vmem:[%s387 + $0x70] sm:$0xff] %vm1192, %v1190
      %1208 = vst.msk [vmem:[%s387 + $0x78] sm:$0xff] %vm1192, %v1191
      %v1209 = vld [vmem:[%s392] sm:$0xff]
      %v1210 = vld [vmem:[%s392 + $0x8] sm:$0xff]
      %v1211 = vld [vmem:[%s392 + $0x10] sm:$0xff]
      %v1212 = vld [vmem:[%s392 + $0x18] sm:$0xff]
      %v1213 = vld [vmem:[%s392 + $0x20] sm:$0xff]
      %v1214 = vld [vmem:[%s392 + $0x28] sm:$0xff]
      %v1215 = vld [vmem:[%s392 + $0x30] sm:$0xff]
      %v1216 = vld [vmem:[%s392 + $0x38] sm:$0xff]
      %v1217 = vld [vmem:[%s392 + $0x40] sm:$0xff]
      %v1218 = vld [vmem:[%s392 + $0x48] sm:$0xff]
      %v1219 = vld [vmem:[%s392 + $0x50] sm:$0xff]
      %v1220 = vld [vmem:[%s392 + $0x58] sm:$0xff]
      %v1221 = vld [vmem:[%s392 + $0x60] sm:$0xff]
      %v1222 = vld [vmem:[%s392 + $0x68] sm:$0xff]
      %v1223 = vld [vmem:[%s392 + $0x70] sm:$0xff]
      %v1224 = vld [vmem:[%s392 + $0x78] sm:$0xff]
      %v1226 = vsel %vm1087, %v1104, 0
      %v1229 = vsel %vm1087, %v1105, 0
      %v1232 = vsel %vm1087, %v1106, 0
      %v1235 = vsel %vm1087, %v1107, 0
      %v1238 = vsel %vm1087, %v1108, 0
      %v1241 = vsel %vm1087, %v1109, 0
      %v1244 = vsel %vm1087, %v1110, 0
      %v1247 = vsel %vm1087, %v1111, 0
      %1249 = vmatprep.subr.bf16.mxu0 0
      %1250 = vmatpush1.bf16.xpose.msra.mxu0 %v1226
      %1251 = vmatprep.subr.bf16.mxu0 0
      %1252 = vmatpush1.bf16.xpose.msra.mxu0 %v1229
      %1253 = vmatprep.subr.bf16.mxu0 0
      %1254 = vmatpush1.bf16.xpose.msra.mxu0 %v1232
      %1255 = vmatprep.subr.bf16.mxu0 0
      %1256 = vmatpush1.bf16.xpose.msra.mxu0 %v1235
      %1257 = vmatprep.subr.bf16.mxu0 0
      %1258 = vmatpush1.bf16.xpose.msra.mxu0 %v1238
      %1259 = vmatprep.subr.bf16.mxu0 0
      %1260 = vmatpush1.bf16.xpose.msra.mxu0 %v1241
      %1261 = vmatprep.subr.bf16.mxu0 0
      %1262 = vmatpush1.bf16.xpose.msra.mxu0 %v1244
      %1263 = vmatprep.subr.bf16.mxu0 0
      %1264 = vmatpush1.bf16.xpose.msra.mxu0 %v1247
      %1265 = vmatprep.subr.bf16.mxu0 0
      %1266 = vmatpush1.bf16.xpose.msra.mxu0 0
      %1267 = vmatprep.subr.bf16.mxu0 0
      %1268 = vmatpush1.bf16.xpose.msra.mxu0 0
      %1269 = vmatprep.subr.bf16.mxu0 0
      %1270 = vmatpush1.bf16.xpose.msra.mxu0 0
      %1271 = vmatprep.subr.bf16.mxu0 0
      %1272 = vmatpush1.bf16.xpose.msra.mxu0 0
      %1273 = vmatprep.subr.bf16.mxu0 0
      %1274 = vmatpush1.bf16.xpose.msra.mxu0 0
      %1275 = vmatprep.subr.bf16.mxu0 0
      %1276 = vmatpush1.bf16.xpose.msra.mxu0 0
      %1277 = vmatprep.subr.bf16.mxu0 0
      %1278 = vmatpush1.bf16.xpose.msra.mxu0 0
      %1279 = vmatprep.subr.bf16.mxu0 0
      %1280 = vmatpush1.bf16.xpose.msra.mxu0 0
      %1281 = vmatprep.mubr.bf16.mxu0 0
      %1282 = vmatmul.mubr.bf16.gmra.mrb[0].mxu0 %v1226
      %v1283 = vpop.f32.mrb[0].mxu0
      %v1284 = vadd.f32 0.0, %v1283
      %v1285 = vpop.f32.mrb[0].mxu0
      %v1286 = vpop.f32.mrb[0].mxu0
      %v1287 = vadd.f32 0.0, %v1286
      %v1288 = vpop.f32.mrb[0].mxu0
      %1289 = vmatprep.mubr.bf16.mxu0 0
      %1290 = vmatmul.mubr.bf16.gmra.mrb[0].mxu0 %v1229
      %v1291 = vpop.f32.mrb[0].mxu0
      %v1292 = vadd.f32 0.0, %v1291
      %v1293 = vpop.f32.mrb[0].mxu0
      %v1294 = vpop.f32.mrb[0].mxu0
      %v1295 = vadd.f32 0.0, %v1294
      %v1296 = vpop.f32.mrb[0].mxu0
      %1297 = vmatprep.mubr.bf16.mxu0 0
      %1298 = vmatmul.mubr.bf16.gmra.mrb[0].mxu0 %v1232
      %v1299 = vpop.f32.mrb[0].mxu0
      %v1300 = vadd.f32 0.0, %v1299
      %v1301 = vpop.f32.mrb[0].mxu0
      %v1302 = vpop.f32.mrb[0].mxu0
      %v1303 = vadd.f32 0.0, %v1302
      %v1304 = vpop.f32.mrb[0].mxu0
      %1305 = vmatprep.mubr.bf16.mxu0 0
      %1306 = vmatmul.mubr.bf16.gmra.mrb[0].mxu0 %v1235
      %v1307 = vpop.f32.mrb[0].mxu0
      %v1308 = vadd.f32 0.0, %v1307
      %v1309 = vpop.f32.mrb[0].mxu0
      %v1310 = vpop.f32.mrb[0].mxu0
      %v1311 = vadd.f32 0.0, %v1310
      %v1312 = vpop.f32.mrb[0].mxu0
      %1313 = vmatprep.mubr.bf16.mxu0 0
      %1314 = vmatmul.mubr.bf16.gmra.mrb[0].mxu0 %v1238
      %v1315 = vpop.f32.mrb[0].mxu0
      %v1316 = vadd.f32 0.0, %v1315
      %v1317 = vpop.f32.mrb[0].mxu0
      %v1318 = vpop.f32.mrb[0].mxu0
      %v1319 = vadd.f32 0.0, %v1318
      %v1320 = vpop.f32.mrb[0].mxu0
      %1321 = vmatprep.mubr.bf16.mxu0 0
      %1322 = vmatmul.mubr.bf16.gmra.mrb[0].mxu0 %v1241
      %v1323 = vpop.f32.mrb[0].mxu0
      %v1324 = vadd.f32 0.0, %v1323
      %v1325 = vpop.f32.mrb[0].mxu0
      %v1326 = vpop.f32.mrb[0].mxu0
      %v1327 = vadd.f32 0.0, %v1326
      %v1328 = vpop.f32.mrb[0].mxu0
      %1329 = vmatprep.mubr.bf16.mxu0 0
      %1330 = vmatmul.mubr.bf16.gmra.mrb[0].mxu0 %v1244
      %v1331 = vpop.f32.mrb[0].mxu0
      %v1332 = vadd.f32 0.0, %v1331
      %v1333 = vpop.f32.mrb[0].mxu0
      %v1334 = vpop.f32.mrb[0].mxu0
      %v1335 = vadd.f32 0.0, %v1334
      %v1336 = vpop.f32.mrb[0].mxu0
      %1337 = vmatprep.mubr.bf16.mxu0 0
      %1338 = vmatmul.mubr.bf16.gmra.mrb[0].mxu0 %v1247
      %v1339 = vpop.f32.mrb[0].mxu0
      %v1340 = vadd.f32 0.0, %v1339
      %v1341 = vpop.f32.mrb[0].mxu0
      %v1342 = vpop.f32.mrb[0].mxu0
      %v1343 = vadd.f32 0.0, %v1342
      %v1344 = vpop.f32.mrb[0].mxu0
      %1345 = vdwg.mxu0
      %v1346 = vadd.f32 %v1209, %v1284
      %v1347 = vadd.f32 %v1210, %v1287
      %v1348 = vadd.f32 %v1211, %v1292
      %v1349 = vadd.f32 %v1212, %v1295
      %v1350 = vadd.f32 %v1213, %v1300
      %v1351 = vadd.f32 %v1214, %v1303
      %v1352 = vadd.f32 %v1215, %v1308
      %v1353 = vadd.f32 %v1216, %v1311
      %v1354 = vadd.f32 %v1217, %v1316
      %v1355 = vadd.f32 %v1218, %v1319
      %v1356 = vadd.f32 %v1219, %v1324
      %v1357 = vadd.f32 %v1220, %v1327
      %v1358 = vadd.f32 %v1221, %v1332
      %v1359 = vadd.f32 %v1222, %v1335
      %v1360 = vadd.f32 %v1223, %v1340
      %v1361 = vadd.f32 %v1224, %v1343
      %1362 = vst [vmem:[%s392] sm:$0xff] %v1346
      %1363 = vst [vmem:[%s392 + $0x8] sm:$0xff] %v1347
      %1364 = vst [vmem:[%s392 + $0x10] sm:$0xff] %v1348
      %1365 = vst [vmem:[%s392 + $0x18] sm:$0xff] %v1349
      %1366 = vst [vmem:[%s392 + $0x20] sm:$0xff] %v1350
      %1367 = vst [vmem:[%s392 + $0x28] sm:$0xff] %v1351
      %1368 = vst [vmem:[%s392 + $0x30] sm:$0xff] %v1352
      %1369 = vst [vmem:[%s392 + $0x38] sm:$0xff] %v1353
      %1370 = vst [vmem:[%s392 + $0x40] sm:$0xff] %v1354
      %1371 = vst [vmem:[%s392 + $0x48] sm:$0xff] %v1355
      %1372 = vst [vmem:[%s392 + $0x50] sm:$0xff] %v1356
      %1373 = vst [vmem:[%s392 + $0x58] sm:$0xff] %v1357
      %1374 = vst [vmem:[%s392 + $0x60] sm:$0xff] %v1358
      %1375 = vst [vmem:[%s392 + $0x68] sm:$0xff] %v1359
      %1376 = vst [vmem:[%s392 + $0x70] sm:$0xff] %v1360
      %1377 = vst [vmem:[%s392 + $0x78] sm:$0xff] %v1361
      %v1378 = vld [vmem:[%s5] sm:$0xf]
      %v1379 = vld [vmem:[%s5 + $0x4] sm:$0xf]
      %v1380 = vld [vmem:[%s5 + $0x8] sm:$0xf]
      %v1381 = vld [vmem:[%s5 + $0xc] sm:$0xf]
      %v1382 = vld [vmem:[%s5 + $0x10] sm:$0xf]
      %v1383 = vld [vmem:[%s5 + $0x14] sm:$0xf]
      %v1384 = vld [vmem:[%s5 + $0x18] sm:$0xf]
      %v1385 = vld [vmem:[%s5 + $0x1c] sm:$0xf]
      %v1386 = vld [vmem:[%s5 + $0x20] sm:$0xf]
      %v1387 = vld [vmem:[%s5 + $0x24] sm:$0xf]
      %v1388 = vld [vmem:[%s5 + $0x28] sm:$0xf]
      %v1389 = vld [vmem:[%s5 + $0x2c] sm:$0xf]
      %v1390 = vld [vmem:[%s5 + $0x30] sm:$0xf]
      %v1391 = vld [vmem:[%s5 + $0x34] sm:$0xf]
      %v1392 = vld [vmem:[%s5 + $0x38] sm:$0xf]
      %v1393 = vld [vmem:[%s5 + $0x3c] sm:$0xf]
      %v1394 = vld [vmem:[%s5 + $0x40] sm:$0xf]
      %v1395 = vld [vmem:[%s5 + $0x44] sm:$0xf]
      %v1396 = vld [vmem:[%s5 + $0x48] sm:$0xf]
      %v1397 = vld [vmem:[%s5 + $0x4c] sm:$0xf]
      %v1398 = vld [vmem:[%s5 + $0x50] sm:$0xf]
      %v1399 = vld [vmem:[%s5 + $0x54] sm:$0xf]
      %v1400 = vld [vmem:[%s5 + $0x58] sm:$0xf]
      %v1401 = vld [vmem:[%s5 + $0x5c] sm:$0xf]
      %v1402 = vld [vmem:[%s5 + $0x60] sm:$0xf]
      %v1403 = vld [vmem:[%s5 + $0x64] sm:$0xf]
      %v1404 = vld [vmem:[%s5 + $0x68] sm:$0xf]
      %v1405 = vld [vmem:[%s5 + $0x6c] sm:$0xf]
      %v1406 = vld [vmem:[%s5 + $0x70] sm:$0xf]
      %v1407 = vld [vmem:[%s5 + $0x74] sm:$0xf]
      %v1408 = vld [vmem:[%s5 + $0x78] sm:$0xf]
      %v1409 = vld [vmem:[%s5 + $0x7c] sm:$0xf]
      %v1442 = vunpack.c.l.b16 %v1378
      %v1443 = vunpack.c.l.b16 %v1379
      %v1444 = vunpack.c.l.b16 %v1380
      %v1445 = vunpack.c.l.b16 %v1381
      %v1446 = vunpack.c.l.b16 %v1382
      %v1447 = vunpack.c.l.b16 %v1383
      %v1448 = vunpack.c.l.b16 %v1384
      %v1449 = vunpack.c.l.b16 %v1385
      %v1450 = vunpack.c.l.b16 %v1386
      %v1451 = vunpack.c.l.b16 %v1387
      %v1452 = vunpack.c.l.b16 %v1388
      %v1453 = vunpack.c.l.b16 %v1389
      %v1454 = vunpack.c.l.b16 %v1390
      %v1455 = vunpack.c.l.b16 %v1391
      %v1456 = vunpack.c.l.b16 %v1392
      %v1457 = vunpack.c.l.b16 %v1393
      %v1458 = vunpack.c.l.b16 %v1394
      %v1459 = vunpack.c.l.b16 %v1395
      %v1460 = vunpack.c.l.b16 %v1396
      %v1461 = vunpack.c.l.b16 %v1397
      %v1462 = vunpack.c.l.b16 %v1398
      %v1463 = vunpack.c.l.b16 %v1399
      %v1464 = vunpack.c.l.b16 %v1400
      %v1465 = vunpack.c.l.b16 %v1401
      %v1466 = vunpack.c.l.b16 %v1402
      %v1467 = vunpack.c.l.b16 %v1403
      %v1468 = vunpack.c.l.b16 %v1404
      %v1469 = vunpack.c.l.b16 %v1405
      %v1470 = vunpack.c.l.b16 %v1406
      %v1471 = vunpack.c.l.b16 %v1407
      %v1472 = vunpack.c.l.b16 %v1408
      %v1473 = vunpack.c.l.b16 %v1409
      %v1474 = vpack.c.b16 %v1443, %v1442
      %v1475 = vpack.c.b16 %v1445, %v1444
      %v1476 = vpack.c.b16 %v1447, %v1446
      %v1477 = vpack.c.b16 %v1449, %v1448
      %v1478 = vpack.c.b16 %v1451, %v1450
      %v1479 = vpack.c.b16 %v1453, %v1452
      %v1480 = vpack.c.b16 %v1455, %v1454
      %v1481 = vpack.c.b16 %v1457, %v1456
      %v1482 = vpack.c.b16 %v1459, %v1458
      %v1483 = vpack.c.b16 %v1461, %v1460
      %v1484 = vpack.c.b16 %v1463, %v1462
      %v1485 = vpack.c.b16 %v1465, %v1464
      %v1486 = vpack.c.b16 %v1467, %v1466
      %v1487 = vpack.c.b16 %v1469, %v1468
      %v1488 = vpack.c.b16 %v1471, %v1470
      %v1489 = vpack.c.b16 %v1473, %v1472
      %1506 = vmatprep.subr.bf16.mxu0 0
      %1507 = vmatpush1.bf16.msra.mxu0 %v1104
      %1508 = vmatprep.subr.bf16.mxu0 0
      %1509 = vmatpush1.bf16.msra.mxu0 %v1105
      %1510 = vmatprep.subr.bf16.mxu0 0
      %1511 = vmatpush1.bf16.msra.mxu0 %v1106
      %1512 = vmatprep.subr.bf16.mxu0 0
      %1513 = vmatpush1.bf16.msra.mxu0 %v1107
      %1514 = vmatprep.subr.bf16.mxu0 0
      %1515 = vmatpush1.bf16.msra.mxu0 %v1108
      %1516 = vmatprep.subr.bf16.mxu0 0
      %1517 = vmatpush1.bf16.msra.mxu0 %v1109
      %1518 = vmatprep.subr.bf16.mxu0 0
      %1519 = vmatpush1.bf16.msra.mxu0 %v1110
      %1520 = vmatprep.subr.bf16.mxu0 0
      %1521 = vmatpush1.bf16.msra.mxu0 %v1111
      %1522 = vmatprep.subr.bf16.mxu0 0
      %1523 = vmatpush1.bf16.msra.mxu0 0
      %1524 = vmatprep.subr.bf16.mxu0 0
      %1525 = vmatpush1.bf16.msra.mxu0 0
      %1526 = vmatprep.subr.bf16.mxu0 0
      %1527 = vmatpush1.bf16.msra.mxu0 0
      %1528 = vmatprep.subr.bf16.mxu0 0
      %1529 = vmatpush1.bf16.msra.mxu0 0
      %1530 = vmatprep.subr.bf16.mxu0 0
      %1531 = vmatpush1.bf16.msra.mxu0 0
      %1532 = vmatprep.subr.bf16.mxu0 0
      %1533 = vmatpush1.bf16.msra.mxu0 0
      %1534 = vmatprep.subr.bf16.mxu0 0
      %1535 = vmatpush1.bf16.msra.mxu0 0
      %1536 = vmatprep.subr.bf16.mxu0 0
      %1537 = vmatpush1.bf16.msra.mxu0 0
      %1538 = vmatprep.mubr.bf16.mxu0 0
      %1539 = vmatmul.mubr.bf16.gmra.mrb[0].mxu0 %v1474
      %v1540 = vpop.f32.mrb[0].mxu0
      %v1541 = vadd.f32 0.0, %v1540
      %v1542 = vpop.f32.mrb[0].mxu0
      %v1543 = vpop.f32.mrb[0].mxu0
      %v1544 = vadd.f32 0.0, %v1543
      %v1545 = vpop.f32.mrb[0].mxu0
      %1546 = vmatprep.mubr.bf16.mxu0 0
      %1547 = vmatmul.mubr.bf16.gmra.mrb[0].mxu0 %v1475
      %v1548 = vpop.f32.mrb[0].mxu0
      %v1549 = vadd.f32 0.0, %v1548
      %v1550 = vpop.f32.mrb[0].mxu0
      %v1551 = vpop.f32.mrb[0].mxu0
      %v1552 = vadd.f32 0.0, %v1551
      %v1553 = vpop.f32.mrb[0].mxu0
      %1554 = vmatprep.mubr.bf16.mxu0 0
      %1555 = vmatmul.mubr.bf16.gmra.mrb[0].mxu0 %v1476
      %v1556 = vpop.f32.mrb[0].mxu0
      %v1557 = vadd.f32 0.0, %v1556
      %v1558 = vpop.f32.mrb[0].mxu0
      %v1559 = vpop.f32.mrb[0].mxu0
      %v1560 = vadd.f32 0.0, %v1559
      %v1561 = vpop.f32.mrb[0].mxu0
      %1562 = vmatprep.mubr.bf16.mxu0 0
      %1563 = vmatmul.mubr.bf16.gmra.mrb[0].mxu0 %v1477
      %v1564 = vpop.f32.mrb[0].mxu0
      %v1565 = vadd.f32 0.0, %v1564
      %v1566 = vpop.f32.mrb[0].mxu0
      %v1567 = vpop.f32.mrb[0].mxu0
      %v1568 = vadd.f32 0.0, %v1567
      %v1569 = vpop.f32.mrb[0].mxu0
      %1570 = vmatprep.mubr.bf16.mxu0 0
      %1571 = vmatmul.mubr.bf16.gmra.mrb[0].mxu0 %v1478
      %v1572 = vpop.f32.mrb[0].mxu0
      %v1573 = vadd.f32 0.0, %v1572
      %v1574 = vpop.f32.mrb[0].mxu0
      %v1575 = vpop.f32.mrb[0].mxu0
      %v1576 = vadd.f32 0.0, %v1575
      %v1577 = vpop.f32.mrb[0].mxu0
      %1578 = vmatprep.mubr.bf16.mxu0 0
      %1579 = vmatmul.mubr.bf16.gmra.mrb[0].mxu0 %v1479
      %v1580 = vpop.f32.mrb[0].mxu0
      %v1581 = vadd.f32 0.0, %v1580
      %v1582 = vpop.f32.mrb[0].mxu0
      %v1583 = vpop.f32.mrb[0].mxu0
      %v1584 = vadd.f32 0.0, %v1583
      %v1585 = vpop.f32.mrb[0].mxu0
      %1586 = vmatprep.mubr.bf16.mxu0 0
      %1587 = vmatmul.mubr.bf16.gmra.mrb[0].mxu0 %v1480
      %v1588 = vpop.f32.mrb[0].mxu0
      %v1589 = vadd.f32 0.0, %v1588
      %v1590 = vpop.f32.mrb[0].mxu0
      %v1591 = vpop.f32.mrb[0].mxu0
      %v1592 = vadd.f32 0.0, %v1591
      %v1593 = vpop.f32.mrb[0].mxu0
      %1594 = vmatprep.mubr.bf16.mxu0 0
      %1595 = vmatmul.mubr.bf16.gmra.mrb[0].mxu0 %v1481
      %v1596 = vpop.f32.mrb[0].mxu0
      %v1597 = vadd.f32 0.0, %v1596
      %v1598 = vpop.f32.mrb[0].mxu0
      %v1599 = vpop.f32.mrb[0].mxu0
      %v1600 = vadd.f32 0.0, %v1599
      %v1601 = vpop.f32.mrb[0].mxu0
      %1602 = vmatprep.mubr.bf16.mxu0 0
      %1603 = vmatmul.mubr.bf16.gmra.mrb[0].mxu0 %v1482
      %v1604 = vpop.f32.mrb[0].mxu0
      %v1605 = vadd.f32 0.0, %v1604
      %v1606 = vpop.f32.mrb[0].mxu0
      %v1607 = vpop.f32.mrb[0].mxu0
      %v1608 = vadd.f32 0.0, %v1607
      %v1609 = vpop.f32.mrb[0].mxu0
      %1610 = vmatprep.mubr.bf16.mxu0 0
      %1611 = vmatmul.mubr.bf16.gmra.mrb[0].mxu0 %v1483
      %v1612 = vpop.f32.mrb[0].mxu0
      %v1613 = vadd.f32 0.0, %v1612
      %v1614 = vpop.f32.mrb[0].mxu0
      %v1615 = vpop.f32.mrb[0].mxu0
      %v1616 = vadd.f32 0.0, %v1615
      %v1617 = vpop.f32.mrb[0].mxu0
      %1618 = vmatprep.mubr.bf16.mxu0 0
      %1619 = vmatmul.mubr.bf16.gmra.mrb[0].mxu0 %v1484
      %v1620 = vpop.f32.mrb[0].mxu0
      %v1621 = vadd.f32 0.0, %v1620
      %v1622 = vpop.f32.mrb[0].mxu0
      %v1623 = vpop.f32.mrb[0].mxu0
      %v1624 = vadd.f32 0.0, %v1623
      %v1625 = vpop.f32.mrb[0].mxu0
      %1626 = vmatprep.mubr.bf16.mxu0 0
      %1627 = vmatmul.mubr.bf16.gmra.mrb[0].mxu0 %v1485
      %v1628 = vpop.f32.mrb[0].mxu0
      %v1629 = vadd.f32 0.0, %v1628
      %v1630 = vpop.f32.mrb[0].mxu0
      %v1631 = vpop.f32.mrb[0].mxu0
      %v1632 = vadd.f32 0.0, %v1631
      %v1633 = vpop.f32.mrb[0].mxu0
      %1634 = vmatprep.mubr.bf16.mxu0 0
      %1635 = vmatmul.mubr.bf16.gmra.mrb[0].mxu0 %v1486
      %v1636 = vpop.f32.mrb[0].mxu0
      %v1637 = vadd.f32 0.0, %v1636
      %v1638 = vpop.f32.mrb[0].mxu0
      %v1639 = vpop.f32.mrb[0].mxu0
      %v1640 = vadd.f32 0.0, %v1639
      %v1641 = vpop.f32.mrb[0].mxu0
      %1642 = vmatprep.mubr.bf16.mxu0 0
      %1643 = vmatmul.mubr.bf16.gmra.mrb[0].mxu0 %v1487
      %v1644 = vpop.f32.mrb[0].mxu0
      %v1645 = vadd.f32 0.0, %v1644
      %v1646 = vpop.f32.mrb[0].mxu0
      %v1647 = vpop.f32.mrb[0].mxu0
      %v1648 = vadd.f32 0.0, %v1647
      %v1649 = vpop.f32.mrb[0].mxu0
      %1650 = vmatprep.mubr.bf16.mxu0 0
      %1651 = vmatmul.mubr.bf16.gmra.mrb[0].mxu0 %v1488
      %v1652 = vpop.f32.mrb[0].mxu0
      %v1653 = vadd.f32 0.0, %v1652
      %v1654 = vpop.f32.mrb[0].mxu0
      %v1655 = vpop.f32.mrb[0].mxu0
      %v1656 = vadd.f32 0.0, %v1655
      %v1657 = vpop.f32.mrb[0].mxu0
      %1658 = vmatprep.mubr.bf16.mxu0 0
      %1659 = vmatmul.mubr.bf16.gmra.mrb[0].mxu0 %v1489
      %v1660 = vpop.f32.mrb[0].mxu0
      %v1661 = vadd.f32 0.0, %v1660
      %v1662 = vpop.f32.mrb[0].mxu0
      %v1663 = vpop.f32.mrb[0].mxu0
      %v1664 = vadd.f32 0.0, %v1663
      %v1665 = vpop.f32.mrb[0].mxu0
      %1666 = vdwg.mxu0
      %v1667 = vsel %vm1087, %v1541, -inf
      %1668 = vmax.xlane.f32.xlu0 %v1667
      %v1669 = vpop.xlane.xlu0 %1668
      %v1670 = vsel %vm1087, %v1544, -inf
      %1671 = vmax.xlane.f32.xlu0 %v1670
      %v1672 = vpop.xlane.xlu0 %1671
      %v1673 = vsel %vm1087, %v1549, -inf
      %1674 = vmax.xlane.f32.xlu0 %v1673
      %v1675 = vpop.xlane.xlu0 %1674
      %v1676 = vsel %vm1087, %v1552, -inf
      %1677 = vmax.xlane.f32.xlu0 %v1676
      %v1678 = vpop.xlane.xlu0 %1677
      %v1679 = vsel %vm1087, %v1557, -inf
      %1680 = vmax.xlane.f32.xlu0 %v1679
      %v1681 = vpop.xlane.xlu0 %1680
      %v1682 = vsel %vm1087, %v1560, -inf
      %1683 = vmax.xlane.f32.xlu0 %v1682
      %v1684 = vpop.xlane.xlu0 %1683
      %v1685 = vsel %vm1087, %v1565, -inf
      %1686 = vmax.xlane.f32.xlu0 %v1685
      %v1687 = vpop.xlane.xlu0 %1686
      %v1688 = vsel %vm1087, %v1568, -inf
      %1689 = vmax.xlane.f32.xlu0 %v1688
      %v1690 = vpop.xlane.xlu0 %1689
      %v1691 = vsel %vm1087, %v1573, -inf
      %1692 = vmax.xlane.f32.xlu0 %v1691
      %v1693 = vpop.xlane.xlu0 %1692
      %v1694 = vsel %vm1087, %v1576, -inf
      %1695 = vmax.xlane.f32.xlu0 %v1694
      %v1696 = vpop.xlane.xlu0 %1695
      %v1697 = vsel %vm1087, %v1581, -inf
      %1698 = vmax.xlane.f32.xlu0 %v1697
      %v1699 = vpop.xlane.xlu0 %1698
      %v1700 = vsel %vm1087, %v1584, -inf
      %1701 = vmax.xlane.f32.xlu0 %v1700
      %v1702 = vpop.xlane.xlu0 %1701
      %v1703 = vsel %vm1087, %v1589, -inf
      %1704 = vmax.xlane.f32.xlu0 %v1703
      %v1705 = vpop.xlane.xlu0 %1704
      %v1706 = vsel %vm1087, %v1592, -inf
      %1707 = vmax.xlane.f32.xlu0 %v1706
      %v1708 = vpop.xlane.xlu0 %1707
      %v1709 = vsel %vm1087, %v1597, -inf
      %1710 = vmax.xlane.f32.xlu0 %v1709
      %v1711 = vpop.xlane.xlu0 %1710
      %v1712 = vsel %vm1087, %v1600, -inf
      %1713 = vmax.xlane.f32.xlu0 %v1712
      %v1714 = vpop.xlane.xlu0 %1713
      %v1715 = vsel %vm1087, %v1605, -inf
      %1716 = vmax.xlane.f32.xlu0 %v1715
      %v1717 = vpop.xlane.xlu0 %1716
      %v1718 = vsel %vm1087, %v1608, -inf
      %1719 = vmax.xlane.f32.xlu0 %v1718
      %v1720 = vpop.xlane.xlu0 %1719
      %v1721 = vsel %vm1087, %v1613, -inf
      %1722 = vmax.xlane.f32.xlu0 %v1721
      %v1723 = vpop.xlane.xlu0 %1722
      %v1724 = vsel %vm1087, %v1616, -inf
      %1725 = vmax.xlane.f32.xlu0 %v1724
      %v1726 = vpop.xlane.xlu0 %1725
      %v1727 = vsel %vm1087, %v1621, -inf
      %1728 = vmax.xlane.f32.xlu0 %v1727
      %v1729 = vpop.xlane.xlu0 %1728
      %v1730 = vsel %vm1087, %v1624, -inf
      %1731 = vmax.xlane.f32.xlu0 %v1730
      %v1732 = vpop.xlane.xlu0 %1731
      %v1733 = vsel %vm1087, %v1629, -inf
      %1734 = vmax.xlane.f32.xlu0 %v1733
      %v1735 = vpop.xlane.xlu0 %1734
      %v1736 = vsel %vm1087, %v1632, -inf
      %1737 = vmax.xlane.f32.xlu0 %v1736
      %v1738 = vpop.xlane.xlu0 %1737
      %v1739 = vsel %vm1087, %v1637, -inf
      %1740 = vmax.xlane.f32.xlu0 %v1739
      %v1741 = vpop.xlane.xlu0 %1740
      %v1742 = vsel %vm1087, %v1640, -inf
      %1743 = vmax.xlane.f32.xlu0 %v1742
      %v1744 = vpop.xlane.xlu0 %1743
      %v1745 = vsel %vm1087, %v1645, -inf
      %1746 = vmax.xlane.f32.xlu0 %v1745
      %v1747 = vpop.xlane.xlu0 %1746
      %v1748 = vsel %vm1087, %v1648, -inf
      %1749 = vmax.xlane.f32.xlu0 %v1748
      %v1750 = vpop.xlane.xlu0 %1749
      %v1751 = vsel %vm1087, %v1653, -inf
      %1752 = vmax.xlane.f32.xlu0 %v1751
      %v1753 = vpop.xlane.xlu0 %1752
      %v1754 = vsel %vm1087, %v1656, -inf
      %1755 = vmax.xlane.f32.xlu0 %v1754
      %v1756 = vpop.xlane.xlu0 %1755
      %v1757 = vsel %vm1087, %v1661, -inf
      %1758 = vmax.xlane.f32.xlu0 %v1757
      %v1759 = vpop.xlane.xlu0 %1758
      %v1760 = vsel %vm1087, %v1664, -inf
      %1761 = vmax.xlane.f32.xlu0 %v1760
      %v1762 = vpop.xlane.xlu0 %1761
      %v1763 = vld [vmem:[%s397] sm:$0xff]
      %v1764 = vld [vmem:[%s397 + $0x8] sm:$0xff]
      %v1765 = vld [vmem:[%s397 + $0x10] sm:$0xff]
      %v1766 = vld [vmem:[%s397 + $0x18] sm:$0xff]
      %v1767 = vld [vmem:[%s397 + $0x20] sm:$0xff]
      %v1768 = vld [vmem:[%s397 + $0x28] sm:$0xff]
      %v1769 = vld [vmem:[%s397 + $0x30] sm:$0xff]
      %v1770 = vld [vmem:[%s397 + $0x38] sm:$0xff]
      %v1771 = vld [vmem:[%s397 + $0x40] sm:$0xff]
      %v1772 = vld [vmem:[%s397 + $0x48] sm:$0xff]
      %v1773 = vld [vmem:[%s397 + $0x50] sm:$0xff]
      %v1774 = vld [vmem:[%s397 + $0x58] sm:$0xff]
      %v1775 = vld [vmem:[%s397 + $0x60] sm:$0xff]
      %v1776 = vld [vmem:[%s397 + $0x68] sm:$0xff]
      %v1777 = vld [vmem:[%s397 + $0x70] sm:$0xff]
      %v1778 = vld [vmem:[%s397 + $0x78] sm:$0xff]
      %v1779 = vld [vmem:[%s397 + $0x80] sm:$0xff]
      %v1780 = vld [vmem:[%s397 + $0x88] sm:$0xff]
      %v1781 = vld [vmem:[%s397 + $0x90] sm:$0xff]
      %v1782 = vld [vmem:[%s397 + $0x98] sm:$0xff]
      %v1783 = vld [vmem:[%s397 + $0xa0] sm:$0xff]
      %v1784 = vld [vmem:[%s397 + $0xa8] sm:$0xff]
      %v1785 = vld [vmem:[%s397 + $0xb0] sm:$0xff]
      %v1786 = vld [vmem:[%s397 + $0xb8] sm:$0xff]
      %v1787 = vld [vmem:[%s397 + $0xc0] sm:$0xff]
      %v1788 = vld [vmem:[%s397 + $0xc8] sm:$0xff]
      %v1789 = vld [vmem:[%s397 + $0xd0] sm:$0xff]
      %v1790 = vld [vmem:[%s397 + $0xd8] sm:$0xff]
      %v1791 = vld [vmem:[%s397 + $0xe0] sm:$0xff]
      %v1792 = vld [vmem:[%s397 + $0xe8] sm:$0xff]
      %v1793 = vld [vmem:[%s397 + $0xf0] sm:$0xff]
      %v1794 = vld [vmem:[%s397 + $0xf8] sm:$0xff]
      %v1795 = vmax.f32 %v1763, %v1669
      %v1796 = vmax.f32 %v1764, %v1672
      %v1797 = vmax.f32 %v1765, %v1675
      %v1798 = vmax.f32 %v1766, %v1678
      %v1799 = vmax.f32 %v1767, %v1681
      %v1800 = vmax.f32 %v1768, %v1684
      %v1801 = vmax.f32 %v1769, %v1687
      %v1802 = vmax.f32 %v1770, %v1690
      %v1803 = vmax.f32 %v1771, %v1693
      %v1804 = vmax.f32 %v1772, %v1696
      %v1805 = vmax.f32 %v1773, %v1699
      %v1806 = vmax.f32 %v1774, %v1702
      %v1807 = vmax.f32 %v1775, %v1705
      %v1808 = vmax.f32 %v1776, %v1708
      %v1809 = vmax.f32 %v1777, %v1711
      %v1810 = vmax.f32 %v1778, %v1714
      %v1811 = vmax.f32 %v1779, %v1717
      %v1812 = vmax.f32 %v1780, %v1720
      %v1813 = vmax.f32 %v1781, %v1723
      %v1814 = vmax.f32 %v1782, %v1726
      %v1815 = vmax.f32 %v1783, %v1729
      %v1816 = vmax.f32 %v1784, %v1732
      %v1817 = vmax.f32 %v1785, %v1735
      %v1818 = vmax.f32 %v1786, %v1738
      %v1819 = vmax.f32 %v1787, %v1741
      %v1820 = vmax.f32 %v1788, %v1744
      %v1821 = vmax.f32 %v1789, %v1747
      %v1822 = vmax.f32 %v1790, %v1750
      %v1823 = vmax.f32 %v1791, %v1753
      %v1824 = vmax.f32 %v1792, %v1756
      %v1825 = vmax.f32 %v1793, %v1759
      %v1826 = vmax.f32 %v1794, %v1762
      %1827 = vst.msk [vmem:[%s397] sm:$0xff] %vm1192, %v1795
      %1828 = vst.msk [vmem:[%s397 + $0x8] sm:$0xff] %vm1192, %v1796
      %1829 = vst.msk [vmem:[%s397 + $0x10] sm:$0xff] %vm1192, %v1797
      %1830 = vst.msk [vmem:[%s397 + $0x18] sm:$0xff] %vm1192, %v1798
      %1831 = vst.msk [vmem:[%s397 + $0x20] sm:$0xff] %vm1192, %v1799
      %1832 = vst.msk [vmem:[%s397 + $0x28] sm:$0xff] %vm1192, %v1800
      %1833 = vst.msk [vmem:[%s397 + $0x30] sm:$0xff] %vm1192, %v1801
      %1834 = vst.msk [vmem:[%s397 + $0x38] sm:$0xff] %vm1192, %v1802
      %1835 = vst.msk [vmem:[%s397 + $0x40] sm:$0xff] %vm1192, %v1803
      %1836 = vst.msk [vmem:[%s397 + $0x48] sm:$0xff] %vm1192, %v1804
      %1837 = vst.msk [vmem:[%s397 + $0x50] sm:$0xff] %vm1192, %v1805
      %1838 = vst.msk [vmem:[%s397 + $0x58] sm:$0xff] %vm1192, %v1806
      %1839 = vst.msk [vmem:[%s397 + $0x60] sm:$0xff] %vm1192, %v1807
      %1840 = vst.msk [vmem:[%s397 + $0x68] sm:$0xff] %vm1192, %v1808
      %1841 = vst.msk [vmem:[%s397 + $0x70] sm:$0xff] %vm1192, %v1809
      %1842 = vst.msk [vmem:[%s397 + $0x78] sm:$0xff] %vm1192, %v1810
      %1843 = vst.msk [vmem:[%s397 + $0x80] sm:$0xff] %vm1192, %v1811
      %1844 = vst.msk [vmem:[%s397 + $0x88] sm:$0xff] %vm1192, %v1812
      %1845 = vst.msk [vmem:[%s397 + $0x90] sm:$0xff] %vm1192, %v1813
      %1846 = vst.msk [vmem:[%s397 + $0x98] sm:$0xff] %vm1192, %v1814
      %1847 = vst.msk [vmem:[%s397 + $0xa0] sm:$0xff] %vm1192, %v1815
      %1848 = vst.msk [vmem:[%s397 + $0xa8] sm:$0xff] %vm1192, %v1816
      %1849 = vst.msk [vmem:[%s397 + $0xb0] sm:$0xff] %vm1192, %v1817
      %1850 = vst.msk [vmem:[%s397 + $0xb8] sm:$0xff] %vm1192, %v1818
      %1851 = vst.msk [vmem:[%s397 + $0xc0] sm:$0xff] %vm1192, %v1819
      %1852 = vst.msk [vmem:[%s397 + $0xc8] sm:$0xff] %vm1192, %v1820
      %1853 = vst.msk [vmem:[%s397 + $0xd0] sm:$0xff] %vm1192, %v1821
      %1854 = vst.msk [vmem:[%s397 + $0xd8] sm:$0xff] %vm1192, %v1822
      %1855 = vst.msk [vmem:[%s397 + $0xe0] sm:$0xff] %vm1192, %v1823
      %1856 = vst.msk [vmem:[%s397 + $0xe8] sm:$0xff] %vm1192, %v1824
      %1857 = vst.msk [vmem:[%s397 + $0xf0] sm:$0xff] %vm1192, %v1825
      %1858 = vst.msk [vmem:[%s397 + $0xf8] sm:$0xff] %vm1192, %v1826
      %v1859 = vld [vmem:[%s5 + $0x80] sm:$0xf]
      %v1860 = vld [vmem:[%s5 + $0x84] sm:$0xf]
      %v1861 = vld [vmem:[%s5 + $0x88] sm:$0xf]
      %v1862 = vld [vmem:[%s5 + $0x8c] sm:$0xf]
      %v1863 = vld [vmem:[%s5 + $0x90] sm:$0xf]
      %v1864 = vld [vmem:[%s5 + $0x94] sm:$0xf]
      %v1865 = vld [vmem:[%s5 + $0x98] sm:$0xf]
      %v1866 = vld [vmem:[%s5 + $0x9c] sm:$0xf]
      %v1867 = vld [vmem:[%s5 + $0xa0] sm:$0xf]
      %v1868 = vld [vmem:[%s5 + $0xa4] sm:$0xf]
      %v1869 = vld [vmem:[%s5 + $0xa8] sm:$0xf]
      %v1870 = vld [vmem:[%s5 + $0xac] sm:$0xf]
      %v1871 = vld [vmem:[%s5 + $0xb0] sm:$0xf]
      %v1872 = vld [vmem:[%s5 + $0xb4] sm:$0xf]
      %v1873 = vld [vmem:[%s5 + $0xb8] sm:$0xf]
      %v1874 = vld [vmem:[%s5 + $0xbc] sm:$0xf]
      %v1875 = vld [vmem:[%s5 + $0xc0] sm:$0xf]
      %v1876 = vld [vmem:[%s5 + $0xc4] sm:$0xf]
      %v1877 = vld [vmem:[%s5 + $0xc8] sm:$0xf]
      %v1878 = vld [vmem:[%s5 + $0xcc] sm:$0xf]
      %v1879 = vld [vmem:[%s5 + $0xd0] sm:$0xf]
      %v1880 = vld [vmem:[%s5 + $0xd4] sm:$0xf]
      %v1881 = vld [vmem:[%s5 + $0xd8] sm:$0xf]
      %v1882 = vld [vmem:[%s5 + $0xdc] sm:$0xf]
      %v1883 = vld [vmem:[%s5 + $0xe0] sm:$0xf]
      %v1884 = vld [vmem:[%s5 + $0xe4] sm:$0xf]
      %v1885 = vld [vmem:[%s5 + $0xe8] sm:$0xf]
      %v1886 = vld [vmem:[%s5 + $0xec] sm:$0xf]
      %v1887 = vld [vmem:[%s5 + $0xf0] sm:$0xf]
      %v1888 = vld [vmem:[%s5 + $0xf4] sm:$0xf]
      %v1889 = vld [vmem:[%s5 + $0xf8] sm:$0xf]
      %v1890 = vld [vmem:[%s5 + $0xfc] sm:$0xf]
      %v1923 = vunpack.c.l.b16 %v1859
      %v1924 = vunpack.c.l.b16 %v1860
      %v1925 = vunpack.c.l.b16 %v1861
      %v1926 = vunpack.c.l.b16 %v1862
      %v1927 = vunpack.c.l.b16 %v1863
      %v1928 = vunpack.c.l.b16 %v1864
      %v1929 = vunpack.c.l.b16 %v1865
      %v1930 = vunpack.c.l.b16 %v1866
      %v1931 = vunpack.c.l.b16 %v1867
      %v1932 = vunpack.c.l.b16 %v1868
      %v1933 = vunpack.c.l.b16 %v1869
      %v1934 = vunpack.c.l.b16 %v1870
      %v1935 = vunpack.c.l.b16 %v1871
      %v1936 = vunpack.c.l.b16 %v1872
      %v1937 = vunpack.c.l.b16 %v1873
      %v1938 = vunpack.c.l.b16 %v1874
      %v1939 = vunpack.c.l.b16 %v1875
      %v1940 = vunpack.c.l.b16 %v1876
      %v1941 = vunpack.c.l.b16 %v1877
      %v1942 = vunpack.c.l.b16 %v1878
      %v1943 = vunpack.c.l.b16 %v1879
      %v1944 = vunpack.c.l.b16 %v1880
      %v1945 = vunpack.c.l.b16 %v1881
      %v1946 = vunpack.c.l.b16 %v1882
      %v1947 = vunpack.c.l.b16 %v1883
      %v1948 = vunpack.c.l.b16 %v1884
      %v1949 = vunpack.c.l.b16 %v1885
      %v1950 = vunpack.c.l.b16 %v1886
      %v1951 = vunpack.c.l.b16 %v1887
      %v1952 = vunpack.c.l.b16 %v1888
      %v1953 = vunpack.c.l.b16 %v1889
      %v1954 = vunpack.c.l.b16 %v1890
      %v1955 = vpack.c.b16 %v1924, %v1923
      %v1956 = vpack.c.b16 %v1926, %v1925
      %v1957 = vpack.c.b16 %v1928, %v1927
      %v1958 = vpack.c.b16 %v1930, %v1929
      %v1959 = vpack.c.b16 %v1932, %v1931
      %v1960 = vpack.c.b16 %v1934, %v1933
      %v1961 = vpack.c.b16 %v1936, %v1935
      %v1962 = vpack.c.b16 %v1938, %v1937
      %v1963 = vpack.c.b16 %v1940, %v1939
      %v1964 = vpack.c.b16 %v1942, %v1941
      %v1965 = vpack.c.b16 %v1944, %v1943
      %v1966 = vpack.c.b16 %v1946, %v1945
      %v1967 = vpack.c.b16 %v1948, %v1947
      %v1968 = vpack.c.b16 %v1950, %v1949
      %v1969 = vpack.c.b16 %v1952, %v1951
      %v1970 = vpack.c.b16 %v1954, %v1953
      %1987 = vmatprep.subr.bf16.mxu0 0
      %1988 = vmatpush1.bf16.msra.mxu0 %v1104
      %1989 = vmatprep.subr.bf16.mxu0 0
      %1990 = vmatpush1.bf16.msra.mxu0 %v1105
      %1991 = vmatprep.subr.bf16.mxu0 0
      %1992 = vmatpush1.bf16.msra.mxu0 %v1106
      %1993 = vmatprep.subr.bf16.mxu0 0
      %1994 = vmatpush1.bf16.msra.mxu0 %v1107
      %1995 = vmatprep.subr.bf16.mxu0 0
      %1996 = vmatpush1.bf16.msra.mxu0 %v1108
      %1997 = vmatprep.subr.bf16.mxu0 0
      %1998 = vmatpush1.bf16.msra.mxu0 %v1109
      %1999 = vmatprep.subr.bf16.mxu0 0
      %2000 = vmatpush1.bf16.msra.mxu0 %v1110
      %2001 = vmatprep.subr.bf16.mxu0 0
      %2002 = vmatpush1.bf16.msra.mxu0 %v1111
      %2003 = vmatprep.subr.bf16.mxu0 0
      %2004 = vmatpush1.bf16.msra.mxu0 0
      %2005 = vmatprep.subr.bf16.mxu0 0
      %2006 = vmatpush1.bf16.msra.mxu0 0
      %2007 = vmatprep.subr.bf16.mxu0 0
      %2008 = vmatpush1.bf16.msra.mxu0 0
      %2009 = vmatprep.subr.bf16.mxu0 0
      %2010 = vmatpush1.bf16.msra.mxu0 0
      %2011 = vmatprep.subr.bf16.mxu0 0
      %2012 = vmatpush1.bf16.msra.mxu0 0
      %2013 = vmatprep.subr.bf16.mxu0 0
      %2014 = vmatpush1.bf16.msra.mxu0 0
      %2015 = vmatprep.subr.bf16.mxu0 0
      %2016 = vmatpush1.bf16.msra.mxu0 0
      %2017 = vmatprep.subr.bf16.mxu0 0
      %2018 = vmatpush1.bf16.msra.mxu0 0
      %2019 = vmatprep.mubr.bf16.mxu0 0
      %2020 = vmatmul.mubr.bf16.gmra.mrb[0].mxu0 %v1955
      %v2021 = vpop.f32.mrb[0].mxu0
      %v2022 = vadd.f32 0.0, %v2021
      %v2023 = vpop.f32.mrb[0].mxu0
      %v2024 = vpop.f32.mrb[0].mxu0
      %v2025 = vadd.f32 0.0, %v2024
      %v2026 = vpop.f32.mrb[0].mxu0
      %2027 = vmatprep.mubr.bf16.mxu0 0
      %2028 = vmatmul.mubr.bf16.gmra.mrb[0].mxu0 %v1956
      %v2029 = vpop.f32.mrb[0].mxu0
      %v2030 = vadd.f32 0.0, %v2029
      %v2031 = vpop.f32.mrb[0].mxu0
      %v2032 = vpop.f32.mrb[0].mxu0
      %v2033 = vadd.f32 0.0, %v2032
      %v2034 = vpop.f32.mrb[0].mxu0
      %2035 = vmatprep.mubr.bf16.mxu0 0
      %2036 = vmatmul.mubr.bf16.gmra.mrb[0].mxu0 %v1957
      %v2037 = vpop.f32.mrb[0].mxu0
      %v2038 = vadd.f32 0.0, %v2037
      %v2039 = vpop.f32.mrb[0].mxu0
      %v2040 = vpop.f32.mrb[0].mxu0
      %v2041 = vadd.f32 0.0, %v2040
      %v2042 = vpop.f32.mrb[0].mxu0
      %2043 = vmatprep.mubr.bf16.mxu0 0
      %2044 = vmatmul.mubr.bf16.gmra.mrb[0].mxu0 %v1958
      %v2045 = vpop.f32.mrb[0].mxu0
      %v2046 = vadd.f32 0.0, %v2045
      %v2047 = vpop.f32.mrb[0].mxu0
      %v2048 = vpop.f32.mrb[0].mxu0
      %v2049 = vadd.f32 0.0, %v2048
      %v2050 = vpop.f32.mrb[0].mxu0
      %2051 = vmatprep.mubr.bf16.mxu0 0
      %2052 = vmatmul.mubr.bf16.gmra.mrb[0].mxu0 %v1959
      %v2053 = vpop.f32.mrb[0].mxu0
      %v2054 = vadd.f32 0.0, %v2053
      %v2055 = vpop.f32.mrb[0].mxu0
      %v2056 = vpop.f32.mrb[0].mxu0
      %v2057 = vadd.f32 0.0, %v2056
      %v2058 = vpop.f32.mrb[0].mxu0
      %2059 = vmatprep.mubr.bf16.mxu0 0
      %2060 = vmatmul.mubr.bf16.gmra.mrb[0].mxu0 %v1960
      %v2061 = vpop.f32.mrb[0].mxu0
      %v2062 = vadd.f32 0.0, %v2061
      %v2063 = vpop.f32.mrb[0].mxu0
      %v2064 = vpop.f32.mrb[0].mxu0
      %v2065 = vadd.f32 0.0, %v2064
      %v2066 = vpop.f32.mrb[0].mxu0
      %2067 = vmatprep.mubr.bf16.mxu0 0
      %2068 = vmatmul.mubr.bf16.gmra.mrb[0].mxu0 %v1961
      %v2069 = vpop.f32.mrb[0].mxu0
      %v2070 = vadd.f32 0.0, %v2069
      %v2071 = vpop.f32.mrb[0].mxu0
      %v2072 = vpop.f32.mrb[0].mxu0
      %v2073 = vadd.f32 0.0, %v2072
      %v2074 = vpop.f32.mrb[0].mxu0
      %2075 = vmatprep.mubr.bf16.mxu0 0
      %2076 = vmatmul.mubr.bf16.gmra.mrb[0].mxu0 %v1962
      %v2077 = vpop.f32.mrb[0].mxu0
      %v2078 = vadd.f32 0.0, %v2077
      %v2079 = vpop.f32.mrb[0].mxu0
      %v2080 = vpop.f32.mrb[0].mxu0
      %v2081 = vadd.f32 0.0, %v2080
      %v2082 = vpop.f32.mrb[0].mxu0
      %2083 = vmatprep.mubr.bf16.mxu0 0
      %2084 = vmatmul.mubr.bf16.gmra.mrb[0].mxu0 %v1963
      %v2085 = vpop.f32.mrb[0].mxu0
      %v2086 = vadd.f32 0.0, %v2085
      %v2087 = vpop.f32.mrb[0].mxu0
      %v2088 = vpop.f32.mrb[0].mxu0
      %v2089 = vadd.f32 0.0, %v2088
      %v2090 = vpop.f32.mrb[0].mxu0
      %2091 = vmatprep.mubr.bf16.mxu0 0
      %2092 = vmatmul.mubr.bf16.gmra.mrb[0].mxu0 %v1964
      %v2093 = vpop.f32.mrb[0].mxu0
      %v2094 = vadd.f32 0.0, %v2093
      %v2095 = vpop.f32.mrb[0].mxu0
      %v2096 = vpop.f32.mrb[0].mxu0
      %v2097 = vadd.f32 0.0, %v2096
      %v2098 = vpop.f32.mrb[0].mxu0
      %2099 = vmatprep.mubr.bf16.mxu0 0
      %2100 = vmatmul.mubr.bf16.gmra.mrb[0].mxu0 %v1965
      %v2101 = vpop.f32.mrb[0].mxu0
      %v2102 = vadd.f32 0.0, %v2101
      %v2103 = vpop.f32.mrb[0].mxu0
      %v2104 = vpop.f32.mrb[0].mxu0
      %v2105 = vadd.f32 0.0, %v2104
      %v2106 = vpop.f32.mrb[0].mxu0
      %2107 = vmatprep.mubr.bf16.mxu0 0
      %2108 = vmatmul.mubr.bf16.gmra.mrb[0].mxu0 %v1966
      %v2109 = vpop.f32.mrb[0].mxu0
      %v2110 = vadd.f32 0.0, %v2109
      %v2111 = vpop.f32.mrb[0].mxu0
      %v2112 = vpop.f32.mrb[0].mxu0
      %v2113 = vadd.f32 0.0, %v2112
      %v2114 = vpop.f32.mrb[0].mxu0
      %2115 = vmatprep.mubr.bf16.mxu0 0
      %2116 = vmatmul.mubr.bf16.gmra.mrb[0].mxu0 %v1967
      %v2117 = vpop.f32.mrb[0].mxu0
      %v2118 = vadd.f32 0.0, %v2117
      %v2119 = vpop.f32.mrb[0].mxu0
      %v2120 = vpop.f32.mrb[0].mxu0
      %v2121 = vadd.f32 0.0, %v2120
      %v2122 = vpop.f32.mrb[0].mxu0
      %2123 = vmatprep.mubr.bf16.mxu0 0
      %2124 = vmatmul.mubr.bf16.gmra.mrb[0].mxu0 %v1968
      %v2125 = vpop.f32.mrb[0].mxu0
      %v2126 = vadd.f32 0.0, %v2125
      %v2127 = vpop.f32.mrb[0].mxu0
      %v2128 = vpop.f32.mrb[0].mxu0
      %v2129 = vadd.f32 0.0, %v2128
      %v2130 = vpop.f32.mrb[0].mxu0
      %2131 = vmatprep.mubr.bf16.mxu0 0
      %2132 = vmatmul.mubr.bf16.gmra.mrb[0].mxu0 %v1969
      %v2133 = vpop.f32.mrb[0].mxu0
      %v2134 = vadd.f32 0.0, %v2133
      %v2135 = vpop.f32.mrb[0].mxu0
      %v2136 = vpop.f32.mrb[0].mxu0
      %v2137 = vadd.f32 0.0, %v2136
      %v2138 = vpop.f32.mrb[0].mxu0
      %2139 = vmatprep.mubr.bf16.mxu0 0
      %2140 = vmatmul.mubr.bf16.gmra.mrb[0].mxu0 %v1970
      %v2141 = vpop.f32.mrb[0].mxu0
      %v2142 = vadd.f32 0.0, %v2141
      %v2143 = vpop.f32.mrb[0].mxu0
      %v2144 = vpop.f32.mrb[0].mxu0
      %v2145 = vadd.f32 0.0, %v2144
      %v2146 = vpop.f32.mrb[0].mxu0
      %2147 = vdwg.mxu0
      %v2148 = vsel %vm1087, %v2022, -inf
      %2149 = vmax.xlane.f32.xlu0 %v2148
      %v2150 = vpop.xlane.xlu0 %2149
      %v2151 = vsel %vm1087, %v2025, -inf
      %2152 = vmax.xlane.f32.xlu0 %v2151
      %v2153 = vpop.xlane.xlu0 %2152
      %v2154 = vsel %vm1087, %v2030, -inf
      %2155 = vmax.xlane.f32.xlu0 %v2154
      %v2156 = vpop.xlane.xlu0 %2155
      %v2157 = vsel %vm1087, %v2033, -inf
      %2158 = vmax.xlane.f32.xlu0 %v2157
      %v2159 = vpop.xlane.xlu0 %2158
      %v2160 = vsel %vm1087, %v2038, -inf
      %2161 = vmax.xlane.f32.xlu0 %v2160
      %v2162 = vpop.xlane.xlu0 %2161
      %v2163 = vsel %vm1087, %v2041, -inf
      %2164 = vmax.xlane.f32.xlu0 %v2163
      %v2165 = vpop.xlane.xlu0 %2164
      %v2166 = vsel %vm1087, %v2046, -inf
      %2167 = vmax.xlane.f32.xlu0 %v2166
      %v2168 = vpop.xlane.xlu0 %2167
      %v2169 = vsel %vm1087, %v2049, -inf
      %2170 = vmax.xlane.f32.xlu0 %v2169
      %v2171 = vpop.xlane.xlu0 %2170
      %v2172 = vsel %vm1087, %v2054, -inf
      %2173 = vmax.xlane.f32.xlu0 %v2172
      %v2174 = vpop.xlane.xlu0 %2173
      %v2175 = vsel %vm1087, %v2057, -inf
      %2176 = vmax.xlane.f32.xlu0 %v2175
      %v2177 = vpop.xlane.xlu0 %2176
      %v2178 = vsel %vm1087, %v2062, -inf
      %2179 = vmax.xlane.f32.xlu0 %v2178
      %v2180 = vpop.xlane.xlu0 %2179
      %v2181 = vsel %vm1087, %v2065, -inf
      %2182 = vmax.xlane.f32.xlu0 %v2181
      %v2183 = vpop.xlane.xlu0 %2182
      %v2184 = vsel %vm1087, %v2070, -inf
      %2185 = vmax.xlane.f32.xlu0 %v2184
      %v2186 = vpop.xlane.xlu0 %2185
      %v2187 = vsel %vm1087, %v2073, -inf
      %2188 = vmax.xlane.f32.xlu0 %v2187
      %v2189 = vpop.xlane.xlu0 %2188
      %v2190 = vsel %vm1087, %v2078, -inf
      %2191 = vmax.xlane.f32.xlu0 %v2190
      %v2192 = vpop.xlane.xlu0 %2191
      %v2193 = vsel %vm1087, %v2081, -inf
      %2194 = vmax.xlane.f32.xlu0 %v2193
      %v2195 = vpop.xlane.xlu0 %2194
      %v2196 = vsel %vm1087, %v2086, -inf
      %2197 = vmax.xlane.f32.xlu0 %v2196
      %v2198 = vpop.xlane.xlu0 %2197
      %v2199 = vsel %vm1087, %v2089, -inf
      %2200 = vmax.xlane.f32.xlu0 %v2199
      %v2201 = vpop.xlane.xlu0 %2200
      %v2202 = vsel %vm1087, %v2094, -inf
      %2203 = vmax.xlane.f32.xlu0 %v2202
      %v2204 = vpop.xlane.xlu0 %2203
      %v2205 = vsel %vm1087, %v2097, -inf
      %2206 = vmax.xlane.f32.xlu0 %v2205
      %v2207 = vpop.xlane.xlu0 %2206
      %v2208 = vsel %vm1087, %v2102, -inf
      %2209 = vmax.xlane.f32.xlu0 %v2208
      %v2210 = vpop.xlane.xlu0 %2209
      %v2211 = vsel %vm1087, %v2105, -inf
      %2212 = vmax.xlane.f32.xlu0 %v2211
      %v2213 = vpop.xlane.xlu0 %2212
      %v2214 = vsel %vm1087, %v2110, -inf
      %2215 = vmax.xlane.f32.xlu0 %v2214
      %v2216 = vpop.xlane.xlu0 %2215
      %v2217 = vsel %vm1087, %v2113, -inf
      %2218 = vmax.xlane.f32.xlu0 %v2217
      %v2219 = vpop.xlane.xlu0 %2218
      %v2220 = vsel %vm1087, %v2118, -inf
      %2221 = vmax.xlane.f32.xlu0 %v2220
      %v2222 = vpop.xlane.xlu0 %2221
      %v2223 = vsel %vm1087, %v2121, -inf
      %2224 = vmax.xlane.f32.xlu0 %v2223
      %v2225 = vpop.xlane.xlu0 %2224
      %v2226 = vsel %vm1087, %v2126, -inf
      %2227 = vmax.xlane.f32.xlu0 %v2226
      %v2228 = vpop.xlane.xlu0 %2227
      %v2229 = vsel %vm1087, %v2129, -inf
      %2230 = vmax.xlane.f32.xlu0 %v2229
      %v2231 = vpop.xlane.xlu0 %2230
      %v2232 = vsel %vm1087, %v2134, -inf
      %2233 = vmax.xlane.f32.xlu0 %v2232
      %v2234 = vpop.xlane.xlu0 %2233
      %v2235 = vsel %vm1087, %v2137, -inf
      %2236 = vmax.xlane.f32.xlu0 %v2235
      %v2237 = vpop.xlane.xlu0 %2236
      %v2238 = vsel %vm1087, %v2142, -inf
      %2239 = vmax.xlane.f32.xlu0 %v2238
      %v2240 = vpop.xlane.xlu0 %2239
      %v2241 = vsel %vm1087, %v2145, -inf
      %2242 = vmax.xlane.f32.xlu0 %v2241
      %v2243 = vpop.xlane.xlu0 %2242
      %v2244 = vld [vmem:[%s397 + $0x100] sm:$0xff]
      %v2245 = vld [vmem:[%s397 + $0x108] sm:$0xff]
      %v2246 = vld [vmem:[%s397 + $0x110] sm:$0xff]
      %v2247 = vld [vmem:[%s397 + $0x118] sm:$0xff]
      %v2248 = vld [vmem:[%s397 + $0x120] sm:$0xff]
      %v2249 = vld [vmem:[%s397 + $0x128] sm:$0xff]
      %v2250 = vld [vmem:[%s397 + $0x130] sm:$0xff]
      %v2251 = vld [vmem:[%s397 + $0x138] sm:$0xff]
      %v2252 = vld [vmem:[%s397 + $0x140] sm:$0xff]
      %v2253 = vld [vmem:[%s397 + $0x148] sm:$0xff]
      %v2254 = vld [vmem:[%s397 + $0x150] sm:$0xff]
      %v2255 = vld [vmem:[%s397 + $0x158] sm:$0xff]
      %v2256 = vld [vmem:[%s397 + $0x160] sm:$0xff]
      %v2257 = vld [vmem:[%s397 + $0x168] sm:$0xff]
      %v2258 = vld [vmem:[%s397 + $0x170] sm:$0xff]
      %v2259 = vld [vmem:[%s397 + $0x178] sm:$0xff]
      %v2260 = vld [vmem:[%s397 + $0x180] sm:$0xff]
      %v2261 = vld [vmem:[%s397 + $0x188] sm:$0xff]
      %v2262 = vld [vmem:[%s397 + $0x190] sm:$0xff]
      %v2263 = vld [vmem:[%s397 + $0x198] sm:$0xff]
      %v2264 = vld [vmem:[%s397 + $0x1a0] sm:$0xff]
      %v2265 = vld [vmem:[%s397 + $0x1a8] sm:$0xff]
      %v2266 = vld [vmem:[%s397 + $0x1b0] sm:$0xff]
      %v2267 = vld [vmem:[%s397 + $0x1b8] sm:$0xff]
      %v2268 = vld [vmem:[%s397 + $0x1c0] sm:$0xff]
      %v2269 = vld [vmem:[%s397 + $0x1c8] sm:$0xff]
      %v2270 = vld [vmem:[%s397 + $0x1d0] sm:$0xff]
      %v2271 = vld [vmem:[%s397 + $0x1d8] sm:$0xff]
      %v2272 = vld [vmem:[%s397 + $0x1e0] sm:$0xff]
      %v2273 = vld [vmem:[%s397 + $0x1e8] sm:$0xff]
      %v2274 = vld [vmem:[%s397 + $0x1f0] sm:$0xff]
      %v2275 = vld [vmem:[%s397 + $0x1f8] sm:$0xff]
      %v2276 = vmax.f32 %v2244, %v2150
      %v2277 = vmax.f32 %v2245, %v2153
      %v2278 = vmax.f32 %v2246, %v2156
      %v2279 = vmax.f32 %v2247, %v2159
      %v2280 = vmax.f32 %v2248, %v2162
      %v2281 = vmax.f32 %v2249, %v2165
      %v2282 = vmax.f32 %v2250, %v2168
      %v2283 = vmax.f32 %v2251, %v2171
      %v2284 = vmax.f32 %v2252, %v2174
      %v2285 = vmax.f32 %v2253, %v2177
      %v2286 = vmax.f32 %v2254, %v2180
      %v2287 = vmax.f32 %v2255, %v2183
      %v2288 = vmax.f32 %v2256, %v2186
      %v2289 = vmax.f32 %v2257, %v2189
      %v2290 = vmax.f32 %v2258, %v2192
      %v2291 = vmax.f32 %v2259, %v2195
      %v2292 = vmax.f32 %v2260, %v2198
      %v2293 = vmax.f32 %v2261, %v2201
      %v2294 = vmax.f32 %v2262, %v2204
      %v2295 = vmax.f32 %v2263, %v2207
      %v2296 = vmax.f32 %v2264, %v2210
      %v2297 = vmax.f32 %v2265, %v2213
      %v2298 = vmax.f32 %v2266, %v2216
      %v2299 = vmax.f32 %v2267, %v2219
      %v2300 = vmax.f32 %v2268, %v2222
      %v2301 = vmax.f32 %v2269, %v2225
      %v2302 = vmax.f32 %v2270, %v2228
      %v2303 = vmax.f32 %v2271, %v2231
      %v2304 = vmax.f32 %v2272, %v2234
      %v2305 = vmax.f32 %v2273, %v2237
      %v2306 = vmax.f32 %v2274, %v2240
      %v2307 = vmax.f32 %v2275, %v2243
      %2308 = vst.msk [vmem:[%s397 + $0x100] sm:$0xff] %vm1192, %v2276
      %2309 = vst.msk [vmem:[%s397 + $0x108] sm:$0xff] %vm1192, %v2277
      %2310 = vst.msk [vmem:[%s397 + $0x110] sm:$0xff] %vm1192, %v2278
      %2311 = vst.msk [vmem:[%s397 + $0x118] sm:$0xff] %vm1192, %v2279
      %2312 = vst.msk [vmem:[%s397 + $0x120] sm:$0xff] %vm1192, %v2280
      %2313 = vst.msk [vmem:[%s397 + $0x128] sm:$0xff] %vm1192, %v2281
      %2314 = vst.msk [vmem:[%s397 + $0x130] sm:$0xff] %vm1192, %v2282
      %2315 = vst.msk [vmem:[%s397 + $0x138] sm:$0xff] %vm1192, %v2283
      %2316 = vst.msk [vmem:[%s397 + $0x140] sm:$0xff] %vm1192, %v2284
      %2317 = vst.msk [vmem:[%s397 + $0x148] sm:$0xff] %vm1192, %v2285
      %2318 = vst.msk [vmem:[%s397 + $0x150] sm:$0xff] %vm1192, %v2286
      %2319 = vst.msk [vmem:[%s397 + $0x158] sm:$0xff] %vm1192, %v2287
      %2320 = vst.msk [vmem:[%s397 + $0x160] sm:$0xff] %vm1192, %v2288
      %2321 = vst.msk [vmem:[%s397 + $0x168] sm:$0xff] %vm1192, %v2289
      %2322 = vst.msk [vmem:[%s397 + $0x170] sm:$0xff] %vm1192, %v2290
      %2323 = vst.msk [vmem:[%s397 + $0x178] sm:$0xff] %vm1192, %v2291
      %2324 = vst.msk [vmem:[%s397 + $0x180] sm:$0xff] %vm1192, %v2292
      %2325 = vst.msk [vmem:[%s397 + $0x188] sm:$0xff] %vm1192, %v2293
      %2326 = vst.msk [vmem:[%s397 + $0x190] sm:$0xff] %vm1192, %v2294
      %2327 = vst.msk [vmem:[%s397 + $0x198] sm:$0xff] %vm1192, %v2295
      %2328 = vst.msk [vmem:[%s397 + $0x1a0] sm:$0xff] %vm1192, %v2296
      %2329 = vst.msk [vmem:[%s397 + $0x1a8] sm:$0xff] %vm1192, %v2297
      %2330 = vst.msk [vmem:[%s397 + $0x1b0] sm:$0xff] %vm1192, %v2298
      %2331 = vst.msk [vmem:[%s397 + $0x1b8] sm:$0xff] %vm1192, %v2299
      %2332 = vst.msk [vmem:[%s397 + $0x1c0] sm:$0xff] %vm1192, %v2300
      %2333 = vst.msk [vmem:[%s397 + $0x1c8] sm:$0xff] %vm1192, %v2301
      %2334 = vst.msk [vmem:[%s397 + $0x1d0] sm:$0xff] %vm1192, %v2302
      %2335 = vst.msk [vmem:[%s397 + $0x1d8] sm:$0xff] %vm1192, %v2303
      %2336 = vst.msk [vmem:[%s397 + $0x1e0] sm:$0xff] %vm1192, %v2304
      %2337 = vst.msk [vmem:[%s397 + $0x1e8] sm:$0xff] %vm1192, %v2305
      %2338 = vst.msk [vmem:[%s397 + $0x1f0] sm:$0xff] %vm1192, %v2306
      %2339 = vst.msk [vmem:[%s397 + $0x1f8] sm:$0xff] %vm1192, %v2307
      %v2340 = vld [vmem:[%s5 + $0x100] sm:$0xf]
      %v2341 = vld [vmem:[%s5 + $0x104] sm:$0xf]
      %v2342 = vld [vmem:[%s5 + $0x108] sm:$0xf]
      %v2343 = vld [vmem:[%s5 + $0x10c] sm:$0xf]
      %v2344 = vld [vmem:[%s5 + $0x110] sm:$0xf]
      %v2345 = vld [vmem:[%s5 + $0x114] sm:$0xf]
      %v2346 = vld [vmem:[%s5 + $0x118] sm:$0xf]
      %v2347 = vld [vmem:[%s5 + $0x11c] sm:$0xf]
      %v2348 = vld [vmem:[%s5 + $0x120] sm:$0xf]
      %v2349 = vld [vmem:[%s5 + $0x124] sm:$0xf]
      %v2350 = vld [vmem:[%s5 + $0x128] sm:$0xf]
      %v2351 = vld [vmem:[%s5 + $0x12c] sm:$0xf]
      %v2352 = vld [vmem:[%s5 + $0x130] sm:$0xf]
      %v2353 = vld [vmem:[%s5 + $0x134] sm:$0xf]
      %v2354 = vld [vmem:[%s5 + $0x138] sm:$0xf]
      %v2355 = vld [vmem:[%s5 + $0x13c] sm:$0xf]
      %v2356 = vld [vmem:[%s5 + $0x140] sm:$0xf]
      %v2357 = vld [vmem:[%s5 + $0x144] sm:$0xf]
      %v2358 = vld [vmem:[%s5 + $0x148] sm:$0xf]
      %v2359 = vld [vmem:[%s5 + $0x14c] sm:$0xf]
      %v2360 = vld [vmem:[%s5 + $0x150] sm:$0xf]
      %v2361 = vld [vmem:[%s5 + $0x154] sm:$0xf]
      %v2362 = vld [vmem:[%s5 + $0x158] sm:$0xf]
      %v2363 = vld [vmem:[%s5 + $0x15c] sm:$0xf]
      %v2364 = vld [vmem:[%s5 + $0x160] sm:$0xf]
      %v2365 = vld [vmem:[%s5 + $0x164] sm:$0xf]
      %v2366 = vld [vmem:[%s5 + $0x168] sm:$0xf]
      %v2367 = vld [vmem:[%s5 + $0x16c] sm:$0xf]
      %v2368 = vld [vmem:[%s5 + $0x170] sm:$0xf]
      %v2369 = vld [vmem:[%s5 + $0x174] sm:$0xf]
      %v2370 = vld [vmem:[%s5 + $0x178] sm:$0xf]
      %v2371 = vld [vmem:[%s5 + $0x17c] sm:$0xf]
      %v2404 = vunpack.c.l.b16 %v2340
      %v2405 = vunpack.c.l.b16 %v2341
      %v2406 = vunpack.c.l.b16 %v2342
      %v2407 = vunpack.c.l.b16 %v2343
      %v2408 = vunpack.c.l.b16 %v2344
      %v2409 = vunpack.c.l.b16 %v2345
      %v2410 = vunpack.c.l.b16 %v2346
      %v2411 = vunpack.c.l.b16 %v2347
      %v2412 = vunpack.c.l.b16 %v2348
      %v2413 = vunpack.c.l.b16 %v2349
      %v2414 = vunpack.c.l.b16 %v2350
      %v2415 = vunpack.c.l.b16 %v2351
      %v2416 = vunpack.c.l.b16 %v2352
      %v2417 = vunpack.c.l.b16 %v2353
      %v2418 = vunpack.c.l.b16 %v2354
      %v2419 = vunpack.c.l.b16 %v2355
      %v2420 = vunpack.c.l.b16 %v2356
      %v2421 = vunpack.c.l.b16 %v2357
      %v2422 = vunpack.c.l.b16 %v2358
      %v2423 = vunpack.c.l.b16 %v2359
      %v2424 = vunpack.c.l.b16 %v2360
      %v2425 = vunpack.c.l.b16 %v2361
      %v2426 = vunpack.c.l.b16 %v2362
      %v2427 = vunpack.c.l.b16 %v2363
      %v2428 = vunpack.c.l.b16 %v2364
      %v2429 = vunpack.c.l.b16 %v2365
      %v2430 = vunpack.c.l.b16 %v2366
      %v2431 = vunpack.c.l.b16 %v2367
      %v2432 = vunpack.c.l.b16 %v2368
      %v2433 = vunpack.c.l.b16 %v2369
      %v2434 = vunpack.c.l.b16 %v2370
      %v2435 = vunpack.c.l.b16 %v2371
      %v2436 = vpack.c.b16 %v2405, %v2404
      %v2437 = vpack.c.b16 %v2407, %v2406
      %v2438 = vpack.c.b16 %v2409, %v2408
      %v2439 = vpack.c.b16 %v2411, %v2410
      %v2440 = vpack.c.b16 %v2413, %v2412
      %v2441 = vpack.c.b16 %v2415, %v2414
      %v2442 = vpack.c.b16 %v2417, %v2416
      %v2443 = vpack.c.b16 %v2419, %v2418
      %v2444 = vpack.c.b16 %v2421, %v2420
      %v2445 = vpack.c.b16 %v2423, %v2422
      %v2446 = vpack.c.b16 %v2425, %v2424
      %v2447 = vpack.c.b16 %v2427, %v2426
      %v2448 = vpack.c.b16 %v2429, %v2428
      %v2449 = vpack.c.b16 %v2431, %v2430
      %v2450 = vpack.c.b16 %v2433, %v2432
      %v2451 = vpack.c.b16 %v2435, %v2434
      %2468 = vmatprep.subr.bf16.mxu0 0
      %2469 = vmatpush1.bf16.msra.mxu0 %v1104
      %2470 = vmatprep.subr.bf16.mxu0 0
      %2471 = vmatpush1.bf16.msra.mxu0 %v1105
      %2472 = vmatprep.subr.bf16.mxu0 0
      %2473 = vmatpush1.bf16.msra.mxu0 %v1106
      %2474 = vmatprep.subr.bf16.mxu0 0
      %2475 = vmatpush1.bf16.msra.mxu0 %v1107
      %2476 = vmatprep.subr.bf16.mxu0 0
      %2477 = vmatpush1.bf16.msra.mxu0 %v1108
      %2478 = vmatprep.subr.bf16.mxu0 0
      %2479 = vmatpush1.bf16.msra.mxu0 %v1109
      %2480 = vmatprep.subr.bf16.mxu0 0
      %2481 = vmatpush1.bf16.msra.mxu0 %v1110
      %2482 = vmatprep.subr.bf16.mxu0 0
      %2483 = vmatpush1.bf16.msra.mxu0 %v1111
      %2484 = vmatprep.subr.bf16.mxu0 0
      %2485 = vmatpush1.bf16.msra.mxu0 0
      %2486 = vmatprep.subr.bf16.mxu0 0
      %2487 = vmatpush1.bf16.msra.mxu0 0
      %2488 = vmatprep.subr.bf16.mxu0 0
      %2489 = vmatpush1.bf16.msra.mxu0 0
      %2490 = vmatprep.subr.bf16.mxu0 0
      %2491 = vmatpush1.bf16.msra.mxu0 0
      %2492 = vmatprep.subr.bf16.mxu0 0
      %2493 = vmatpush1.bf16.msra.mxu0 0
      %2494 = vmatprep.subr.bf16.mxu0 0
      %2495 = vmatpush1.bf16.msra.mxu0 0
      %2496 = vmatprep.subr.bf16.mxu0 0
      %2497 = vmatpush1.bf16.msra.mxu0 0
      %2498 = vmatprep.subr.bf16.mxu0 0
      %2499 = vmatpush1.bf16.msra.mxu0 0
      %2500 = vmatprep.mubr.bf16.mxu0 0
      %2501 = vmatmul.mubr.bf16.gmra.mrb[0].mxu0 %v2436
      %v2502 = vpop.f32.mrb[0].mxu0
      %v2503 = vadd.f32 0.0, %v2502
      %v2504 = vpop.f32.mrb[0].mxu0
      %v2505 = vpop.f32.mrb[0].mxu0
      %v2506 = vadd.f32 0.0, %v2505
      %v2507 = vpop.f32.mrb[0].mxu0
      %2508 = vmatprep.mubr.bf16.mxu0 0
      %2509 = vmatmul.mubr.bf16.gmra.mrb[0].mxu0 %v2437
      %v2510 = vpop.f32.mrb[0].mxu0
      %v2511 = vadd.f32 0.0, %v2510
      %v2512 = vpop.f32.mrb[0].mxu0
      %v2513 = vpop.f32.mrb[0].mxu0
      %v2514 = vadd.f32 0.0, %v2513
      %v2515 = vpop.f32.mrb[0].mxu0
      %2516 = vmatprep.mubr.bf16.mxu0 0
      %2517 = vmatmul.mubr.bf16.gmra.mrb[0].mxu0 %v2438
      %v2518 = vpop.f32.mrb[0].mxu0
      %v2519 = vadd.f32 0.0, %v2518
      %v2520 = vpop.f32.mrb[0].mxu0
      %v2521 = vpop.f32.mrb[0].mxu0
      %v2522 = vadd.f32 0.0, %v2521
      %v2523 = vpop.f32.mrb[0].mxu0
      %2524 = vmatprep.mubr.bf16.mxu0 0
      %2525 = vmatmul.mubr.bf16.gmra.mrb[0].mxu0 %v2439
      %v2526 = vpop.f32.mrb[0].mxu0
      %v2527 = vadd.f32 0.0, %v2526
      %v2528 = vpop.f32.mrb[0].mxu0
      %v2529 = vpop.f32.mrb[0].mxu0
      %v2530 = vadd.f32 0.0, %v2529
      %v2531 = vpop.f32.mrb[0].mxu0
      %2532 = vmatprep.mubr.bf16.mxu0 0
      %2533 = vmatmul.mubr.bf16.gmra.mrb[0].mxu0 %v2440
      %v2534 = vpop.f32.mrb[0].mxu0
      %v2535 = vadd.f32 0.0, %v2534
      %v2536 = vpop.f32.mrb[0].mxu0
      %v2537 = vpop.f32.mrb[0].mxu0
      %v2538 = vadd.f32 0.0, %v2537
      %v2539 = vpop.f32.mrb[0].mxu0
      %2540 = vmatprep.mubr.bf16.mxu0 0
      %2541 = vmatmul.mubr.bf16.gmra.mrb[0].mxu0 %v2441
      %v2542 = vpop.f32.mrb[0].mxu0
      %v2543 = vadd.f32 0.0, %v2542
      %v2544 = vpop.f32.mrb[0].mxu0
      %v2545 = vpop.f32.mrb[0].mxu0
      %v2546 = vadd.f32 0.0, %v2545
      %v2547 = vpop.f32.mrb[0].mxu0
      %2548 = vmatprep.mubr.bf16.mxu0 0
      %2549 = vmatmul.mubr.bf16.gmra.mrb[0].mxu0 %v2442
      %v2550 = vpop.f32.mrb[0].mxu0
      %v2551 = vadd.f32 0.0, %v2550
      %v2552 = vpop.f32.mrb[0].mxu0
      %v2553 = vpop.f32.mrb[0].mxu0
      %v2554 = vadd.f32 0.0, %v2553
      %v2555 = vpop.f32.mrb[0].mxu0
      %2556 = vmatprep.mubr.bf16.mxu0 0
      %2557 = vmatmul.mubr.bf16.gmra.mrb[0].mxu0 %v2443
      %v2558 = vpop.f32.mrb[0].mxu0
      %v2559 = vadd.f32 0.0, %v2558
      %v2560 = vpop.f32.mrb[0].mxu0
      %v2561 = vpop.f32.mrb[0].mxu0
      %v2562 = vadd.f32 0.0, %v2561
      %v2563 = vpop.f32.mrb[0].mxu0
      %2564 = vmatprep.mubr.bf16.mxu0 0
      %2565 = vmatmul.mubr.bf16.gmra.mrb[0].mxu0 %v2444
      %v2566 = vpop.f32.mrb[0].mxu0
      %v2567 = vadd.f32 0.0, %v2566
      %v2568 = vpop.f32.mrb[0].mxu0
      %v2569 = vpop.f32.mrb[0].mxu0
      %v2570 = vadd.f32 0.0, %v2569
      %v2571 = vpop.f32.mrb[0].mxu0
      %2572 = vmatprep.mubr.bf16.mxu0 0
      %2573 = vmatmul.mubr.bf16.gmra.mrb[0].mxu0 %v2445
      %v2574 = vpop.f32.mrb[0].mxu0
      %v2575 = vadd.f32 0.0, %v2574
      %v2576 = vpop.f32.mrb[0].mxu0
      %v2577 = vpop.f32.mrb[0].mxu0
      %v2578 = vadd.f32 0.0, %v2577
      %v2579 = vpop.f32.mrb[0].mxu0
      %2580 = vmatprep.mubr.bf16.mxu0 0
      %2581 = vmatmul.mubr.bf16.gmra.mrb[0].mxu0 %v2446
      %v2582 = vpop.f32.mrb[0].mxu0
      %v2583 = vadd.f32 0.0, %v2582
      %v2584 = vpop.f32.mrb[0].mxu0
      %v2585 = vpop.f32.mrb[0].mxu0
      %v2586 = vadd.f32 0.0, %v2585
      %v2587 = vpop.f32.mrb[0].mxu0
      %2588 = vmatprep.mubr.bf16.mxu0 0
      %2589 = vmatmul.mubr.bf16.gmra.mrb[0].mxu0 %v2447
      %v2590 = vpop.f32.mrb[0].mxu0
      %v2591 = vadd.f32 0.0, %v2590
      %v2592 = vpop.f32.mrb[0].mxu0
      %v2593 = vpop.f32.mrb[0].mxu0
      %v2594 = vadd.f32 0.0, %v2593
      %v2595 = vpop.f32.mrb[0].mxu0
      %2596 = vmatprep.mubr.bf16.mxu0 0
      %2597 = vmatmul.mubr.bf16.gmra.mrb[0].mxu0 %v2448
      %v2598 = vpop.f32.mrb[0].mxu0
      %v2599 = vadd.f32 0.0, %v2598
      %v2600 = vpop.f32.mrb[0].mxu0
      %v2601 = vpop.f32.mrb[0].mxu0
      %v2602 = vadd.f32 0.0, %v2601
      %v2603 = vpop.f32.mrb[0].mxu0
      %2604 = vmatprep.mubr.bf16.mxu0 0
      %2605 = vmatmul.mubr.bf16.gmra.mrb[0].mxu0 %v2449
      %v2606 = vpop.f32.mrb[0].mxu0
      %v2607 = vadd.f32 0.0, %v2606
      %v2608 = vpop.f32.mrb[0].mxu0
      %v2609 = vpop.f32.mrb[0].mxu0
      %v2610 = vadd.f32 0.0, %v2609
      %v2611 = vpop.f32.mrb[0].mxu0
      %2612 = vmatprep.mubr.bf16.mxu0 0
      %2613 = vmatmul.mubr.bf16.gmra.mrb[0].mxu0 %v2450
      %v2614 = vpop.f32.mrb[0].mxu0
      %v2615 = vadd.f32 0.0, %v2614
      %v2616 = vpop.f32.mrb[0].mxu0
      %v2617 = vpop.f32.mrb[0].mxu0
      %v2618 = vadd.f32 0.0, %v2617
      %v2619 = vpop.f32.mrb[0].mxu0
      %2620 = vmatprep.mubr.bf16.mxu0 0
      %2621 = vmatmul.mubr.bf16.gmra.mrb[0].mxu0 %v2451
      %v2622 = vpop.f32.mrb[0].mxu0
      %v2623 = vadd.f32 0.0, %v2622
      %v2624 = vpop.f32.mrb[0].mxu0
      %v2625 = vpop.f32.mrb[0].mxu0
      %v2626 = vadd.f32 0.0, %v2625
      %v2627 = vpop.f32.mrb[0].mxu0
      %2628 = vdwg.mxu0
      %v2629 = vsel %vm1087, %v2503, -inf
      %2630 = vmax.xlane.f32.xlu0 %v2629
      %v2631 = vpop.xlane.xlu0 %2630
      %v2632 = vsel %vm1087, %v2506, -inf
      %2633 = vmax.xlane.f32.xlu0 %v2632
      %v2634 = vpop.xlane.xlu0 %2633
      %v2635 = vsel %vm1087, %v2511, -inf
      %2636 = vmax.xlane.f32.xlu0 %v2635
      %v2637 = vpop.xlane.xlu0 %2636
      %v2638 = vsel %vm1087, %v2514, -inf
      %2639 = vmax.xlane.f32.xlu0 %v2638
      %v2640 = vpop.xlane.xlu0 %2639
      %v2641 = vsel %vm1087, %v2519, -inf
      %2642 = vmax.xlane.f32.xlu0 %v2641
      %v2643 = vpop.xlane.xlu0 %2642
      %v2644 = vsel %vm1087, %v2522, -inf
      %2645 = vmax.xlane.f32.xlu0 %v2644
      %v2646 = vpop.xlane.xlu0 %2645
      %v2647 = vsel %vm1087, %v2527, -inf
      %2648 = vmax.xlane.f32.xlu0 %v2647
      %v2649 = vpop.xlane.xlu0 %2648
      %v2650 = vsel %vm1087, %v2530, -inf
      %2651 = vmax.xlane.f32.xlu0 %v2650
      %v2652 = vpop.xlane.xlu0 %2651
      %v2653 = vsel %vm1087, %v2535, -inf
      %2654 = vmax.xlane.f32.xlu0 %v2653
      %v2655 = vpop.xlane.xlu0 %2654
      %v2656 = vsel %vm1087, %v2538, -inf
      %2657 = vmax.xlane.f32.xlu0 %v2656
      %v2658 = vpop.xlane.xlu0 %2657
      %v2659 = vsel %vm1087, %v2543, -inf
      %2660 = vmax.xlane.f32.xlu0 %v2659
      %v2661 = vpop.xlane.xlu0 %2660
      %v2662 = vsel %vm1087, %v2546, -inf
      %2663 = vmax.xlane.f32.xlu0 %v2662
      %v2664 = vpop.xlane.xlu0 %2663
      %v2665 = vsel %vm1087, %v2551, -inf
      %2666 = vmax.xlane.f32.xlu0 %v2665
      %v2667 = vpop.xlane.xlu0 %2666
      %v2668 = vsel %vm1087, %v2554, -inf
      %2669 = vmax.xlane.f32.xlu0 %v2668
      %v2670 = vpop.xlane.xlu0 %2669
      %v2671 = vsel %vm1087, %v2559, -inf
      %2672 = vmax.xlane.f32.xlu0 %v2671
      %v2673 = vpop.xlane.xlu0 %2672
      %v2674 = vsel %vm1087, %v2562, -inf
      %2675 = vmax.xlane.f32.xlu0 %v2674
      %v2676 = vpop.xlane.xlu0 %2675
      %v2677 = vsel %vm1087, %v2567, -inf
      %2678 = vmax.xlane.f32.xlu0 %v2677
      %v2679 = vpop.xlane.xlu0 %2678
      %v2680 = vsel %vm1087, %v2570, -inf
      %2681 = vmax.xlane.f32.xlu0 %v2680
      %v2682 = vpop.xlane.xlu0 %2681
      %v2683 = vsel %vm1087, %v2575, -inf
      %2684 = vmax.xlane.f32.xlu0 %v2683
      %v2685 = vpop.xlane.xlu0 %2684
      %v2686 = vsel %vm1087, %v2578, -inf
      %2687 = vmax.xlane.f32.xlu0 %v2686
      %v2688 = vpop.xlane.xlu0 %2687
      %v2689 = vsel %vm1087, %v2583, -inf
      %2690 = vmax.xlane.f32.xlu0 %v2689
      %v2691 = vpop.xlane.xlu0 %2690
      %v2692 = vsel %vm1087, %v2586, -inf
      %2693 = vmax.xlane.f32.xlu0 %v2692
      %v2694 = vpop.xlane.xlu0 %2693
      %v2695 = vsel %vm1087, %v2591, -inf
      %2696 = vmax.xlane.f32.xlu0 %v2695
      %v2697 = vpop.xlane.xlu0 %2696
      %v2698 = vsel %vm1087, %v2594, -inf
      %2699 = vmax.xlane.f32.xlu0 %v2698
      %v2700 = vpop.xlane.xlu0 %2699
      %v2701 = vsel %vm1087, %v2599, -inf
      %2702 = vmax.xlane.f32.xlu0 %v2701
      %v2703 = vpop.xlane.xlu0 %2702
      %v2704 = vsel %vm1087, %v2602, -inf
      %2705 = vmax.xlane.f32.xlu0 %v2704
      %v2706 = vpop.xlane.xlu0 %2705
      %v2707 = vsel %vm1087, %v2607, -inf
      %2708 = vmax.xlane.f32.xlu0 %v2707
      %v2709 = vpop.xlane.xlu0 %2708
      %v2710 = vsel %vm1087, %v2610, -inf
      %2711 = vmax.xlane.f32.xlu0 %v2710
      %v2712 = vpop.xlane.xlu0 %2711
      %v2713 = vsel %vm1087, %v2615, -inf
      %2714 = vmax.xlane.f32.xlu0 %v2713
      %v2715 = vpop.xlane.xlu0 %2714
      %v2716 = vsel %vm1087, %v2618, -inf
      %2717 = vmax.xlane.f32.xlu0 %v2716
      %v2718 = vpop.xlane.xlu0 %2717
      %v2719 = vsel %vm1087, %v2623, -inf
      %2720 = vmax.xlane.f32.xlu0 %v2719
      %v2721 = vpop.xlane.xlu0 %2720
      %v2722 = vsel %vm1087, %v2626, -inf
      %2723 = vmax.xlane.f32.xlu0 %v2722
      %v2724 = vpop.xlane.xlu0 %2723
      %v2725 = vld [vmem:[%s397 + $0x200] sm:$0xff]
      %v2726 = vld [vmem:[%s397 + $0x208] sm:$0xff]
      %v2727 = vld [vmem:[%s397 + $0x210] sm:$0xff]
      %v2728 = vld [vmem:[%s397 + $0x218] sm:$0xff]
      %v2729 = vld [vmem:[%s397 + $0x220] sm:$0xff]
      %v2730 = vld [vmem:[%s397 + $0x228] sm:$0xff]
      %v2731 = vld [vmem:[%s397 + $0x230] sm:$0xff]
      %v2732 = vld [vmem:[%s397 + $0x238] sm:$0xff]
      %v2733 = vld [vmem:[%s397 + $0x240] sm:$0xff]
      %v2734 = vld [vmem:[%s397 + $0x248] sm:$0xff]
      %v2735 = vld [vmem:[%s397 + $0x250] sm:$0xff]
      %v2736 = vld [vmem:[%s397 + $0x258] sm:$0xff]
      %v2737 = vld [vmem:[%s397 + $0x260] sm:$0xff]
      %v2738 = vld [vmem:[%s397 + $0x268] sm:$0xff]
      %v2739 = vld [vmem:[%s397 + $0x270] sm:$0xff]
      %v2740 = vld [vmem:[%s397 + $0x278] sm:$0xff]
      %v2741 = vld [vmem:[%s397 + $0x280] sm:$0xff]
      %v2742 = vld [vmem:[%s397 + $0x288] sm:$0xff]
      %v2743 = vld [vmem:[%s397 + $0x290] sm:$0xff]
      %v2744 = vld [vmem:[%s397 + $0x298] sm:$0xff]
      %v2745 = vld [vmem:[%s397 + $0x2a0] sm:$0xff]
      %v2746 = vld [vmem:[%s397 + $0x2a8] sm:$0xff]
      %v2747 = vld [vmem:[%s397 + $0x2b0] sm:$0xff]
      %v2748 = vld [vmem:[%s397 + $0x2b8] sm:$0xff]
      %v2749 = vld [vmem:[%s397 + $0x2c0] sm:$0xff]
      %v2750 = vld [vmem:[%s397 + $0x2c8] sm:$0xff]
      %v2751 = vld [vmem:[%s397 + $0x2d0] sm:$0xff]
      %v2752 = vld [vmem:[%s397 + $0x2d8] sm:$0xff]
      %v2753 = vld [vmem:[%s397 + $0x2e0] sm:$0xff]
      %v2754 = vld [vmem:[%s397 + $0x2e8] sm:$0xff]
      %v2755 = vld [vmem:[%s397 + $0x2f0] sm:$0xff]
      %v2756 = vld [vmem:[%s397 + $0x2f8] sm:$0xff]
      %v2757 = vmax.f32 %v2725, %v2631
      %v2758 = vmax.f32 %v2726, %v2634
      %v2759 = vmax.f32 %v2727, %v2637
      %v2760 = vmax.f32 %v2728, %v2640
      %v2761 = vmax.f32 %v2729, %v2643
      %v2762 = vmax.f32 %v2730, %v2646
      %v2763 = vmax.f32 %v2731, %v2649
      %v2764 = vmax.f32 %v2732, %v2652
      %v2765 = vmax.f32 %v2733, %v2655
      %v2766 = vmax.f32 %v2734, %v2658
      %v2767 = vmax.f32 %v2735, %v2661
      %v2768 = vmax.f32 %v2736, %v2664
      %v2769 = vmax.f32 %v2737, %v2667
      %v2770 = vmax.f32 %v2738, %v2670
      %v2771 = vmax.f32 %v2739, %v2673
      %v2772 = vmax.f32 %v2740, %v2676
      %v2773 = vmax.f32 %v2741, %v2679
      %v2774 = vmax.f32 %v2742, %v2682
      %v2775 = vmax.f32 %v2743, %v2685
      %v2776 = vmax.f32 %v2744, %v2688
      %v2777 = vmax.f32 %v2745, %v2691
      %v2778 = vmax.f32 %v2746, %v2694
      %v2779 = vmax.f32 %v2747, %v2697
      %v2780 = vmax.f32 %v2748, %v2700
      %v2781 = vmax.f32 %v2749, %v2703
      %v2782 = vmax.f32 %v2750, %v2706
      %v2783 = vmax.f32 %v2751, %v2709
      %v2784 = vmax.f32 %v2752, %v2712
      %v2785 = vmax.f32 %v2753, %v2715
      %v2786 = vmax.f32 %v2754, %v2718
      %v2787 = vmax.f32 %v2755, %v2721
      %v2788 = vmax.f32 %v2756, %v2724
      %2789 = vst.msk [vmem:[%s397 + $0x200] sm:$0xff] %vm1192, %v2757
      %2790 = vst.msk [vmem:[%s397 + $0x208] sm:$0xff] %vm1192, %v2758
      %2791 = vst.msk [vmem:[%s397 + $0x210] sm:$0xff] %vm1192, %v2759
      %2792 = vst.msk [vmem:[%s397 + $0x218] sm:$0xff] %vm1192, %v2760
      %2793 = vst.msk [vmem:[%s397 + $0x220] sm:$0xff] %vm1192, %v2761
      %2794 = vst.msk [vmem:[%s397 + $0x228] sm:$0xff] %vm1192, %v2762
      %2795 = vst.msk [vmem:[%s397 + $0x230] sm:$0xff] %vm1192, %v2763
      %2796 = vst.msk [vmem:[%s397 + $0x238] sm:$0xff] %vm1192, %v2764
      %2797 = vst.msk [vmem:[%s397 + $0x240] sm:$0xff] %vm1192, %v2765
      %2798 = vst.msk [vmem:[%s397 + $0x248] sm:$0xff] %vm1192, %v2766
      %2799 = vst.msk [vmem:[%s397 + $0x250] sm:$0xff] %vm1192, %v2767
      %2800 = vst.msk [vmem:[%s397 + $0x258] sm:$0xff] %vm1192, %v2768
      %2801 = vst.msk [vmem:[%s397 + $0x260] sm:$0xff] %vm1192, %v2769
      %2802 = vst.msk [vmem:[%s397 + $0x268] sm:$0xff] %vm1192, %v2770
      %2803 = vst.msk [vmem:[%s397 + $0x270] sm:$0xff] %vm1192, %v2771
      %2804 = vst.msk [vmem:[%s397 + $0x278] sm:$0xff] %vm1192, %v2772
      %2805 = vst.msk [vmem:[%s397 + $0x280] sm:$0xff] %vm1192, %v2773
      %2806 = vst.msk [vmem:[%s397 + $0x288] sm:$0xff] %vm1192, %v2774
      %2807 = vst.msk [vmem:[%s397 + $0x290] sm:$0xff] %vm1192, %v2775
      %2808 = vst.msk [vmem:[%s397 + $0x298] sm:$0xff] %vm1192, %v2776
      %2809 = vst.msk [vmem:[%s397 + $0x2a0] sm:$0xff] %vm1192, %v2777
      %2810 = vst.msk [vmem:[%s397 + $0x2a8] sm:$0xff] %vm1192, %v2778
      %2811 = vst.msk [vmem:[%s397 + $0x2b0] sm:$0xff] %vm1192, %v2779
      %2812 = vst.msk [vmem:[%s397 + $0x2b8] sm:$0xff] %vm1192, %v2780
      %2813 = vst.msk [vmem:[%s397 + $0x2c0] sm:$0xff] %vm1192, %v2781
      %2814 = vst.msk [vmem:[%s397 + $0x2c8] sm:$0xff] %vm1192, %v2782
      %2815 = vst.msk [vmem:[%s397 + $0x2d0] sm:$0xff] %vm1192, %v2783
      %2816 = vst.msk [vmem:[%s397 + $0x2d8] sm:$0xff] %vm1192, %v2784
      %2817 = vst.msk [vmem:[%s397 + $0x2e0] sm:$0xff] %vm1192, %v2785
      %2818 = vst.msk [vmem:[%s397 + $0x2e8] sm:$0xff] %vm1192, %v2786
      %2819 = vst.msk [vmem:[%s397 + $0x2f0] sm:$0xff] %vm1192, %v2787
      %2820 = vst.msk [vmem:[%s397 + $0x2f8] sm:$0xff] %vm1192, %v2788
      %v2821 = vld [vmem:[%s5 + $0x180] sm:$0xf]
      %v2822 = vld [vmem:[%s5 + $0x184] sm:$0xf]
      %v2823 = vld [vmem:[%s5 + $0x188] sm:$0xf]
      %v2824 = vld [vmem:[%s5 + $0x18c] sm:$0xf]
      %v2825 = vld [vmem:[%s5 + $0x190] sm:$0xf]
      %v2826 = vld [vmem:[%s5 + $0x194] sm:$0xf]
      %v2827 = vld [vmem:[%s5 + $0x198] sm:$0xf]
      %v2828 = vld [vmem:[%s5 + $0x19c] sm:$0xf]
      %v2829 = vld [vmem:[%s5 + $0x1a0] sm:$0xf]
      %v2830 = vld [vmem:[%s5 + $0x1a4] sm:$0xf]
      %v2831 = vld [vmem:[%s5 + $0x1a8] sm:$0xf]
      %v2832 = vld [vmem:[%s5 + $0x1ac] sm:$0xf]
      %v2833 = vld [vmem:[%s5 + $0x1b0] sm:$0xf]
      %v2834 = vld [vmem:[%s5 + $0x1b4] sm:$0xf]
      %v2835 = vld [vmem:[%s5 + $0x1b8] sm:$0xf]
      %v2836 = vld [vmem:[%s5 + $0x1bc] sm:$0xf]
      %v2837 = vld [vmem:[%s5 + $0x1c0] sm:$0xf]
      %v2838 = vld [vmem:[%s5 + $0x1c4] sm:$0xf]
      %v2839 = vld [vmem:[%s5 + $0x1c8] sm:$0xf]
      %v2840 = vld [vmem:[%s5 + $0x1cc] sm:$0xf]
      %v2841 = vld [vmem:[%s5 + $0x1d0] sm:$0xf]
      %v2842 = vld [vmem:[%s5 + $0x1d4] sm:$0xf]
      %v2843 = vld [vmem:[%s5 + $0x1d8] sm:$0xf]
      %v2844 = vld [vmem:[%s5 + $0x1dc] sm:$0xf]
      %v2845 = vld [vmem:[%s5 + $0x1e0] sm:$0xf]
      %v2846 = vld [vmem:[%s5 + $0x1e4] sm:$0xf]
      %v2847 = vld [vmem:[%s5 + $0x1e8] sm:$0xf]
      %v2848 = vld [vmem:[%s5 + $0x1ec] sm:$0xf]
      %v2849 = vld [vmem:[%s5 + $0x1f0] sm:$0xf]
      %v2850 = vld [vmem:[%s5 + $0x1f4] sm:$0xf]
      %v2851 = vld [vmem:[%s5 + $0x1f8] sm:$0xf]
      %v2852 = vld [vmem:[%s5 + $0x1fc] sm:$0xf]
      %v2885 = vunpack.c.l.b16 %v2821
      %v2886 = vunpack.c.l.b16 %v2822
      %v2887 = vunpack.c.l.b16 %v2823
      %v2888 = vunpack.c.l.b16 %v2824
      %v2889 = vunpack.c.l.b16 %v2825
      %v2890 = vunpack.c.l.b16 %v2826
      %v2891 = vunpack.c.l.b16 %v2827
      %v2892 = vunpack.c.l.b16 %v2828
      %v2893 = vunpack.c.l.b16 %v2829
      %v2894 = vunpack.c.l.b16 %v2830
      %v2895 = vunpack.c.l.b16 %v2831
      %v2896 = vunpack.c.l.b16 %v2832
      %v2897 = vunpack.c.l.b16 %v2833
      %v2898 = vunpack.c.l.b16 %v2834
      %v2899 = vunpack.c.l.b16 %v2835
      %v2900 = vunpack.c.l.b16 %v2836
      %v2901 = vunpack.c.l.b16 %v2837
      %v2902 = vunpack.c.l.b16 %v2838
      %v2903 = vunpack.c.l.b16 %v2839
      %v2904 = vunpack.c.l.b16 %v2840
      %v2905 = vunpack.c.l.b16 %v2841
      %v2906 = vunpack.c.l.b16 %v2842
      %v2907 = vunpack.c.l.b16 %v2843
      %v2908 = vunpack.c.l.b16 %v2844
      %v2909 = vunpack.c.l.b16 %v2845
      %v2910 = vunpack.c.l.b16 %v2846
      %v2911 = vunpack.c.l.b16 %v2847
      %v2912 = vunpack.c.l.b16 %v2848
      %v2913 = vunpack.c.l.b16 %v2849
      %v2914 = vunpack.c.l.b16 %v2850
      %v2915 = vunpack.c.l.b16 %v2851
      %v2916 = vunpack.c.l.b16 %v2852
      %v2917 = vpack.c.b16 %v2886, %v2885
      %v2918 = vpack.c.b16 %v2888, %v2887
      %v2919 = vpack.c.b16 %v2890, %v2889
      %v2920 = vpack.c.b16 %v2892, %v2891
      %v2921 = vpack.c.b16 %v2894, %v2893
      %v2922 = vpack.c.b16 %v2896, %v2895
      %v2923 = vpack.c.b16 %v2898, %v2897
      %v2924 = vpack.c.b16 %v2900, %v2899
      %v2925 = vpack.c.b16 %v2902, %v2901
      %v2926 = vpack.c.b16 %v2904, %v2903
      %v2927 = vpack.c.b16 %v2906, %v2905
      %v2928 = vpack.c.b16 %v2908, %v2907
      %v2929 = vpack.c.b16 %v2910, %v2909
      %v2930 = vpack.c.b16 %v2912, %v2911
      %v2931 = vpack.c.b16 %v2914, %v2913
      %v2932 = vpack.c.b16 %v2916, %v2915
      %2949 = vmatprep.subr.bf16.mxu0 0
      %2950 = vmatpush1.bf16.msra.mxu0 %v1104
      %2951 = vmatprep.subr.bf16.mxu0 0
      %2952 = vmatpush1.bf16.msra.mxu0 %v1105
      %2953 = vmatprep.subr.bf16.mxu0 0
      %2954 = vmatpush1.bf16.msra.mxu0 %v1106
      %2955 = vmatprep.subr.bf16.mxu0 0
      %2956 = vmatpush1.bf16.msra.mxu0 %v1107
      %2957 = vmatprep.subr.bf16.mxu0 0
      %2958 = vmatpush1.bf16.msra.mxu0 %v1108
      %2959 = vmatprep.subr.bf16.mxu0 0
      %2960 = vmatpush1.bf16.msra.mxu0 %v1109
      %2961 = vmatprep.subr.bf16.mxu0 0
      %2962 = vmatpush1.bf16.msra.mxu0 %v1110
      %2963 = vmatprep.subr.bf16.mxu0 0
      %2964 = vmatpush1.bf16.msra.mxu0 %v1111
      %2965 = vmatprep.subr.bf16.mxu0 0
      %2966 = vmatpush1.bf16.msra.mxu0 0
      %2967 = vmatprep.subr.bf16.mxu0 0
      %2968 = vmatpush1.bf16.msra.mxu0 0
      %2969 = vmatprep.subr.bf16.mxu0 0
      %2970 = vmatpush1.bf16.msra.mxu0 0
      %2971 = vmatprep.subr.bf16.mxu0 0
      %2972 = vmatpush1.bf16.msra.mxu0 0
      %2973 = vmatprep.subr.bf16.mxu0 0
      %2974 = vmatpush1.bf16.msra.mxu0 0
      %2975 = vmatprep.subr.bf16.mxu0 0
      %2976 = vmatpush1.bf16.msra.mxu0 0
      %2977 = vmatprep.subr.bf16.mxu0 0
      %2978 = vmatpush1.bf16.msra.mxu0 0
      %2979 = vmatprep.subr.bf16.mxu0 0
      %2980 = vmatpush1.bf16.msra.mxu0 0
      %2981 = vmatprep.mubr.bf16.mxu0 0
      %2982 = vmatmul.mubr.bf16.gmra.mrb[0].mxu0 %v2917
      %v2983 = vpop.f32.mrb[0].mxu0
      %v2984 = vadd.f32 0.0, %v2983
      %v2985 = vpop.f32.mrb[0].mxu0
      %v2986 = vpop.f32.mrb[0].mxu0
      %v2987 = vadd.f32 0.0, %v2986
      %v2988 = vpop.f32.mrb[0].mxu0
      %2989 = vmatprep.mubr.bf16.mxu0 0
      %2990 = vmatmul.mubr.bf16.gmra.mrb[0].mxu0 %v2918
      %v2991 = vpop.f32.mrb[0].mxu0
      %v2992 = vadd.f32 0.0, %v2991
      %v2993 = vpop.f32.mrb[0].mxu0
      %v2994 = vpop.f32.mrb[0].mxu0
      %v2995 = vadd.f32 0.0, %v2994
      %v2996 = vpop.f32.mrb[0].mxu0
      %2997 = vmatprep.mubr.bf16.mxu0 0
      %2998 = vmatmul.mubr.bf16.gmra.mrb[0].mxu0 %v2919
      %v2999 = vpop.f32.mrb[0].mxu0
      %v3000 = vadd.f32 0.0, %v2999
      %v3001 = vpop.f32.mrb[0].mxu0
      %v3002 = vpop.f32.mrb[0].mxu0
      %v3003 = vadd.f32 0.0, %v3002
      %v3004 = vpop.f32.mrb[0].mxu0
      %3005 = vmatprep.mubr.bf16.mxu0 0
      %3006 = vmatmul.mubr.bf16.gmra.mrb[0].mxu0 %v2920
      %v3007 = vpop.f32.mrb[0].mxu0
      %v3008 = vadd.f32 0.0, %v3007
      %v3009 = vpop.f32.mrb[0].mxu0
      %v3010 = vpop.f32.mrb[0].mxu0
      %v3011 = vadd.f32 0.0, %v3010
      %v3012 = vpop.f32.mrb[0].mxu0
      %3013 = vmatprep.mubr.bf16.mxu0 0
      %3014 = vmatmul.mubr.bf16.gmra.mrb[0].mxu0 %v2921
      %v3015 = vpop.f32.mrb[0].mxu0
      %v3016 = vadd.f32 0.0, %v3015
      %v3017 = vpop.f32.mrb[0].mxu0
      %v3018 = vpop.f32.mrb[0].mxu0
      %v3019 = vadd.f32 0.0, %v3018
      %v3020 = vpop.f32.mrb[0].mxu0
      %3021 = vmatprep.mubr.bf16.mxu0 0
      %3022 = vmatmul.mubr.bf16.gmra.mrb[0].mxu0 %v2922
      %v3023 = vpop.f32.mrb[0].mxu0
      %v3024 = vadd.f32 0.0, %v3023
      %v3025 = vpop.f32.mrb[0].mxu0
      %v3026 = vpop.f32.mrb[0].mxu0
      %v3027 = vadd.f32 0.0, %v3026
      %v3028 = vpop.f32.mrb[0].mxu0
      %3029 = vmatprep.mubr.bf16.mxu0 0
      %3030 = vmatmul.mubr.bf16.gmra.mrb[0].mxu0 %v2923
      %v3031 = vpop.f32.mrb[0].mxu0
      %v3032 = vadd.f32 0.0, %v3031
      %v3033 = vpop.f32.mrb[0].mxu0
      %v3034 = vpop.f32.mrb[0].mxu0
      %v3035 = vadd.f32 0.0, %v3034
      %v3036 = vpop.f32.mrb[0].mxu0
      %3037 = vmatprep.mubr.bf16.mxu0 0
      %3038 = vmatmul.mubr.bf16.gmra.mrb[0].mxu0 %v2924
      %v3039 = vpop.f32.mrb[0].mxu0
      %v3040 = vadd.f32 0.0, %v3039
      %v3041 = vpop.f32.mrb[0].mxu0
      %v3042 = vpop.f32.mrb[0].mxu0
      %v3043 = vadd.f32 0.0, %v3042
      %v3044 = vpop.f32.mrb[0].mxu0
      %3045 = vmatprep.mubr.bf16.mxu0 0
      %3046 = vmatmul.mubr.bf16.gmra.mrb[0].mxu0 %v2925
      %v3047 = vpop.f32.mrb[0].mxu0
      %v3048 = vadd.f32 0.0, %v3047
      %v3049 = vpop.f32.mrb[0].mxu0
      %v3050 = vpop.f32.mrb[0].mxu0
      %v3051 = vadd.f32 0.0, %v3050
      %v3052 = vpop.f32.mrb[0].mxu0
      %3053 = vmatprep.mubr.bf16.mxu0 0
      %3054 = vmatmul.mubr.bf16.gmra.mrb[0].mxu0 %v2926
      %v3055 = vpop.f32.mrb[0].mxu0
      %v3056 = vadd.f32 0.0, %v3055
      %v3057 = vpop.f32.mrb[0].mxu0
      %v3058 = vpop.f32.mrb[0].mxu0
      %v3059 = vadd.f32 0.0, %v3058
      %v3060 = vpop.f32.mrb[0].mxu0
      %3061 = vmatprep.mubr.bf16.mxu0 0
      %3062 = vmatmul.mubr.bf16.gmra.mrb[0].mxu0 %v2927
      %v3063 = vpop.f32.mrb[0].mxu0
      %v3064 = vadd.f32 0.0, %v3063
      %v3065 = vpop.f32.mrb[0].mxu0
      %v3066 = vpop.f32.mrb[0].mxu0
      %v3067 = vadd.f32 0.0, %v3066
      %v3068 = vpop.f32.mrb[0].mxu0
      %3069 = vmatprep.mubr.bf16.mxu0 0
      %3070 = vmatmul.mubr.bf16.gmra.mrb[0].mxu0 %v2928
      %v3071 = vpop.f32.mrb[0].mxu0
      %v3072 = vadd.f32 0.0, %v3071
      %v3073 = vpop.f32.mrb[0].mxu0
      %v3074 = vpop.f32.mrb[0].mxu0
      %v3075 = vadd.f32 0.0, %v3074
      %v3076 = vpop.f32.mrb[0].mxu0
      %3077 = vmatprep.mubr.bf16.mxu0 0
      %3078 = vmatmul.mubr.bf16.gmra.mrb[0].mxu0 %v2929
      %v3079 = vpop.f32.mrb[0].mxu0
      %v3080 = vadd.f32 0.0, %v3079
      %v3081 = vpop.f32.mrb[0].mxu0
      %v3082 = vpop.f32.mrb[0].mxu0
      %v3083 = vadd.f32 0.0, %v3082
      %v3084 = vpop.f32.mrb[0].mxu0
      %3085 = vmatprep.mubr.bf16.mxu0 0
      %3086 = vmatmul.mubr.bf16.gmra.mrb[0].mxu0 %v2930
      %v3087 = vpop.f32.mrb[0].mxu0
      %v3088 = vadd.f32 0.0, %v3087
      %v3089 = vpop.f32.mrb[0].mxu0
      %v3090 = vpop.f32.mrb[0].mxu0
      %v3091 = vadd.f32 0.0, %v3090
      %v3092 = vpop.f32.mrb[0].mxu0
      %3093 = vmatprep.mubr.bf16.mxu0 0
      %3094 = vmatmul.mubr.bf16.gmra.mrb[0].mxu0 %v2931
      %v3095 = vpop.f32.mrb[0].mxu0
      %v3096 = vadd.f32 0.0, %v3095
      %v3097 = vpop.f32.mrb[0].mxu0
      %v3098 = vpop.f32.mrb[0].mxu0
      %v3099 = vadd.f32 0.0, %v3098
      %v3100 = vpop.f32.mrb[0].mxu0
      %3101 = vmatprep.mubr.bf16.mxu0 0
      %3102 = vmatmul.mubr.bf16.gmra.mrb[0].mxu0 %v2932
      %v3103 = vpop.f32.mrb[0].mxu0
      %v3104 = vadd.f32 0.0, %v3103
      %v3105 = vpop.f32.mrb[0].mxu0
      %v3106 = vpop.f32.mrb[0].mxu0
      %v3107 = vadd.f32 0.0, %v3106
      %v3108 = vpop.f32.mrb[0].mxu0
      %3109 = vdwg.mxu0
      %v3110 = vsel %vm1087, %v2984, -inf
      %3111 = vmax.xlane.f32.xlu0 %v3110
      %v3112 = vpop.xlane.xlu0 %3111
      %v3113 = vsel %vm1087, %v2987, -inf
      %3114 = vmax.xlane.f32.xlu0 %v3113
      %v3115 = vpop.xlane.xlu0 %3114
      %v3116 = vsel %vm1087, %v2992, -inf
      %3117 = vmax.xlane.f32.xlu0 %v3116
      %v3118 = vpop.xlane.xlu0 %3117
      %v3119 = vsel %vm1087, %v2995, -inf
      %3120 = vmax.xlane.f32.xlu0 %v3119
      %v3121 = vpop.xlane.xlu0 %3120
      %v3122 = vsel %vm1087, %v3000, -inf
      %3123 = vmax.xlane.f32.xlu0 %v3122
      %v3124 = vpop.xlane.xlu0 %3123
      %v3125 = vsel %vm1087, %v3003, -inf
      %3126 = vmax.xlane.f32.xlu0 %v3125
      %v3127 = vpop.xlane.xlu0 %3126
      %v3128 = vsel %vm1087, %v3008, -inf
      %3129 = vmax.xlane.f32.xlu0 %v3128
      %v3130 = vpop.xlane.xlu0 %3129
      %v3131 = vsel %vm1087, %v3011, -inf
      %3132 = vmax.xlane.f32.xlu0 %v3131
      %v3133 = vpop.xlane.xlu0 %3132
      %v3134 = vsel %vm1087, %v3016, -inf
      %3135 = vmax.xlane.f32.xlu0 %v3134
      %v3136 = vpop.xlane.xlu0 %3135
      %v3137 = vsel %vm1087, %v3019, -inf
      %3138 = vmax.xlane.f32.xlu0 %v3137
      %v3139 = vpop.xlane.xlu0 %3138
      %v3140 = vsel %vm1087, %v3024, -inf
      %3141 = vmax.xlane.f32.xlu0 %v3140
      %v3142 = vpop.xlane.xlu0 %3141
      %v3143 = vsel %vm1087, %v3027, -inf
      %3144 = vmax.xlane.f32.xlu0 %v3143
      %v3145 = vpop.xlane.xlu0 %3144
      %v3146 = vsel %vm1087, %v3032, -inf
      %3147 = vmax.xlane.f32.xlu0 %v3146
      %v3148 = vpop.xlane.xlu0 %3147
      %v3149 = vsel %vm1087, %v3035, -inf
      %3150 = vmax.xlane.f32.xlu0 %v3149
      %v3151 = vpop.xlane.xlu0 %3150
      %v3152 = vsel %vm1087, %v3040, -inf
      %3153 = vmax.xlane.f32.xlu0 %v3152
      %v3154 = vpop.xlane.xlu0 %3153
      %v3155 = vsel %vm1087, %v3043, -inf
      %3156 = vmax.xlane.f32.xlu0 %v3155
      %v3157 = vpop.xlane.xlu0 %3156
      %v3158 = vsel %vm1087, %v3048, -inf
      %3159 = vmax.xlane.f32.xlu0 %v3158
      %v3160 = vpop.xlane.xlu0 %3159
      %v3161 = vsel %vm1087, %v3051, -inf
      %3162 = vmax.xlane.f32.xlu0 %v3161
      %v3163 = vpop.xlane.xlu0 %3162
      %v3164 = vsel %vm1087, %v3056, -inf
      %3165 = vmax.xlane.f32.xlu0 %v3164
      %v3166 = vpop.xlane.xlu0 %3165
      %v3167 = vsel %vm1087, %v3059, -inf
      %3168 = vmax.xlane.f32.xlu0 %v3167
      %v3169 = vpop.xlane.xlu0 %3168
      %v3170 = vsel %vm1087, %v3064, -inf
      %3171 = vmax.xlane.f32.xlu0 %v3170
      %v3172 = vpop.xlane.xlu0 %3171
      %v3173 = vsel %vm1087, %v3067, -inf
      %3174 = vmax.xlane.f32.xlu0 %v3173
      %v3175 = vpop.xlane.xlu0 %3174
      %v3176 = vsel %vm1087, %v3072, -inf
      %3177 = vmax.xlane.f32.xlu0 %v3176
      %v3178 = vpop.xlane.xlu0 %3177
      %v3179 = vsel %vm1087, %v3075, -inf
      %3180 = vmax.xlane.f32.xlu0 %v3179
      %v3181 = vpop.xlane.xlu0 %3180
      %v3182 = vsel %vm1087, %v3080, -inf
      %3183 = vmax.xlane.f32.xlu0 %v3182
      %v3184 = vpop.xlane.xlu0 %3183
      %v3185 = vsel %vm1087, %v3083, -inf
      %3186 = vmax.xlane.f32.xlu0 %v3185
      %v3187 = vpop.xlane.xlu0 %3186
      %v3188 = vsel %vm1087, %v3088, -inf
      %3189 = vmax.xlane.f32.xlu0 %v3188
      %v3190 = vpop.xlane.xlu0 %3189
      %v3191 = vsel %vm1087, %v3091, -inf
      %3192 = vmax.xlane.f32.xlu0 %v3191
      %v3193 = vpop.xlane.xlu0 %3192
      %v3194 = vsel %vm1087, %v3096, -inf
      %3195 = vmax.xlane.f32.xlu0 %v3194
      %v3196 = vpop.xlane.xlu0 %3195
      %v3197 = vsel %vm1087, %v3099, -inf
      %3198 = vmax.xlane.f32.xlu0 %v3197
      %v3199 = vpop.xlane.xlu0 %3198
      %v3200 = vsel %vm1087, %v3104, -inf
      %3201 = vmax.xlane.f32.xlu0 %v3200
      %v3202 = vpop.xlane.xlu0 %3201
      %v3203 = vsel %vm1087, %v3107, -inf
      %3204 = vmax.xlane.f32.xlu0 %v3203
      %v3205 = vpop.xlane.xlu0 %3204
      %v3206 = vld [vmem:[%s397 + $0x300] sm:$0xff]
      %v3207 = vld [vmem:[%s397 + $0x308] sm:$0xff]
      %v3208 = vld [vmem:[%s397 + $0x310] sm:$0xff]
      %v3209 = vld [vmem:[%s397 + $0x318] sm:$0xff]
      %v3210 = vld [vmem:[%s397 + $0x320] sm:$0xff]
      %v3211 = vld [vmem:[%s397 + $0x328] sm:$0xff]
      %v3212 = vld [vmem:[%s397 + $0x330] sm:$0xff]
      %v3213 = vld [vmem:[%s397 + $0x338] sm:$0xff]
      %v3214 = vld [vmem:[%s397 + $0x340] sm:$0xff]
      %v3215 = vld [vmem:[%s397 + $0x348] sm:$0xff]
      %v3216 = vld [vmem:[%s397 + $0x350] sm:$0xff]
      %v3217 = vld [vmem:[%s397 + $0x358] sm:$0xff]
      %v3218 = vld [vmem:[%s397 + $0x360] sm:$0xff]
      %v3219 = vld [vmem:[%s397 + $0x368] sm:$0xff]
      %v3220 = vld [vmem:[%s397 + $0x370] sm:$0xff]
      %v3221 = vld [vmem:[%s397 + $0x378] sm:$0xff]
      %v3222 = vld [vmem:[%s397 + $0x380] sm:$0xff]
      %v3223 = vld [vmem:[%s397 + $0x388] sm:$0xff]
      %v3224 = vld [vmem:[%s397 + $0x390] sm:$0xff]
      %v3225 = vld [vmem:[%s397 + $0x398] sm:$0xff]
      %v3226 = vld [vmem:[%s397 + $0x3a0] sm:$0xff]
      %v3227 = vld [vmem:[%s397 + $0x3a8] sm:$0xff]
      %v3228 = vld [vmem:[%s397 + $0x3b0] sm:$0xff]
      %v3229 = vld [vmem:[%s397 + $0x3b8] sm:$0xff]
      %v3230 = vld [vmem:[%s397 + $0x3c0] sm:$0xff]
      %v3231 = vld [vmem:[%s397 + $0x3c8] sm:$0xff]
      %v3232 = vld [vmem:[%s397 + $0x3d0] sm:$0xff]
      %v3233 = vld [vmem:[%s397 + $0x3d8] sm:$0xff]
      %v3234 = vld [vmem:[%s397 + $0x3e0] sm:$0xff]
      %v3235 = vld [vmem:[%s397 + $0x3e8] sm:$0xff]
      %v3236 = vld [vmem:[%s397 + $0x3f0] sm:$0xff]
      %v3237 = vld [vmem:[%s397 + $0x3f8] sm:$0xff]
      %v3238 = vmax.f32 %v3206, %v3112
      %v3239 = vmax.f32 %v3207, %v3115
      %v3240 = vmax.f32 %v3208, %v3118
      %v3241 = vmax.f32 %v3209, %v3121
      %v3242 = vmax.f32 %v3210, %v3124
      %v3243 = vmax.f32 %v3211, %v3127
      %v3244 = vmax.f32 %v3212, %v3130
      %v3245 = vmax.f32 %v3213, %v3133
      %v3246 = vmax.f32 %v3214, %v3136
      %v3247 = vmax.f32 %v3215, %v3139
      %v3248 = vmax.f32 %v3216, %v3142
      %v3249 = vmax.f32 %v3217, %v3145
      %v3250 = vmax.f32 %v3218, %v3148
      %v3251 = vmax.f32 %v3219, %v3151
      %v3252 = vmax.f32 %v3220, %v3154
      %v3253 = vmax.f32 %v3221, %v3157
      %v3254 = vmax.f32 %v3222, %v3160
      %v3255 = vmax.f32 %v3223, %v3163
      %v3256 = vmax.f32 %v3224, %v3166
      %v3257 = vmax.f32 %v3225, %v3169
      %v3258 = vmax.f32 %v3226, %v3172
      %v3259 = vmax.f32 %v3227, %v3175
      %v3260 = vmax.f32 %v3228, %v3178
      %v3261 = vmax.f32 %v3229, %v3181
      %v3262 = vmax.f32 %v3230, %v3184
      %v3263 = vmax.f32 %v3231, %v3187
      %v3264 = vmax.f32 %v3232, %v3190
      %v3265 = vmax.f32 %v3233, %v3193
      %v3266 = vmax.f32 %v3234, %v3196
      %v3267 = vmax.f32 %v3235, %v3199
      %v3268 = vmax.f32 %v3236, %v3202
      %v3269 = vmax.f32 %v3237, %v3205
      %3270 = vst.msk [vmem:[%s397 + $0x300] sm:$0xff] %vm1192, %v3238
      %3271 = vst.msk [vmem:[%s397 + $0x308] sm:$0xff] %vm1192, %v3239
      %3272 = vst.msk [vmem:[%s397 + $0x310] sm:$0xff] %vm1192, %v3240
      %3273 = vst.msk [vmem:[%s397 + $0x318] sm:$0xff] %vm1192, %v3241
      %3274 = vst.msk [vmem:[%s397 + $0x320] sm:$0xff] %vm1192, %v3242
      %3275 = vst.msk [vmem:[%s397 + $0x328] sm:$0xff] %vm1192, %v3243
      %3276 = vst.msk [vmem:[%s397 + $0x330] sm:$0xff] %vm1192, %v3244
      %3277 = vst.msk [vmem:[%s397 + $0x338] sm:$0xff] %vm1192, %v3245
      %3278 = vst.msk [vmem:[%s397 + $0x340] sm:$0xff] %vm1192, %v3246
      %3279 = vst.msk [vmem:[%s397 + $0x348] sm:$0xff] %vm1192, %v3247
      %3280 = vst.msk [vmem:[%s397 + $0x350] sm:$0xff] %vm1192, %v3248
      %3281 = vst.msk [vmem:[%s397 + $0x358] sm:$0xff] %vm1192, %v3249
      %3282 = vst.msk [vmem:[%s397 + $0x360] sm:$0xff] %vm1192, %v3250
      %3283 = vst.msk [vmem:[%s397 + $0x368] sm:$0xff] %vm1192, %v3251
      %3284 = vst.msk [vmem:[%s397 + $0x370] sm:$0xff] %vm1192, %v3252
      %3285 = vst.msk [vmem:[%s397 + $0x378] sm:$0xff] %vm1192, %v3253
      %3286 = vst.msk [vmem:[%s397 + $0x380] sm:$0xff] %vm1192, %v3254
      %3287 = vst.msk [vmem:[%s397 + $0x388] sm:$0xff] %vm1192, %v3255
      %3288 = vst.msk [vmem:[%s397 + $0x390] sm:$0xff] %vm1192, %v3256
      %3289 = vst.msk [vmem:[%s397 + $0x398] sm:$0xff] %vm1192, %v3257
      %3290 = vst.msk [vmem:[%s397 + $0x3a0] sm:$0xff] %vm1192, %v3258
      %3291 = vst.msk [vmem:[%s397 + $0x3a8] sm:$0xff] %vm1192, %v3259
      %3292 = vst.msk [vmem:[%s397 + $0x3b0] sm:$0xff] %vm1192, %v3260
      %3293 = vst.msk [vmem:[%s397 + $0x3b8] sm:$0xff] %vm1192, %v3261
      %3294 = vst.msk [vmem:[%s397 + $0x3c0] sm:$0xff] %vm1192, %v3262
      %3295 = vst.msk [vmem:[%s397 + $0x3c8] sm:$0xff] %vm1192, %v3263
      %3296 = vst.msk [vmem:[%s397 + $0x3d0] sm:$0xff] %vm1192, %v3264
      %3297 = vst.msk [vmem:[%s397 + $0x3d8] sm:$0xff] %vm1192, %v3265
      %3298 = vst.msk [vmem:[%s397 + $0x3e0] sm:$0xff] %vm1192, %v3266
      %3299 = vst.msk [vmem:[%s397 + $0x3e8] sm:$0xff] %vm1192, %v3267
      %3300 = vst.msk [vmem:[%s397 + $0x3f0] sm:$0xff] %vm1192, %v3268
      %3301 = vst.msk [vmem:[%s397 + $0x3f8] sm:$0xff] %vm1192, %v3269
      %p3302 = scmp.lt.s32.totalorder %s25, 1
      %s3303 = scalar_select %p3302, %s25, 1
      %p3304 = scmp.lt.s32.totalorder %s26, 0
      %s3305 = scalar_select %p3304, %s26, 0
      %s3306 = smul.addr %s3303, 16
      %s3307 = sadd.s32 %s3305, %s3306
      %s3308 = smul.addr %s3307, 8
      %s3309 = scalar_lea.vmem %s6, %s3308
      %p3310 = scmp.lt.s32.totalorder %s25, 1
      %s3311 = scalar_select %p3310, %s25, 1
      %s3312 = smul.addr %s3311, 16
      %s3313 = smul.addr %s3312, 8
      %s3314 = scalar_lea.vmem %s7, %s3313
      %p3315 = scmp.lt.s32.totalorder %s25, 1
      %s3316 = scalar_select %p3315, %s25, 1
      %s3317 = smul.addr %s3316, 16
      %s3318 = smul.addr %s3317, 8
      %s3319 = scalar_lea.vmem %s8, %s3318
      %p3320 = scmp.lt.s32.totalorder %s25, 1
      %s3321 = scalar_select %p3320, %s25, 1
      %s3322 = smul.addr %s3321, 128
      %s3323 = smul.addr %s3322, 8
      %s3324 = scalar_lea.vmem %s9, %s3323
      // Predicated region
      $region49: #{pointnet_feat_forward.3} parent=43 // pred_check
        %p3325 = pneg %p186
      $region50: #{pointnet_feat_forward.3} parent=43 // pred_check_branch
        %3327 = sbr.rel (%p3325) target = $region52
      $region51: #{pointnet_feat_forward.3} parent=43 // pred_region
        _
      $region52: #{pointnet_feat_forward.3} parent=43 // pred_fallthru
        _
      // Predicated region
      $region53: #{pointnet_feat_forward.3} parent=43 // pred_check
        %p3328 = pneg %p212
      $region54: #{pointnet_feat_forward.3} parent=43 // pred_check_branch
        %3330 = sbr.rel (%p3328) target = $region56
      $region55: #{pointnet_feat_forward.3} parent=43 // pred_region
        _
      $region56: #{pointnet_feat_forward.3} parent=43 // pred_fallthru
        _
      // Predicated region
      $region57: #{pointnet_feat_forward.3} parent=43 // pred_check
        %p3331 = pneg %p238
      $region58: #{pointnet_feat_forward.3} parent=43 // pred_check_branch
        %3333 = sbr.rel (%p3331) target = $region60
      $region59: #{pointnet_feat_forward.3} parent=43 // pred_region
        _
      $region60: #{pointnet_feat_forward.3} parent=43 // pred_fallthru
        _
      // Predicated region
      $region61: #{pointnet_feat_forward.3} parent=43 // pred_check
        %p3334 = pneg %p264
      $region62: #{pointnet_feat_forward.3} parent=43 // pred_check_branch
        %3336 = sbr.rel (%p3334) target = $region64
      $region63: #{pointnet_feat_forward.3} parent=43 // pred_region
        _
      $region64: #{pointnet_feat_forward.3} parent=43 // pred_fallthru
        _
    $region44: #{pointnet_feat_forward.3} parent=5 // pred_fallthru
      _
    %p3337 = scmp.le.s32.totalorder 2, %s16
    // Predicated region
    $region65: #{pointnet_feat_forward.3} parent=5 // pred_check
      %p3338 = pneg %p3337
    $region66: #{pointnet_feat_forward.3} parent=5 // pred_check_branch
      %3340 = sbr.rel (%p3338) target = $region68
    $region67: #{pointnet_feat_forward.3} parent=5 // pred_region
      %s3341 = ssub.s32 %s16, 2
      // Predicated region
      $region69: #{pointnet_feat_forward.3} parent=67 // pred_check
        %p3342 = pneg %p192
      $region70: #{pointnet_feat_forward.3} parent=67 // pred_check_branch
        %3344 = sbr.rel (%p3342) target = $region72
      $region71: #{pointnet_feat_forward.3} parent=67 // pred_region
        %p3345 = scmp.lt.s32.totalorder %s27, 1
        %s3346 = scalar_select %p3345, %s27, 1
        %p3347 = scmp.lt.s32.totalorder %s28, 0
        %s3348 = scalar_select %p3347, %s28, 0
        %s3349 = smul.addr %s3346, 16
        %s3350 = sadd.s32 %s3348, %s3349
        %s3351 = smul.addr %s3350, 8
        %s3352 = scalar_lea.vmem %s6, %s3351
      $region72: #{pointnet_feat_forward.3} parent=67 // pred_fallthru
        _
      // Predicated region
      $region73: #{pointnet_feat_forward.3} parent=67 // pred_check
        %p3353 = pneg %p218
      $region74: #{pointnet_feat_forward.3} parent=67 // pred_check_branch
        %3355 = sbr.rel (%p3353) target = $region76
      $region75: #{pointnet_feat_forward.3} parent=67 // pred_region
        %p3356 = scmp.lt.s32.totalorder %s27, 1
        %s3357 = scalar_select %p3356, %s27, 1
        %s3358 = smul.addr %s3357, 16
        %s3359 = smul.addr %s3358, 8
        %s3360 = scalar_lea.vmem %s7, %s3359
      $region76: #{pointnet_feat_forward.3} parent=67 // pred_fallthru
        _
      // Predicated region
      $region77: #{pointnet_feat_forward.3} parent=67 // pred_check
        %p3361 = pneg %p244
      $region78: #{pointnet_feat_forward.3} parent=67 // pred_check_branch
        %3363 = sbr.rel (%p3361) target = $region80
      $region79: #{pointnet_feat_forward.3} parent=67 // pred_region
        %p3364 = scmp.lt.s32.totalorder %s27, 1
        %s3365 = scalar_select %p3364, %s27, 1
        %s3366 = smul.addr %s3365, 16
        %s3367 = smul.addr %s3366, 8
        %s3368 = scalar_lea.vmem %s8, %s3367
      $region80: #{pointnet_feat_forward.3} parent=67 // pred_fallthru
        _
      // Predicated region
      $region81: #{pointnet_feat_forward.3} parent=67 // pred_check
        %p3369 = pneg %p270
      $region82: #{pointnet_feat_forward.3} parent=67 // pred_check_branch
        %3371 = sbr.rel (%p3369) target = $region84
      $region83: #{pointnet_feat_forward.3} parent=67 // pred_region
        %p3372 = scmp.lt.s32.totalorder %s27, 1
        %s3373 = scalar_select %p3372, %s27, 1
        %s3374 = smul.addr %s3373, 128
        %s3375 = smul.addr %s3374, 8
        %s3376 = scalar_lea.vmem %s9, %s3375
      $region84: #{pointnet_feat_forward.3} parent=67 // pred_fallthru
        _
    $region68: #{pointnet_feat_forward.3} parent=5 // pred_fallthru
      _
  $region6: #{pointnet_feat_forward.3} parent=0 // loop_footer
    %s20 = sadd.s32 1, %s16
  $region7: #{pointnet_feat_forward.3} parent=0 // loop_footer_branch
    %15 = sbr.rel target = $region3
  $region8: #{pointnet_feat_forward.3} parent=0 // loop_exit
    _

</llo_original>
